<compile_context>
chip_gen: v7x
topology: tpu7x:2x2x1
jax: 0.10.0
libtpu: 0.0.40
codegen_flags: <defaults>
</compile_context>

<pallas_src>
import functools

import jax
import jax.numpy as jnp
import numpy as np
from jax import lax
from jax.experimental import pallas as pl
from jax.experimental.pallas import tpu as pltpu


# ---------------------------------------------------------------------------
# Fused ResBlock kernel (one grid step == one image)
# ---------------------------------------------------------------------------

def _resblock_kernel(x_ref, w1_ref, b1_ref, w2_ref, b2_ref, o_ref, *, M, Wp):
    """x_ref : (P, Cin)        flattened zero-padded image, P=(H+3)*Wp, Wp=W+2
       w1_ref: (9, Cin, Cmid)  3x3 conv weights, tap-major (t = di*3 + dj)
       b1_ref: (1, Cmid)  f32
       w2_ref: (Cmid, Cout)    1x1 conv weights
       b2_ref: (1, Cout)  f32
       o_ref : (M, Cout)       M = H*Wp rows (padded-width layout)."""
    # --- 3x3 conv as 9 shifted GEMMs over the flattened padded image ---------
    acc = None
    for t in range(9):
        di, dj = divmod(t, 3)
        tap = x_ref[pl.ds(di * Wp + dj, M), :]
        tap = jnp.maximum(tap, 0.0).astype(w1_ref.dtype)      # leading ReLU
        p = jnp.dot(tap, w1_ref[t], preferred_element_type=jnp.float32)
        acc = p if acc is None else acc + p

    # --- inner ReLU + 1x1 conv + bias + residual, all in f32 -----------------
    h = jnp.maximum(acc + b1_ref[...], 0.0)                   # (M, Cmid) f32
    out = jnp.dot(h.astype(w2_ref.dtype), w2_ref[...],
                  preferred_element_type=jnp.float32)         # (M, Cout)
    res = x_ref[pl.ds(Wp + 1, M), :].astype(jnp.float32)      # identity branch
    o_ref[...] = (out + b2_ref[...] + res).astype(o_ref.dtype)


# ---------------------------------------------------------------------------
# Wrapper
# ---------------------------------------------------------------------------

def resblock_forward_pallas(x_nchw, params, compute_dtype=jnp.float32):
    """params = (w1, b1, w2, b2); w1: (3,3,C,Cmid) HWIO, w2: (Cmid,C).
       x_nchw: (B, C, H, W) -> (B, C, H, W)."""
    w1, b1, w2, b2 = params
    B, C, H, W = x_nchw.shape
    Cmid = w1.shape[-1]
    assert w1.shape == (3, 3, C, Cmid) and w2.shape == (Cmid, C)

    # NCHW -> NHWC; pad 1 row/col each side for the 3x3 conv, plus 2 extra
    # zero rows at the bottom so every shifted flat slice stays in bounds.
    x = jnp.transpose(x_nchw, (0, 2, 3, 1))
    Wp = W + 2
    xp = jnp.pad(x, ((0, 0), (1, 2), (1, 1), (0, 0)))
    P = (H + 3) * Wp
    x_flat = xp.reshape(B, P, C).astype(compute_dtype)

    # Lane-dense hidden dim: zero-pad Cmid up to a multiple of 128 (free math:
    # padded columns stay 0 through the ReLU and hit zero rows of w2).
    Cmid_p = -(-Cmid // 128) * 128
    w1p = jnp.zeros((3, 3, C, Cmid_p), compute_dtype)
    w1p = w1p.at[..., :Cmid].set(w1.astype(compute_dtype)).reshape(9, C, Cmid_p)
    b1p = jnp.zeros((1, Cmid_p), jnp.float32).at[:, :Cmid].set(b1[None, :])
    w2p = jnp.zeros((Cmid_p, C), compute_dtype).at[:Cmid, :].set(
        w2.astype(compute_dtype))
    b2p = b2.reshape(1, C).astype(jnp.float32)

    M = H * Wp  # output rows per image (padded width => 2 junk cols per row)

    # VMEM budget: double-buffered in/out blocks + resident weights + live f32
    # intermediates.  Sized explicitly so the same code is safe on v7x (64 MiB
    # physical) and uses headroom on v5e/v6e (128 MiB).
    isz = jnp.dtype(compute_dtype).itemsize
    est = (2 * P * C * isz + 2 * M * C * 4
           + 9 * C * Cmid_p * isz + Cmid_p * C * isz
           + 3 * M * Cmid_p * 4 + 3 * M * C * 4)
    vmem_limit = int(min(96 * 2**20, max(32 * 2**20, 2 * est)))
    # TODO(synk): for images whose per-image block exceeds VMEM (very large
    # H*W*C), add a spatial row-tile grid axis with a manually DMA'd halo.

    kernel = functools.partial(_resblock_kernel, M=M, Wp=Wp)
    out_flat = pl.pallas_call(
        kernel,
        out_shape=jax.ShapeDtypeStruct((B, M, C), x_nchw.dtype),
        grid=(B,),
        in_specs=[
            pl.BlockSpec((None, P, C), lambda b: (b, 0, 0)),       # x (per image)
            pl.BlockSpec((9, C, Cmid_p), lambda b: (0, 0, 0)),     # w1 (resident)
            pl.BlockSpec((1, Cmid_p), lambda b: (0, 0)),           # b1
            pl.BlockSpec((Cmid_p, C), lambda b: (0, 0)),           # w2
            pl.BlockSpec((1, C), lambda b: (0, 0)),                # b2
        ],
        out_specs=pl.BlockSpec((None, M, C), lambda b: (b, 0, 0)),
        compiler_params=pltpu.CompilerParams(
            dimension_semantics=("parallel",),   # megacore on v7x, no-op v5e/v6e
            vmem_limit_bytes=vmem_limit),
    )(x_flat, w1p, b1p, w2p, b2p)

    # Drop the 2 junk columns per row; back to NCHW.
    out = out_flat.reshape(B, H, Wp, C)[:, :, :W, :]
    return jnp.transpose(out, (0, 3, 1, 2))


# ---------------------------------------------------------------------------
# Params + pure-JAX reference (correctness check only)
# ---------------------------------------------------------------------------

def init_resblock_params(key, in_channel, channel):
    k1, k2, k3, k4 = jax.random.split(key, 4)
    w1 = jax.random.normal(k1, (3, 3, in_channel, channel), jnp.float32)
    w1 = w1 * (2.0 / (9 * in_channel)) ** 0.5
    b1 = jax.random.normal(k2, (channel,), jnp.float32) * 0.01
    w2 = jax.random.normal(k3, (channel, in_channel), jnp.float32)
    w2 = w2 * (2.0 / channel) ** 0.5
    b2 = jax.random.normal(k4, (in_channel,), jnp.float32) * 0.01
    return w1, b1, w2, b2


def resblock_forward_ref(x_nchw, params):
    w1, b1, w2, b2 = params
    x = jnp.transpose(x_nchw, (0, 2, 3, 1))
    h = jax.nn.relu(x)
    h = lax.conv_general_dilated(
        h, w1, (1, 1), [(1, 1), (1, 1)],
        dimension_numbers=("NHWC", "HWIO", "NHWC")) + b1
    h = jax.nn.relu(h)
    h = lax.conv_general_dilated(
        h, w2[None, None], (1, 1), [(0, 0), (0, 0)],
        dimension_numbers=("NHWC", "HWIO", "NHWC")) + b2
    out = x + h
    return jnp.transpose(out, (0, 3, 1, 2))


# ---------------------------------------------------------------------------
# Main
# ---------------------------------------------------------------------------

if __name__ == "__main__":
    B, in_channel, H, W = 2, 4, 16, 16
    channel = 32  # hidden channels of the ResBlock

    key = jax.random.PRNGKey(0)
    kx, kp = jax.random.split(key)
    x = jax.random.normal(kx, (B, in_channel, H, W), jnp.float32)  # NCHW
    params = init_resblock_params(kp, in_channel, channel)

    out = jax.block_until_ready(resblock_forward_pallas(x, params))
    assert out.shape == (B, in_channel, H, W), out.shape

    ref = jax.block_until_ready(resblock_forward_ref(x, params))
    np.testing.assert_allclose(np.asarray(out), np.asarray(ref),
                               rtol=1e-4, atol=1e-4)

    print("KERNEL_OK")
</pallas_src>

<mosaic_0001>
module attributes {stable_mosaic.version = 11 : i64} {
  func.func @_resblock_kernel(%arg0: i32, %arg1: memref<1x342x4xf32, #tpu.memory_space<vmem>>, %arg2: memref<9x4x128xf32, #tpu.memory_space<vmem>>, %arg3: memref<1x128xf32, #tpu.memory_space<vmem>>, %arg4: memref<128x4xf32, #tpu.memory_space<vmem>>, %arg5: memref<1x4xf32, #tpu.memory_space<vmem>>, %arg6: memref<1x288x4xf32, #tpu.memory_space<vmem>>) attributes {dimension_semantics = [#tpu.dimension_semantics<parallel>], iteration_bounds = array<i64: 2>, scalar_prefetch = 0 : i64, scratch_operands = 0 : i64, tpu.core_type = #tpu.core_type<tc>, window_params = [{transform_indices = @transform_0, window_bounds = array<i64: 1, 342, 4>}, {pipeline_mode = #tpu.pipeline_mode<synchronous>, transform_indices = @transform_1, window_bounds = array<i64: 9, 4, 128>}, {pipeline_mode = #tpu.pipeline_mode<synchronous>, transform_indices = @transform_2, window_bounds = array<i64: 1, 128>}, {pipeline_mode = #tpu.pipeline_mode<synchronous>, transform_indices = @transform_3, window_bounds = array<i64: 128, 4>}, {pipeline_mode = #tpu.pipeline_mode<synchronous>, transform_indices = @transform_4, window_bounds = array<i64: 1, 4>}, {transform_indices = @transform_5, window_bounds = array<i64: 1, 288, 4>}]} {
    %c0 = arith.constant 0 : index
    %c0_0 = arith.constant 0 : index
    %c0_1 = arith.constant 0 : index
    %0 = vector.load %arg1[%c0, %c0_0, %c0_1] : memref<1x342x4xf32, #tpu.memory_space<vmem>>, vector<1x288x4xf32>
    %1 = vector.shape_cast %0 : vector<1x288x4xf32> to vector<288x4xf32>
    %cst = arith.constant 0.000000e+00 : f32
    %2 = vector.broadcast %cst : f32 to vector<288x4xf32>
    %3 = arith.maximumf %1, %2 : vector<288x4xf32>
    %c0_2 = arith.constant 0 : index
    %c0_3 = arith.constant 0 : index
    %c0_4 = arith.constant 0 : index
    %4 = vector.load %arg2[%c0_2, %c0_3, %c0_4] : memref<9x4x128xf32, #tpu.memory_space<vmem>>, vector<1x4x128xf32>
    %5 = vector.shape_cast %4 : vector<1x4x128xf32> to vector<4x128xf32>
    %cst_5 = arith.constant dense<0.000000e+00> : vector<288x128xf32>
    %6 = tpu.matmul %3, %5, %cst_5 {dimension_numbers = #tpu.dot_dimension_numbers<[1], [0], [0], [1], [0, 0, 1, 1], [], []>} : vector<288x4xf32>, vector<4x128xf32>, vector<288x128xf32> -> vector<288x128xf32>
    %c0_6 = arith.constant 0 : index
    %c1 = arith.constant 1 : index
    %c0_7 = arith.constant 0 : index
    %7 = vector.load %arg1[%c0_6, %c1, %c0_7] : memref<1x342x4xf32, #tpu.memory_space<vmem>>, vector<1x288x4xf32>
    %8 = vector.shape_cast %7 : vector<1x288x4xf32> to vector<288x4xf32>
    %cst_8 = arith.constant 0.000000e+00 : f32
    %9 = vector.broadcast %cst_8 : f32 to vector<288x4xf32>
    %10 = arith.maximumf %8, %9 : vector<288x4xf32>
    %c1_9 = arith.constant 1 : index
    %c0_10 = arith.constant 0 : index
    %c0_11 = arith.constant 0 : index
    %11 = vector.load %arg2[%c1_9, %c0_10, %c0_11] : memref<9x4x128xf32, #tpu.memory_space<vmem>>, vector<1x4x128xf32>
    %12 = vector.shape_cast %11 : vector<1x4x128xf32> to vector<4x128xf32>
    %cst_12 = arith.constant dense<0.000000e+00> : vector<288x128xf32>
    %13 = tpu.matmul %10, %12, %cst_12 {dimension_numbers = #tpu.dot_dimension_numbers<[1], [0], [0], [1], [0, 0, 1, 1], [], []>} : vector<288x4xf32>, vector<4x128xf32>, vector<288x128xf32> -> vector<288x128xf32>
    %14 = arith.addf %6, %13 : vector<288x128xf32>
    %c0_13 = arith.constant 0 : index
    %c2 = arith.constant 2 : index
    %c0_14 = arith.constant 0 : index
    %15 = vector.load %arg1[%c0_13, %c2, %c0_14] : memref<1x342x4xf32, #tpu.memory_space<vmem>>, vector<1x288x4xf32>
    %16 = vector.shape_cast %15 : vector<1x288x4xf32> to vector<288x4xf32>
    %cst_15 = arith.constant 0.000000e+00 : f32
    %17 = vector.broadcast %cst_15 : f32 to vector<288x4xf32>
    %18 = arith.maximumf %16, %17 : vector<288x4xf32>
    %c2_16 = arith.constant 2 : index
    %c0_17 = arith.constant 0 : index
    %c0_18 = arith.constant 0 : index
    %19 = vector.load %arg2[%c2_16, %c0_17, %c0_18] : memref<9x4x128xf32, #tpu.memory_space<vmem>>, vector<1x4x128xf32>
    %20 = vector.shape_cast %19 : vector<1x4x128xf32> to vector<4x128xf32>
    %cst_19 = arith.constant dense<0.000000e+00> : vector<288x128xf32>
    %21 = tpu.matmul %18, %20, %cst_19 {dimension_numbers = #tpu.dot_dimension_numbers<[1], [0], [0], [1], [0, 0, 1, 1], [], []>} : vector<288x4xf32>, vector<4x128xf32>, vector<288x128xf32> -> vector<288x128xf32>
    %22 = arith.addf %14, %21 : vector<288x128xf32>
    %c0_20 = arith.constant 0 : index
    %c18 = arith.constant 18 : index
    %c0_21 = arith.constant 0 : index
    %23 = vector.load %arg1[%c0_20, %c18, %c0_21] : memref<1x342x4xf32, #tpu.memory_space<vmem>>, vector<1x288x4xf32>
    %24 = vector.shape_cast %23 : vector<1x288x4xf32> to vector<288x4xf32>
    %cst_22 = arith.constant 0.000000e+00 : f32
    %25 = vector.broadcast %cst_22 : f32 to vector<288x4xf32>
    %26 = arith.maximumf %24, %25 : vector<288x4xf32>
    %c3 = arith.constant 3 : index
    %c0_23 = arith.constant 0 : index
    %c0_24 = arith.constant 0 : index
    %27 = vector.load %arg2[%c3, %c0_23, %c0_24] : memref<9x4x128xf32, #tpu.memory_space<vmem>>, vector<1x4x128xf32>
    %28 = vector.shape_cast %27 : vector<1x4x128xf32> to vector<4x128xf32>
    %cst_25 = arith.constant dense<0.000000e+00> : vector<288x128xf32>
    %29 = tpu.matmul %26, %28, %cst_25 {dimension_numbers = #tpu.dot_dimension_numbers<[1], [0], [0], [1], [0, 0, 1, 1], [], []>} : vector<288x4xf32>, vector<4x128xf32>, vector<288x128xf32> -> vector<288x128xf32>
    %30 = arith.addf %22, %29 : vector<288x128xf32>
    %c0_26 = arith.constant 0 : index
    %c19 = arith.constant 19 : index
    %c0_27 = arith.constant 0 : index
    %31 = vector.load %arg1[%c0_26, %c19, %c0_27] : memref<1x342x4xf32, #tpu.memory_space<vmem>>, vector<1x288x4xf32>
    %32 = vector.shape_cast %31 : vector<1x288x4xf32> to vector<288x4xf32>
    %cst_28 = arith.constant 0.000000e+00 : f32
    %33 = vector.broadcast %cst_28 : f32 to vector<288x4xf32>
    %34 = arith.maximumf %32, %33 : vector<288x4xf32>
    %c4 = arith.constant 4 : index
    %c0_29 = arith.constant 0 : index
    %c0_30 = arith.constant 0 : index
    %35 = vector.load %arg2[%c4, %c0_29, %c0_30] : memref<9x4x128xf32, #tpu.memory_space<vmem>>, vector<1x4x128xf32>
    %36 = vector.shape_cast %35 : vector<1x4x128xf32> to vector<4x128xf32>
    %cst_31 = arith.constant dense<0.000000e+00> : vector<288x128xf32>
    %37 = tpu.matmul %34, %36, %cst_31 {dimension_numbers = #tpu.dot_dimension_numbers<[1], [0], [0], [1], [0, 0, 1, 1], [], []>} : vector<288x4xf32>, vector<4x128xf32>, vector<288x128xf32> -> vector<288x128xf32>
    %38 = arith.addf %30, %37 : vector<288x128xf32>
    %c0_32 = arith.constant 0 : index
    %c20 = arith.constant 20 : index
    %c0_33 = arith.constant 0 : index
    %39 = vector.load %arg1[%c0_32, %c20, %c0_33] : memref<1x342x4xf32, #tpu.memory_space<vmem>>, vector<1x288x4xf32>
    %40 = vector.shape_cast %39 : vector<1x288x4xf32> to vector<288x4xf32>
    %cst_34 = arith.constant 0.000000e+00 : f32
    %41 = vector.broadcast %cst_34 : f32 to vector<288x4xf32>
    %42 = arith.maximumf %40, %41 : vector<288x4xf32>
    %c5 = arith.constant 5 : index
    %c0_35 = arith.constant 0 : index
    %c0_36 = arith.constant 0 : index
    %43 = vector.load %arg2[%c5, %c0_35, %c0_36] : memref<9x4x128xf32, #tpu.memory_space<vmem>>, vector<1x4x128xf32>
    %44 = vector.shape_cast %43 : vector<1x4x128xf32> to vector<4x128xf32>
    %cst_37 = arith.constant dense<0.000000e+00> : vector<288x128xf32>
    %45 = tpu.matmul %42, %44, %cst_37 {dimension_numbers = #tpu.dot_dimension_numbers<[1], [0], [0], [1], [0, 0, 1, 1], [], []>} : vector<288x4xf32>, vector<4x128xf32>, vector<288x128xf32> -> vector<288x128xf32>
    %46 = arith.addf %38, %45 : vector<288x128xf32>
    %c0_38 = arith.constant 0 : index
    %c36 = arith.constant 36 : index
    %c0_39 = arith.constant 0 : index
    %47 = vector.load %arg1[%c0_38, %c36, %c0_39] : memref<1x342x4xf32, #tpu.memory_space<vmem>>, vector<1x288x4xf32>
    %48 = vector.shape_cast %47 : vector<1x288x4xf32> to vector<288x4xf32>
    %cst_40 = arith.constant 0.000000e+00 : f32
    %49 = vector.broadcast %cst_40 : f32 to vector<288x4xf32>
    %50 = arith.maximumf %48, %49 : vector<288x4xf32>
    %c6 = arith.constant 6 : index
    %c0_41 = arith.constant 0 : index
    %c0_42 = arith.constant 0 : index
    %51 = vector.load %arg2[%c6, %c0_41, %c0_42] : memref<9x4x128xf32, #tpu.memory_space<vmem>>, vector<1x4x128xf32>
    %52 = vector.shape_cast %51 : vector<1x4x128xf32> to vector<4x128xf32>
    %cst_43 = arith.constant dense<0.000000e+00> : vector<288x128xf32>
    %53 = tpu.matmul %50, %52, %cst_43 {dimension_numbers = #tpu.dot_dimension_numbers<[1], [0], [0], [1], [0, 0, 1, 1], [], []>} : vector<288x4xf32>, vector<4x128xf32>, vector<288x128xf32> -> vector<288x128xf32>
    %54 = arith.addf %46, %53 : vector<288x128xf32>
    %c0_44 = arith.constant 0 : index
    %c37 = arith.constant 37 : index
    %c0_45 = arith.constant 0 : index
    %55 = vector.load %arg1[%c0_44, %c37, %c0_45] : memref<1x342x4xf32, #tpu.memory_space<vmem>>, vector<1x288x4xf32>
    %56 = vector.shape_cast %55 : vector<1x288x4xf32> to vector<288x4xf32>
    %cst_46 = arith.constant 0.000000e+00 : f32
    %57 = vector.broadcast %cst_46 : f32 to vector<288x4xf32>
    %58 = arith.maximumf %56, %57 : vector<288x4xf32>
    %c7 = arith.constant 7 : index
    %c0_47 = arith.constant 0 : index
    %c0_48 = arith.constant 0 : index
    %59 = vector.load %arg2[%c7, %c0_47, %c0_48] : memref<9x4x128xf32, #tpu.memory_space<vmem>>, vector<1x4x128xf32>
    %60 = vector.shape_cast %59 : vector<1x4x128xf32> to vector<4x128xf32>
    %cst_49 = arith.constant dense<0.000000e+00> : vector<288x128xf32>
    %61 = tpu.matmul %58, %60, %cst_49 {dimension_numbers = #tpu.dot_dimension_numbers<[1], [0], [0], [1], [0, 0, 1, 1], [], []>} : vector<288x4xf32>, vector<4x128xf32>, vector<288x128xf32> -> vector<288x128xf32>
    %62 = arith.addf %54, %61 : vector<288x128xf32>
    %c0_50 = arith.constant 0 : index
    %c38 = arith.constant 38 : index
    %c0_51 = arith.constant 0 : index
    %63 = vector.load %arg1[%c0_50, %c38, %c0_51] : memref<1x342x4xf32, #tpu.memory_space<vmem>>, vector<1x288x4xf32>
    %64 = vector.shape_cast %63 : vector<1x288x4xf32> to vector<288x4xf32>
    %cst_52 = arith.constant 0.000000e+00 : f32
    %65 = vector.broadcast %cst_52 : f32 to vector<288x4xf32>
    %66 = arith.maximumf %64, %65 : vector<288x4xf32>
    %c8 = arith.constant 8 : index
    %c0_53 = arith.constant 0 : index
    %c0_54 = arith.constant 0 : index
    %67 = vector.load %arg2[%c8, %c0_53, %c0_54] : memref<9x4x128xf32, #tpu.memory_space<vmem>>, vector<1x4x128xf32>
    %68 = vector.shape_cast %67 : vector<1x4x128xf32> to vector<4x128xf32>
    %cst_55 = arith.constant dense<0.000000e+00> : vector<288x128xf32>
    %69 = tpu.matmul %66, %68, %cst_55 {dimension_numbers = #tpu.dot_dimension_numbers<[1], [0], [0], [1], [0, 0, 1, 1], [], []>} : vector<288x4xf32>, vector<4x128xf32>, vector<288x128xf32> -> vector<288x128xf32>
    %70 = arith.addf %62, %69 : vector<288x128xf32>
    %c0_56 = arith.constant 0 : index
    %c0_57 = arith.constant 0 : index
    %71 = vector.load %arg3[%c0_56, %c0_57] : memref<1x128xf32, #tpu.memory_space<vmem>>, vector<1x128xf32>
    %72 = vector.broadcast %71 : vector<1x128xf32> to vector<288x128xf32>
    %73 = arith.addf %70, %72 : vector<288x128xf32>
    %cst_58 = arith.constant 0.000000e+00 : f32
    %74 = vector.broadcast %cst_58 : f32 to vector<288x128xf32>
    %75 = arith.maximumf %73, %74 : vector<288x128xf32>
    %c0_59 = arith.constant 0 : index
    %c0_60 = arith.constant 0 : index
    %76 = vector.load %arg4[%c0_59, %c0_60] : memref<128x4xf32, #tpu.memory_space<vmem>>, vector<128x4xf32>
    %cst_61 = arith.constant dense<0.000000e+00> : vector<288x4xf32>
    %77 = tpu.matmul %75, %76, %cst_61 {dimension_numbers = #tpu.dot_dimension_numbers<[1], [0], [0], [1], [0, 0, 1, 1], [], []>} : vector<288x128xf32>, vector<128x4xf32>, vector<288x4xf32> -> vector<288x4xf32>
    %c0_62 = arith.constant 0 : index
    %c19_63 = arith.constant 19 : index
    %c0_64 = arith.constant 0 : index
    %78 = vector.load %arg1[%c0_62, %c19_63, %c0_64] : memref<1x342x4xf32, #tpu.memory_space<vmem>>, vector<1x288x4xf32>
    %79 = vector.shape_cast %78 : vector<1x288x4xf32> to vector<288x4xf32>
    %c0_65 = arith.constant 0 : index
    %c0_66 = arith.constant 0 : index
    %80 = vector.load %arg5[%c0_65, %c0_66] : memref<1x4xf32, #tpu.memory_space<vmem>>, vector<1x4xf32>
    %81 = vector.broadcast %80 : vector<1x4xf32> to vector<288x4xf32>
    %82 = arith.addf %77, %81 : vector<288x4xf32>
    %83 = arith.addf %82, %79 : vector<288x4xf32>
    %c0_67 = arith.constant 0 : index
    %c0_68 = arith.constant 0 : index
    %c0_69 = arith.constant 0 : index
    %84 = vector.load %arg6[%c0_67, %c0_68, %c0_69] : memref<1x288x4xf32, #tpu.memory_space<vmem>>, vector<1x288x4xf32>
    %85 = vector.shape_cast %84 : vector<1x288x4xf32> to vector<288x4xf32>
    %86 = vector.shape_cast %83 : vector<288x4xf32> to vector<1x288x4xf32>
    tpu.vector_store %arg6[%c0_67, %c0_68, %c0_69], %86 {strides = array<i32>} : memref<1x288x4xf32, #tpu.memory_space<vmem>>, vector<1x288x4xf32>,
    return
  }
  func.func @transform_0(%arg0: i32) -> (i32, i32, i32) {
    %c0_i32 = arith.constant 0 : i32
    %c0_i32_0 = arith.constant 0 : i32
    %c0_i32_1 = arith.constant 0 : i32
    return %arg0, %c0_i32, %c0_i32_0 : i32, i32, i32
  }
  func.func @transform_1(%arg0: i32) -> (i32, i32, i32) {
    %c0_i32 = arith.constant 0 : i32
    %c0_i32_0 = arith.constant 0 : i32
    %c0_i32_1 = arith.constant 0 : i32
    %c0_i32_2 = arith.constant 0 : i32
    return %c0_i32, %c0_i32_0, %c0_i32_1 : i32, i32, i32
  }
  func.func @transform_2(%arg0: i32) -> (i32, i32) {
    %c0_i32 = arith.constant 0 : i32
    %c0_i32_0 = arith.constant 0 : i32
    %c0_i32_1 = arith.constant 0 : i32
    return %c0_i32, %c0_i32_0 : i32, i32
  }
  func.func @transform_3(%arg0: i32) -> (i32, i32) {
    %c0_i32 = arith.constant 0 : i32
    %c0_i32_0 = arith.constant 0 : i32
    %c0_i32_1 = arith.constant 0 : i32
    return %c0_i32, %c0_i32_0 : i32, i32
  }
  func.func @transform_4(%arg0: i32) -> (i32, i32) {
    %c0_i32 = arith.constant 0 : i32
    %c0_i32_0 = arith.constant 0 : i32
    %c0_i32_1 = arith.constant 0 : i32
    return %c0_i32, %c0_i32_0 : i32, i32
  }
  func.func @transform_5(%arg0: i32) -> (i32, i32, i32) {
    %c0_i32 = arith.constant 0 : i32
    %c0_i32_0 = arith.constant 0 : i32
    %c0_i32_1 = arith.constant 0 : i32
    return %arg0, %c0_i32, %c0_i32_0 : i32, i32, i32
  }
}

</mosaic_0001>

<llo_original>
// kernel: tpu_custom_call.1
$region0: #{tpu_custom_call.1}
  #allocation0 [shape = 'u32[]', space=smem, size = 0x4, offset = 0x4, fixed_abs, tag = 'smem constant byte address 0x4 - core index']
  #allocation1 [shape = 'u32[144,128]{1,0:T(1,128)}', space=vmem, size = 0x12000, scoped, tag = 'internal scratch']
  %s0 = inlined_call_operand.vmem [shape: f32[2,342,4], index: 0, kind: input, shape index: {}]
  %s1 = inlined_call_operand.vmem [shape: f32[9,4,128], index: 1, kind: input, shape index: {}]
  %s2 = inlined_call_operand.vmem [shape: f32[1,128], index: 2, kind: input, shape index: {}]
  %s3 = inlined_call_operand.vmem [shape: f32[128,4], index: 3, kind: input, shape index: {}]
  %s4 = inlined_call_operand.vmem [shape: f32[1,4], index: 4, kind: input, shape index: {}]
  %s5 = inlined_call_operand.vmem [shape: f32[2,288,4], index: 5, kind: output, shape index: {}]
  %s6 = sld [smem:[#allocation0]]
  $region53: #{tpu_custom_call.1} parent=0
    _
  %s8 = ssub.s32 1, %s6
  %s9 = scalar_select 0, %s8, %s6
  loop: start=0, step=1, limit=4
  $region2: #{tpu_custom_call.1} parent=0 // loop_pre_header
    _
  $region3: #{tpu_custom_call.1} parent=0 // loop_header
    %s11 = sphi 0, %s15
    %p12 = scmp.ge.s32.totalorder %s11, 4
    %s21 = sphi 0, %s23
    %s24 = sphi 0, %s21
    %s25 = sphi 0, %s24
    %s41 = sphi 0, %s25
    %s45 = sphi 0, %s45
    %s47 = sphi 0, %s45
    %s48 = sphi 0, %s47
    %s62 = sphi 0, %s48
    %s66 = sphi 0, %s66
    %s68 = sphi 0, %s66
    %s69 = sphi 0, %s68
    %s83 = sphi 0, %s69
    %s87 = sphi 0, %s87
    %s89 = sphi 0, %s87
    %s90 = sphi 0, %s89
    %s104 = sphi 0, %s90
    %s108 = sphi 0, %s108
    %s110 = sphi 0, %s108
    %s111 = sphi 0, %s110
    %s125 = sphi 0, %s111
    %s131 = sphi 0, %s133
    %s134 = sphi 0, %s131
    %s135 = sphi 0, %s134
    %s151 = sphi 0, %s135
  $region4: #{tpu_custom_call.1} parent=0 // loop_header_branch
    %14 = sbr.rel (%p12) target = $region8
  $region5: #{tpu_custom_call.1} parent=0 // loop_body
    %s16 = ssub.s32 %s11, 1
    %s17 = ssub.s32 %s11, 2
    %s18 = sadd.s32 %s11, 1
    %s19 = ssub.s32 %s11, %s18
    %p20 = scmp.eq.s32.totalorder %s19, 0
    %s22 = sadd.s32 %s21, 1
    %s23 = scalar_select %p20, %s21, %s22
    %p26 = pneg %p20
    %p27 = scmp.eq.s32.totalorder %s11, 1
    %p28 = por %p26, %p27
    %p29 = scmp.ne.s32.totalorder %s21, %s24
    %p30 = scmp.eq.s32.totalorder %s11, 0
    %p31 = por %p29, %p30
    %p32 = scmp.ne.s32.totalorder %s21, %s24
    %p33 = scmp.eq.s32.totalorder %s16, 1
    %p34 = por %p32, %p33
    %p35 = scmp.ne.s32.totalorder %s24, %s25
    %p36 = scmp.eq.s32.totalorder %s16, 0
    %p37 = por %p35, %p36
    %p38 = scmp.ne.s32.totalorder %s24, %s25
    %p39 = scmp.eq.s32.totalorder %s17, 1
    %p40 = por %p38, %p39
    %p42 = scmp.ne.s32.totalorder %s25, %s41
    %p43 = scmp.eq.s32.totalorder %s17, 0
    %p44 = por %p42, %p43
    %s46 = sadd.s32 %s45, 1
    %p49 = scmp.eq.s32.totalorder %s11, 1
    %p50 = scmp.ne.s32.totalorder %s45, %s47
    %p51 = scmp.eq.s32.totalorder %s11, 0
    %p52 = por %p50, %p51
    %p53 = scmp.ne.s32.totalorder %s45, %s47
    %p54 = scmp.eq.s32.totalorder %s16, 1
    %p55 = por %p53, %p54
    %p56 = scmp.ne.s32.totalorder %s47, %s48
    %p57 = scmp.eq.s32.totalorder %s16, 0
    %p58 = por %p56, %p57
    %p59 = scmp.ne.s32.totalorder %s47, %s48
    %p60 = scmp.eq.s32.totalorder %s17, 1
    %p61 = por %p59, %p60
    %p63 = scmp.ne.s32.totalorder %s48, %s62
    %p64 = scmp.eq.s32.totalorder %s17, 0
    %p65 = por %p63, %p64
    %s67 = sadd.s32 %s66, 1
    %p70 = scmp.eq.s32.totalorder %s11, 1
    %p71 = scmp.ne.s32.totalorder %s66, %s68
    %p72 = scmp.eq.s32.totalorder %s11, 0
    %p73 = por %p71, %p72
    %p74 = scmp.ne.s32.totalorder %s66, %s68
    %p75 = scmp.eq.s32.totalorder %s16, 1
    %p76 = por %p74, %p75
    %p77 = scmp.ne.s32.totalorder %s68, %s69
    %p78 = scmp.eq.s32.totalorder %s16, 0
    %p79 = por %p77, %p78
    %p80 = scmp.ne.s32.totalorder %s68, %s69
    %p81 = scmp.eq.s32.totalorder %s17, 1
    %p82 = por %p80, %p81
    %p84 = scmp.ne.s32.totalorder %s69, %s83
    %p85 = scmp.eq.s32.totalorder %s17, 0
    %p86 = por %p84, %p85
    %s88 = sadd.s32 %s87, 1
    %p91 = scmp.eq.s32.totalorder %s11, 1
    %p92 = scmp.ne.s32.totalorder %s87, %s89
    %p93 = scmp.eq.s32.totalorder %s11, 0
    %p94 = por %p92, %p93
    %p95 = scmp.ne.s32.totalorder %s87, %s89
    %p96 = scmp.eq.s32.totalorder %s16, 1
    %p97 = por %p95, %p96
    %p98 = scmp.ne.s32.totalorder %s89, %s90
    %p99 = scmp.eq.s32.totalorder %s16, 0
    %p100 = por %p98, %p99
    %p101 = scmp.ne.s32.totalorder %s89, %s90
    %p102 = scmp.eq.s32.totalorder %s17, 1
    %p103 = por %p101, %p102
    %p105 = scmp.ne.s32.totalorder %s90, %s104
    %p106 = scmp.eq.s32.totalorder %s17, 0
    %p107 = por %p105, %p106
    %s109 = sadd.s32 %s108, 1
    %p112 = scmp.eq.s32.totalorder %s11, 1
    %p113 = scmp.ne.s32.totalorder %s108, %s110
    %p114 = scmp.eq.s32.totalorder %s11, 0
    %p115 = por %p113, %p114
    %p116 = scmp.ne.s32.totalorder %s108, %s110
    %p117 = scmp.eq.s32.totalorder %s16, 1
    %p118 = por %p116, %p117
    %p119 = scmp.ne.s32.totalorder %s110, %s111
    %p120 = scmp.eq.s32.totalorder %s16, 0
    %p121 = por %p119, %p120
    %p122 = scmp.ne.s32.totalorder %s110, %s111
    %p123 = scmp.eq.s32.totalorder %s17, 1
    %p124 = por %p122, %p123
    %p126 = scmp.ne.s32.totalorder %s111, %s125
    %p127 = scmp.eq.s32.totalorder %s17, 0
    %p128 = por %p126, %p127
    %s129 = ssub.s32 %s11, %s18
    %p130 = scmp.eq.s32.totalorder %s129, 0
    %s132 = sadd.s32 %s131, 1
    %s133 = scalar_select %p130, %s131, %s132
    %p136 = pneg %p130
    %p137 = scmp.eq.s32.totalorder %s11, 1
    %p138 = por %p136, %p137
    %p139 = scmp.ne.s32.totalorder %s131, %s134
    %p140 = scmp.eq.s32.totalorder %s11, 0
    %p141 = por %p139, %p140
    %p142 = scmp.ne.s32.totalorder %s131, %s134
    %p143 = scmp.eq.s32.totalorder %s16, 1
    %p144 = por %p142, %p143
    %p145 = scmp.ne.s32.totalorder %s134, %s135
    %p146 = scmp.eq.s32.totalorder %s16, 0
    %p147 = por %p145, %p146
    %p148 = scmp.ne.s32.totalorder %s134, %s135
    %p149 = scmp.eq.s32.totalorder %s17, 1
    %p150 = por %p148, %p149
    %p152 = scmp.ne.s32.totalorder %s135, %s151
    %p153 = scmp.eq.s32.totalorder %s17, 0
    %p154 = por %p152, %p153
    %p155 = scmp.le.s32.totalorder 1, %s11
    %p156 = scmp.lt.s32.totalorder %s11, 3
    %p157 = pnand %p155, %p156
    %p158 = pneg %p157
    // Predicated region
    $region9: #{tpu_custom_call.1} parent=5 // pred_check
      _
    $region10: #{tpu_custom_call.1} parent=5 // pred_check_branch
      %160 = sbr.rel (%p157) target = $region12
    $region11: #{tpu_custom_call.1} parent=5 // pred_region
      %s161 = ssub.s32 %s11, 1
      // Predicated region
      $region13: #{tpu_custom_call.1} parent=11 // pred_check
        %p162 = pneg %p58
      $region14: #{tpu_custom_call.1} parent=11 // pred_check_branch
        %164 = sbr.rel (%p162) target = $region16
      $region15: #{tpu_custom_call.1} parent=11 // pred_region
        _
      $region16: #{tpu_custom_call.1} parent=11 // pred_fallthru
        _
      // Predicated region
      $region17: #{tpu_custom_call.1} parent=11 // pred_check
        %p165 = pneg %p79
      $region18: #{tpu_custom_call.1} parent=11 // pred_check_branch
        %167 = sbr.rel (%p165) target = $region20
      $region19: #{tpu_custom_call.1} parent=11 // pred_region
        _
      $region20: #{tpu_custom_call.1} parent=11 // pred_fallthru
        _
      // Predicated region
      $region21: #{tpu_custom_call.1} parent=11 // pred_check
        %p168 = pneg %p100
      $region22: #{tpu_custom_call.1} parent=11 // pred_check_branch
        %170 = sbr.rel (%p168) target = $region24
      $region23: #{tpu_custom_call.1} parent=11 // pred_region
        _
      $region24: #{tpu_custom_call.1} parent=11 // pred_fallthru
        _
      // Predicated region
      $region25: #{tpu_custom_call.1} parent=11 // pred_check
        %p171 = pneg %p121
      $region26: #{tpu_custom_call.1} parent=11 // pred_check_branch
        %173 = sbr.rel (%p171) target = $region28
      $region27: #{tpu_custom_call.1} parent=11 // pred_region
        _
      $region28: #{tpu_custom_call.1} parent=11 // pred_fallthru
        _
    $region12: #{tpu_custom_call.1} parent=5 // pred_fallthru
      _
    %p174 = scmp.lt.s32.totalorder %s11, 2
    // Predicated region
    $region29: #{tpu_custom_call.1} parent=5 // pred_check
      %p175 = pneg %p174
    $region30: #{tpu_custom_call.1} parent=5 // pred_check_branch
      %177 = sbr.rel (%p175) target = $region32
    $region31: #{tpu_custom_call.1} parent=5 // pred_region
      // Predicated region
      $region33: #{tpu_custom_call.1} parent=31 // pred_check
        %p178 = pneg %p31
      $region34: #{tpu_custom_call.1} parent=31 // pred_check_branch
        %180 = sbr.rel (%p178) target = $region36
      $region35: #{tpu_custom_call.1} parent=31 // pred_region
        %p181 = scmp.lt.s32.totalorder %s11, 1
        %s182 = scalar_select %p181, %s11, 1
        %s183 = smul.addr %s182, 43
        %s184 = smul.addr %s183, 8
        %s185 = scalar_lea.vmem %s0, %s184
      $region36: #{tpu_custom_call.1} parent=31 // pred_fallthru
        _
    $region32: #{tpu_custom_call.1} parent=5 // pred_fallthru
      _
    %p186 = scmp.le.s32.totalorder 1, %s11
    %p187 = scmp.lt.s32.totalorder %s11, 3
    %p188 = pnand %p186, %p187
    %p189 = pneg %p188
    // Predicated region
    $region37: #{tpu_custom_call.1} parent=5 // pred_check
      _
    $region38: #{tpu_custom_call.1} parent=5 // pred_check_branch
      %191 = sbr.rel (%p188) target = $region40
    $region39: #{tpu_custom_call.1} parent=5 // pred_region
      %s192 = ssub.s32 %s11, 1
      %p193 = scmp.lt.s32.totalorder %s16, 1
      %s194 = scalar_select %p193, %s16, 1
      %s195 = smul.addr %s194, 43
      %s196 = smul.addr %s195, 8
      %s197 = scalar_lea.vmem %s0, %s196
      %p198 = pneg %p37
      %p199 = pneg %p34
      %p200 = pneg %p58
      %p201 = pneg %p55
      %p202 = pneg %p79
      %p203 = pneg %p76
      %p204 = pneg %p100
      %p205 = pneg %p97
      %p206 = pneg %p121
      %p207 = pneg %p118
      %p208 = pneg %p147
      %p209 = pneg %p144
      %p210 = scmp.lt.s32.totalorder %s16, 1
      %s211 = scalar_select %p210, %s16, 1
      %s212 = smul.addr %s211, 36
      %s213 = smul.addr %s212, 8
      %s214 = scalar_lea.vmem %s5, %s213
      %p215 = scmp.lt.s32.totalorder %s16, 1
      %s216 = scalar_select %p215, %s16, 1
      %s217 = smul.addr %s216, 43
      %s218 = smul.addr %s217, 8
      %s219 = scalar_lea.vmem %s0, %s218
      %p220 = scmp.lt.s32.totalorder %s16, 1
      %s221 = scalar_select %p220, %s16, 1
      %s222 = smul.addr %s221, 36
      %s223 = smul.addr %s222, 8
      %s224 = scalar_lea.vmem %s5, %s223
      %v225 = vld [vmem:[%s219] sm:$0xff]
      %v226 = vld [vmem:[%s219 + $0x8] sm:$0xff]
      %v227 = vld [vmem:[%s219 + $0x10] sm:$0xff]
      %v228 = vld [vmem:[%s219 + $0x18] sm:$0xff]
      %v229 = vld [vmem:[%s219 + $0x20] sm:$0xff]
      %v230 = vld [vmem:[%s219 + $0x28] sm:$0xff]
      %v231 = vld [vmem:[%s219 + $0x30] sm:$0xff]
      %v232 = vld [vmem:[%s219 + $0x38] sm:$0xff]
      %v233 = vld [vmem:[%s219 + $0x40] sm:$0xff]
      %v234 = vld [vmem:[%s219 + $0x48] sm:$0xff]
      %v235 = vld [vmem:[%s219 + $0x50] sm:$0xff]
      %v236 = vld [vmem:[%s219 + $0x58] sm:$0xff]
      %v237 = vld [vmem:[%s219 + $0x60] sm:$0xff]
      %v238 = vld [vmem:[%s219 + $0x68] sm:$0xff]
      %v239 = vld [vmem:[%s219 + $0x70] sm:$0xff]
      %v240 = vld [vmem:[%s219 + $0x78] sm:$0xff]
      %v241 = vld [vmem:[%s219 + $0x80] sm:$0xff]
      %v242 = vld [vmem:[%s219 + $0x88] sm:$0xff]
      %v243 = vld [vmem:[%s219 + $0x90] sm:$0xff]
      %v244 = vld [vmem:[%s219 + $0x98] sm:$0xff]
      %v245 = vld [vmem:[%s219 + $0xa0] sm:$0xff]
      %v246 = vld [vmem:[%s219 + $0xa8] sm:$0xff]
      %v247 = vld [vmem:[%s219 + $0xb0] sm:$0xff]
      %v248 = vld [vmem:[%s219 + $0xb8] sm:$0xff]
      %v249 = vld [vmem:[%s219 + $0xc0] sm:$0xff]
      %v250 = vld [vmem:[%s219 + $0xc8] sm:$0xff]
      %v251 = vld [vmem:[%s219 + $0xd0] sm:$0xff]
      %v252 = vld [vmem:[%s219 + $0xd8] sm:$0xff]
      %v253 = vld [vmem:[%s219 + $0xe0] sm:$0xff]
      %v254 = vld [vmem:[%s219 + $0xe8] sm:$0xff]
      %v255 = vld [vmem:[%s219 + $0xf0] sm:$0xff]
      %v256 = vld [vmem:[%s219 + $0xf8] sm:$0xff]
      %v257 = vld [vmem:[%s219 + $0x100] sm:$0xff]
      %v258 = vld [vmem:[%s219 + $0x108] sm:$0xff]
      %v259 = vld [vmem:[%s219 + $0x110] sm:$0xff]
      %v260 = vld [vmem:[%s219 + $0x118] sm:$0xff]
      %v261 = vmax.f32 %v225, 0.0
      %v262 = vmax.f32 %v226, 0.0
      %v263 = vmax.f32 %v227, 0.0
      %v264 = vmax.f32 %v228, 0.0
      %v265 = vmax.f32 %v229, 0.0
      %v266 = vmax.f32 %v230, 0.0
      %v267 = vmax.f32 %v231, 0.0
      %v268 = vmax.f32 %v232, 0.0
      %v269 = vmax.f32 %v233, 0.0
      %v270 = vmax.f32 %v234, 0.0
      %v271 = vmax.f32 %v235, 0.0
      %v272 = vmax.f32 %v236, 0.0
      %v273 = vmax.f32 %v237, 0.0
      %v274 = vmax.f32 %v238, 0.0
      %v275 = vmax.f32 %v239, 0.0
      %v276 = vmax.f32 %v240, 0.0
      %v277 = vmax.f32 %v241, 0.0
      %v278 = vmax.f32 %v242, 0.0
      %v279 = vmax.f32 %v243, 0.0
      %v280 = vmax.f32 %v244, 0.0
      %v281 = vmax.f32 %v245, 0.0
      %v282 = vmax.f32 %v246, 0.0
      %v283 = vmax.f32 %v247, 0.0
      %v284 = vmax.f32 %v248, 0.0
      %v285 = vmax.f32 %v249, 0.0
      %v286 = vmax.f32 %v250, 0.0
      %v287 = vmax.f32 %v251, 0.0
      %v288 = vmax.f32 %v252, 0.0
      %v289 = vmax.f32 %v253, 0.0
      %v290 = vmax.f32 %v254, 0.0
      %v291 = vmax.f32 %v255, 0.0
      %v292 = vmax.f32 %v256, 0.0
      %v293 = vmax.f32 %v257, 0.0
      %v294 = vmax.f32 %v258, 0.0
      %v295 = vmax.f32 %v259, 0.0
      %v296 = vmax.f32 %v260, 0.0
      %v297 = vld [vmem:[%s1] sm:$0xf]
      %v298 = vld [vmem:[%s219 + $0x1] sm:$0xff]
      %v299 = vld [vmem:[%s219 + $0x9] sm:$0xff]
      %v300 = vld [vmem:[%s219 + $0x11] sm:$0xff]
      %v301 = vld [vmem:[%s219 + $0x19] sm:$0xff]
      %v302 = vld [vmem:[%s219 + $0x21] sm:$0xff]
      %v303 = vld [vmem:[%s219 + $0x29] sm:$0xff]
      %v304 = vld [vmem:[%s219 + $0x31] sm:$0xff]
      %v305 = vld [vmem:[%s219 + $0x39] sm:$0xff]
      %v306 = vld [vmem:[%s219 + $0x41] sm:$0xff]
      %v307 = vld [vmem:[%s219 + $0x49] sm:$0xff]
      %v308 = vld [vmem:[%s219 + $0x51] sm:$0xff]
      %v309 = vld [vmem:[%s219 + $0x59] sm:$0xff]
      %v310 = vld [vmem:[%s219 + $0x61] sm:$0xff]
      %v311 = vld [vmem:[%s219 + $0x69] sm:$0xff]
      %v312 = vld [vmem:[%s219 + $0x71] sm:$0xff]
      %v313 = vld [vmem:[%s219 + $0x79] sm:$0xff]
      %v314 = vld [vmem:[%s219 + $0x81] sm:$0xff]
      %v315 = vld [vmem:[%s219 + $0x89] sm:$0xff]
      %v316 = vld [vmem:[%s219 + $0x91] sm:$0xff]
      %v317 = vld [vmem:[%s219 + $0x99] sm:$0xff]
      %v318 = vld [vmem:[%s219 + $0xa1] sm:$0xff]
      %v319 = vld [vmem:[%s219 + $0xa9] sm:$0xff]
      %v320 = vld [vmem:[%s219 + $0xb1] sm:$0xff]
      %v321 = vld [vmem:[%s219 + $0xb9] sm:$0xff]
      %v322 = vld [vmem:[%s219 + $0xc1] sm:$0xff]
      %v323 = vld [vmem:[%s219 + $0xc9] sm:$0xff]
      %v324 = vld [vmem:[%s219 + $0xd1] sm:$0xff]
      %v325 = vld [vmem:[%s219 + $0xd9] sm:$0xff]
      %v326 = vld [vmem:[%s219 + $0xe1] sm:$0xff]
      %v327 = vld [vmem:[%s219 + $0xe9] sm:$0xff]
      %v328 = vld [vmem:[%s219 + $0xf1] sm:$0xff]
      %v329 = vld [vmem:[%s219 + $0xf9] sm:$0xff]
      %v330 = vld [vmem:[%s219 + $0x101] sm:$0xff]
      %v331 = vld [vmem:[%s219 + $0x109] sm:$0xff]
      %v332 = vld [vmem:[%s219 + $0x111] sm:$0xff]
      %v333 = vld [vmem:[%s219 + $0x119] sm:$0xff]
      %v334 = vmax.f32 %v298, 0.0
      %v335 = vmax.f32 %v299, 0.0
      %v336 = vmax.f32 %v300, 0.0
      %v337 = vmax.f32 %v301, 0.0
      %v338 = vmax.f32 %v302, 0.0
      %v339 = vmax.f32 %v303, 0.0
      %v340 = vmax.f32 %v304, 0.0
      %v341 = vmax.f32 %v305, 0.0
      %v342 = vmax.f32 %v306, 0.0
      %v343 = vmax.f32 %v307, 0.0
      %v344 = vmax.f32 %v308, 0.0
      %v345 = vmax.f32 %v309, 0.0
      %v346 = vmax.f32 %v310, 0.0
      %v347 = vmax.f32 %v311, 0.0
      %v348 = vmax.f32 %v312, 0.0
      %v349 = vmax.f32 %v313, 0.0
      %v350 = vmax.f32 %v314, 0.0
      %v351 = vmax.f32 %v315, 0.0
      %v352 = vmax.f32 %v316, 0.0
      %v353 = vmax.f32 %v317, 0.0
      %v354 = vmax.f32 %v318, 0.0
      %v355 = vmax.f32 %v319, 0.0
      %v356 = vmax.f32 %v320, 0.0
      %v357 = vmax.f32 %v321, 0.0
      %v358 = vmax.f32 %v322, 0.0
      %v359 = vmax.f32 %v323, 0.0
      %v360 = vmax.f32 %v324, 0.0
      %v361 = vmax.f32 %v325, 0.0
      %v362 = vmax.f32 %v326, 0.0
      %v363 = vmax.f32 %v327, 0.0
      %v364 = vmax.f32 %v328, 0.0
      %v365 = vmax.f32 %v329, 0.0
      %v366 = vmax.f32 %v330, 0.0
      %v367 = vmax.f32 %v331, 0.0
      %v368 = vmax.f32 %v332, 0.0
      %v369 = vmax.f32 %v333, 0.0
      %s370 = scalar_lea.vmem %s1, 4
      %v371 = vld [vmem:[%s370] sm:$0xf]
      %vm372 = vcmask 31744
      %v374 = vsel %vm372, %v334, 0
      %v377 = vsel %vm372, %v335, 0
      %v380 = vsel %vm372, %v336, 0
      %v383 = vsel %vm372, %v337, 0
      %v386 = vsel %vm372, %v338, 0
      %v389 = vsel %vm372, %v339, 0
      %v392 = vsel %vm372, %v340, 0
      %v395 = vsel %vm372, %v341, 0
      %v398 = vsel %vm372, %v342, 0
      %v401 = vsel %vm372, %v343, 0
      %v404 = vsel %vm372, %v344, 0
      %v407 = vsel %vm372, %v345, 0
      %v410 = vsel %vm372, %v346, 0
      %v413 = vsel %vm372, %v347, 0
      %v416 = vsel %vm372, %v348, 0
      %v419 = vsel %vm372, %v349, 0
      %v422 = vsel %vm372, %v350, 0
      %v425 = vsel %vm372, %v351, 0
      %v428 = vsel %vm372, %v352, 0
      %v431 = vsel %vm372, %v353, 0
      %v434 = vsel %vm372, %v354, 0
      %v437 = vsel %vm372, %v355, 0
      %v440 = vsel %vm372, %v356, 0
      %v443 = vsel %vm372, %v357, 0
      %v446 = vsel %vm372, %v358, 0
      %v449 = vsel %vm372, %v359, 0
      %v452 = vsel %vm372, %v360, 0
      %v455 = vsel %vm372, %v361, 0
      %v458 = vsel %vm372, %v362, 0
      %v461 = vsel %vm372, %v363, 0
      %v464 = vsel %vm372, %v364, 0
      %v467 = vsel %vm372, %v365, 0
      %v470 = vsel %vm372, %v366, 0
      %v473 = vsel %vm372, %v367, 0
      %v476 = vsel %vm372, %v368, 0
      %v479 = vsel %vm372, %v369, 0
      %vm481 = vcmask 1043456
      %v483 = vsel %vm481, %v371, 0
      %485 = vmatprep.subr.mxu0 0.0
      %486 = vmatpush1.msra.mxu0 %v483
      %487 = vmatprep.subr.mxu0 0.0
      %488 = vmatpush1.msra.mxu0 0.0
      %489 = vmatprep.subr.mxu0 0.0
      %490 = vmatpush1.msra.mxu0 0.0
      %491 = vmatprep.subr.mxu0 0.0
      %492 = vmatpush1.msra.mxu0 0.0
      %493 = vmatprep.subr.mxu0 0.0
      %494 = vmatpush1.msra.mxu0 0.0
      %495 = vmatprep.subr.mxu0 0.0
      %496 = vmatpush1.msra.mxu0 0.0
      %497 = vmatprep.subr.mxu0 0.0
      %498 = vmatpush1.msra.mxu0 0.0
      %499 = vmatprep.subr.mxu0 0.0
      %500 = vmatpush1.msra.mxu0 0.0
      %501 = vmatprep.subr.mxu0 0.0
      %502 = vmatpush1.msra.mxu0 0.0
      %503 = vmatprep.subr.mxu0 0.0
      %504 = vmatpush1.msra.mxu0 0.0
      %505 = vmatprep.subr.mxu0 0.0
      %506 = vmatpush1.msra.mxu0 0.0
      %507 = vmatprep.subr.mxu0 0.0
      %508 = vmatpush1.msra.mxu0 0.0
      %509 = vmatprep.subr.mxu0 0.0
      %510 = vmatpush1.msra.mxu0 0.0
      %511 = vmatprep.subr.mxu0 0.0
      %512 = vmatpush1.msra.mxu0 0.0
      %513 = vmatprep.subr.mxu0 0.0
      %514 = vmatpush1.msra.mxu0 0.0
      %515 = vmatprep.subr.mxu0 0.0
      %516 = vmatpush1.msra.mxu0 0.0
      %517 = vmatprep.subr.mxu0 0.0
      %518 = vmatpush1.msra.mxu0 0.0
      %519 = vmatprep.subr.mxu0 0.0
      %520 = vmatpush1.msra.mxu0 0.0
      %521 = vmatprep.subr.mxu0 0.0
      %522 = vmatpush1.msra.mxu0 0.0
      %523 = vmatprep.subr.mxu0 0.0
      %524 = vmatpush1.msra.mxu0 0.0
      %525 = vmatprep.subr.mxu0 0.0
      %526 = vmatpush1.msra.mxu0 0.0
      %527 = vmatprep.subr.mxu0 0.0
      %528 = vmatpush1.msra.mxu0 0.0
      %529 = vmatprep.subr.mxu0 0.0
      %530 = vmatpush1.msra.mxu0 0.0
      %531 = vmatprep.subr.mxu0 0.0
      %532 = vmatpush1.msra.mxu0 0.0
      %533 = vmatprep.subr.mxu0 0.0
      %534 = vmatpush1.msra.mxu0 0.0
      %535 = vmatprep.subr.mxu0 0.0
      %536 = vmatpush1.msra.mxu0 0.0
      %537 = vmatprep.subr.mxu0 0.0
      %538 = vmatpush1.msra.mxu0 0.0
      %539 = vmatprep.subr.mxu0 0.0
      %540 = vmatpush1.msra.mxu0 0.0
      %541 = vmatprep.subr.mxu0 0.0
      %542 = vmatpush1.msra.mxu0 0.0
      %543 = vmatprep.subr.mxu0 0.0
      %544 = vmatpush1.msra.mxu0 0.0
      %545 = vmatprep.subr.mxu0 0.0
      %546 = vmatpush1.msra.mxu0 0.0
      %547 = vmatprep.subr.mxu0 0.0
      %548 = vmatpush1.msra.mxu0 0.0
      %549 = vmatprep.mubr.f32.mxu0 0.0
      %550 = vmatmul.mubr.f32.gmra.mrb[0].mxu0 %v374
      %v551 = vpop.f32.mrb[0].mxu0
      %v552 = vadd.f32 0.0, %v551
      %v553 = vpop.f32.mrb[0].mxu0
      %554 = vmatprep.mubr.f32.mxu0 0.0
      %555 = vmatmul.mubr.f32.gmra.mrb[0].mxu0 %v377
      %v556 = vpop.f32.mrb[0].mxu0
      %v557 = vadd.f32 0.0, %v556
      %v558 = vpop.f32.mrb[0].mxu0
      %559 = vmatprep.mubr.f32.mxu0 0.0
      %560 = vmatmul.mubr.f32.gmra.mrb[0].mxu0 %v380
      %v561 = vpop.f32.mrb[0].mxu0
      %v562 = vadd.f32 0.0, %v561
      %v563 = vpop.f32.mrb[0].mxu0
      %564 = vmatprep.mubr.f32.mxu0 0.0
      %565 = vmatmul.mubr.f32.gmra.mrb[0].mxu0 %v383
      %v566 = vpop.f32.mrb[0].mxu0
      %v567 = vadd.f32 0.0, %v566
      %v568 = vpop.f32.mrb[0].mxu0
      %569 = vmatprep.mubr.f32.mxu0 0.0
      %570 = vmatmul.mubr.f32.gmra.mrb[0].mxu0 %v386
      %v571 = vpop.f32.mrb[0].mxu0
      %v572 = vadd.f32 0.0, %v571
      %v573 = vpop.f32.mrb[0].mxu0
      %574 = vmatprep.mubr.f32.mxu0 0.0
      %575 = vmatmul.mubr.f32.gmra.mrb[0].mxu0 %v389
      %v576 = vpop.f32.mrb[0].mxu0
      %v577 = vadd.f32 0.0, %v576
      %v578 = vpop.f32.mrb[0].mxu0
      %579 = vmatprep.mubr.f32.mxu0 0.0
      %580 = vmatmul.mubr.f32.gmra.mrb[0].mxu0 %v392
      %v581 = vpop.f32.mrb[0].mxu0
      %v582 = vadd.f32 0.0, %v581
      %v583 = vpop.f32.mrb[0].mxu0
      %584 = vmatprep.mubr.f32.mxu0 0.0
      %585 = vmatmul.mubr.f32.gmra.mrb[0].mxu0 %v395
      %v586 = vpop.f32.mrb[0].mxu0
      %v587 = vadd.f32 0.0, %v586
      %v588 = vpop.f32.mrb[0].mxu0
      %589 = vmatprep.mubr.f32.mxu0 0.0
      %590 = vmatmul.mubr.f32.gmra.mrb[0].mxu0 %v398
      %v591 = vpop.f32.mrb[0].mxu0
      %v592 = vadd.f32 0.0, %v591
      %v593 = vpop.f32.mrb[0].mxu0
      %594 = vmatprep.mubr.f32.mxu0 0.0
      %595 = vmatmul.mubr.f32.gmra.mrb[0].mxu0 %v401
      %v596 = vpop.f32.mrb[0].mxu0
      %v597 = vadd.f32 0.0, %v596
      %v598 = vpop.f32.mrb[0].mxu0
      %599 = vmatprep.mubr.f32.mxu0 0.0
      %600 = vmatmul.mubr.f32.gmra.mrb[0].mxu0 %v404
      %v601 = vpop.f32.mrb[0].mxu0
      %v602 = vadd.f32 0.0, %v601
      %v603 = vpop.f32.mrb[0].mxu0
      %604 = vmatprep.mubr.f32.mxu0 0.0
      %605 = vmatmul.mubr.f32.gmra.mrb[0].mxu0 %v407
      %v606 = vpop.f32.mrb[0].mxu0
      %v607 = vadd.f32 0.0, %v606
      %v608 = vpop.f32.mrb[0].mxu0
      %609 = vmatprep.mubr.f32.mxu0 0.0
      %610 = vmatmul.mubr.f32.gmra.mrb[0].mxu0 %v410
      %v611 = vpop.f32.mrb[0].mxu0
      %v612 = vadd.f32 0.0, %v611
      %v613 = vpop.f32.mrb[0].mxu0
      %614 = vmatprep.mubr.f32.mxu0 0.0
      %615 = vmatmul.mubr.f32.gmra.mrb[0].mxu0 %v413
      %v616 = vpop.f32.mrb[0].mxu0
      %v617 = vadd.f32 0.0, %v616
      %v618 = vpop.f32.mrb[0].mxu0
      %619 = vmatprep.mubr.f32.mxu0 0.0
      %620 = vmatmul.mubr.f32.gmra.mrb[0].mxu0 %v416
      %v621 = vpop.f32.mrb[0].mxu0
      %v622 = vadd.f32 0.0, %v621
      %v623 = vpop.f32.mrb[0].mxu0
      %624 = vmatprep.mubr.f32.mxu0 0.0
      %625 = vmatmul.mubr.f32.gmra.mrb[0].mxu0 %v419
      %v626 = vpop.f32.mrb[0].mxu0
      %v627 = vadd.f32 0.0, %v626
      %v628 = vpop.f32.mrb[0].mxu0
      %629 = vmatprep.mubr.f32.mxu0 0.0
      %630 = vmatmul.mubr.f32.gmra.mrb[0].mxu0 %v422
      %v631 = vpop.f32.mrb[0].mxu0
      %v632 = vadd.f32 0.0, %v631
      %v633 = vpop.f32.mrb[0].mxu0
      %634 = vmatprep.mubr.f32.mxu0 0.0
      %635 = vmatmul.mubr.f32.gmra.mrb[0].mxu0 %v425
      %v636 = vpop.f32.mrb[0].mxu0
      %v637 = vadd.f32 0.0, %v636
      %v638 = vpop.f32.mrb[0].mxu0
      %639 = vmatprep.mubr.f32.mxu0 0.0
      %640 = vmatmul.mubr.f32.gmra.mrb[0].mxu0 %v428
      %v641 = vpop.f32.mrb[0].mxu0
      %v642 = vadd.f32 0.0, %v641
      %v643 = vpop.f32.mrb[0].mxu0
      %644 = vmatprep.mubr.f32.mxu0 0.0
      %645 = vmatmul.mubr.f32.gmra.mrb[0].mxu0 %v431
      %v646 = vpop.f32.mrb[0].mxu0
      %v647 = vadd.f32 0.0, %v646
      %v648 = vpop.f32.mrb[0].mxu0
      %649 = vmatprep.mubr.f32.mxu0 0.0
      %650 = vmatmul.mubr.f32.gmra.mrb[0].mxu0 %v434
      %v651 = vpop.f32.mrb[0].mxu0
      %v652 = vadd.f32 0.0, %v651
      %v653 = vpop.f32.mrb[0].mxu0
      %654 = vmatprep.mubr.f32.mxu0 0.0
      %655 = vmatmul.mubr.f32.gmra.mrb[0].mxu0 %v437
      %v656 = vpop.f32.mrb[0].mxu0
      %v657 = vadd.f32 0.0, %v656
      %v658 = vpop.f32.mrb[0].mxu0
      %659 = vmatprep.mubr.f32.mxu0 0.0
      %660 = vmatmul.mubr.f32.gmra.mrb[0].mxu0 %v440
      %v661 = vpop.f32.mrb[0].mxu0
      %v662 = vadd.f32 0.0, %v661
      %v663 = vpop.f32.mrb[0].mxu0
      %664 = vmatprep.mubr.f32.mxu0 0.0
      %665 = vmatmul.mubr.f32.gmra.mrb[0].mxu0 %v443
      %v666 = vpop.f32.mrb[0].mxu0
      %v667 = vadd.f32 0.0, %v666
      %v668 = vpop.f32.mrb[0].mxu0
      %669 = vmatprep.mubr.f32.mxu0 0.0
      %670 = vmatmul.mubr.f32.gmra.mrb[0].mxu0 %v446
      %v671 = vpop.f32.mrb[0].mxu0
      %v672 = vadd.f32 0.0, %v671
      %v673 = vpop.f32.mrb[0].mxu0
      %674 = vmatprep.mubr.f32.mxu0 0.0
      %675 = vmatmul.mubr.f32.gmra.mrb[0].mxu0 %v449
      %v676 = vpop.f32.mrb[0].mxu0
      %v677 = vadd.f32 0.0, %v676
      %v678 = vpop.f32.mrb[0].mxu0
      %679 = vmatprep.mubr.f32.mxu0 0.0
      %680 = vmatmul.mubr.f32.gmra.mrb[0].mxu0 %v452
      %v681 = vpop.f32.mrb[0].mxu0
      %v682 = vadd.f32 0.0, %v681
      %v683 = vpop.f32.mrb[0].mxu0
      %684 = vmatprep.mubr.f32.mxu0 0.0
      %685 = vmatmul.mubr.f32.gmra.mrb[0].mxu0 %v455
      %v686 = vpop.f32.mrb[0].mxu0
      %v687 = vadd.f32 0.0, %v686
      %v688 = vpop.f32.mrb[0].mxu0
      %689 = vmatprep.mubr.f32.mxu0 0.0
      %690 = vmatmul.mubr.f32.gmra.mrb[0].mxu0 %v458
      %v691 = vpop.f32.mrb[0].mxu0
      %v692 = vadd.f32 0.0, %v691
      %v693 = vpop.f32.mrb[0].mxu0
      %694 = vmatprep.mubr.f32.mxu0 0.0
      %695 = vmatmul.mubr.f32.gmra.mrb[0].mxu0 %v461
      %v696 = vpop.f32.mrb[0].mxu0
      %v697 = vadd.f32 0.0, %v696
      %v698 = vpop.f32.mrb[0].mxu0
      %699 = vmatprep.mubr.f32.mxu0 0.0
      %700 = vmatmul.mubr.f32.gmra.mrb[0].mxu0 %v464
      %v701 = vpop.f32.mrb[0].mxu0
      %v702 = vadd.f32 0.0, %v701
      %v703 = vpop.f32.mrb[0].mxu0
      %704 = vmatprep.mubr.f32.mxu0 0.0
      %705 = vmatmul.mubr.f32.gmra.mrb[0].mxu0 %v467
      %v706 = vpop.f32.mrb[0].mxu0
      %v707 = vadd.f32 0.0, %v706
      %v708 = vpop.f32.mrb[0].mxu0
      %709 = vmatprep.mubr.f32.mxu0 0.0
      %710 = vmatmul.mubr.f32.gmra.mrb[0].mxu0 %v470
      %v711 = vpop.f32.mrb[0].mxu0
      %v712 = vadd.f32 0.0, %v711
      %v713 = vpop.f32.mrb[0].mxu0
      %714 = vmatprep.mubr.f32.mxu0 0.0
      %715 = vmatmul.mubr.f32.gmra.mrb[0].mxu0 %v473
      %v716 = vpop.f32.mrb[0].mxu0
      %v717 = vadd.f32 0.0, %v716
      %v718 = vpop.f32.mrb[0].mxu0
      %719 = vmatprep.mubr.f32.mxu0 0.0
      %720 = vmatmul.mubr.f32.gmra.mrb[0].mxu0 %v476
      %v721 = vpop.f32.mrb[0].mxu0
      %v722 = vadd.f32 0.0, %v721
      %v723 = vpop.f32.mrb[0].mxu0
      %724 = vmatprep.mubr.f32.mxu0 0.0
      %725 = vmatmul.mubr.f32.gmra.mrb[0].mxu0 %v479
      %v726 = vpop.f32.mrb[0].mxu0
      %v727 = vadd.f32 0.0, %v726
      %v728 = vpop.f32.mrb[0].mxu0
      %729 = vdwg.mxu0
      %v731 = vsel %vm372, %v261, 0
      %v734 = vsel %vm372, %v262, 0
      %v737 = vsel %vm372, %v263, 0
      %v740 = vsel %vm372, %v264, 0
      %v743 = vsel %vm372, %v265, 0
      %v746 = vsel %vm372, %v266, 0
      %v749 = vsel %vm372, %v267, 0
      %v752 = vsel %vm372, %v268, 0
      %v755 = vsel %vm372, %v269, 0
      %v758 = vsel %vm372, %v270, 0
      %v761 = vsel %vm372, %v271, 0
      %v764 = vsel %vm372, %v272, 0
      %v767 = vsel %vm372, %v273, 0
      %v770 = vsel %vm372, %v274, 0
      %v773 = vsel %vm372, %v275, 0
      %v776 = vsel %vm372, %v276, 0
      %v779 = vsel %vm372, %v277, 0
      %v782 = vsel %vm372, %v278, 0
      %v785 = vsel %vm372, %v279, 0
      %v788 = vsel %vm372, %v280, 0
      %v791 = vsel %vm372, %v281, 0
      %v794 = vsel %vm372, %v282, 0
      %v797 = vsel %vm372, %v283, 0
      %v800 = vsel %vm372, %v284, 0
      %v803 = vsel %vm372, %v285, 0
      %v806 = vsel %vm372, %v286, 0
      %v809 = vsel %vm372, %v287, 0
      %v812 = vsel %vm372, %v288, 0
      %v815 = vsel %vm372, %v289, 0
      %v818 = vsel %vm372, %v290, 0
      %v821 = vsel %vm372, %v291, 0
      %v824 = vsel %vm372, %v292, 0
      %v827 = vsel %vm372, %v293, 0
      %v830 = vsel %vm372, %v294, 0
      %v833 = vsel %vm372, %v295, 0
      %v836 = vsel %vm372, %v296, 0
      %v839 = vsel %vm481, %v297, 0
      %841 = vmatprep.subr.mxu0 0.0
      %842 = vmatpush1.msra.mxu0 %v839
      %843 = vmatprep.subr.mxu0 0.0
      %844 = vmatpush1.msra.mxu0 0.0
      %845 = vmatprep.subr.mxu0 0.0
      %846 = vmatpush1.msra.mxu0 0.0
      %847 = vmatprep.subr.mxu0 0.0
      %848 = vmatpush1.msra.mxu0 0.0
      %849 = vmatprep.subr.mxu0 0.0
      %850 = vmatpush1.msra.mxu0 0.0
      %851 = vmatprep.subr.mxu0 0.0
      %852 = vmatpush1.msra.mxu0 0.0
      %853 = vmatprep.subr.mxu0 0.0
      %854 = vmatpush1.msra.mxu0 0.0
      %855 = vmatprep.subr.mxu0 0.0
      %856 = vmatpush1.msra.mxu0 0.0
      %857 = vmatprep.subr.mxu0 0.0
      %858 = vmatpush1.msra.mxu0 0.0
      %859 = vmatprep.subr.mxu0 0.0
      %860 = vmatpush1.msra.mxu0 0.0
      %861 = vmatprep.subr.mxu0 0.0
      %862 = vmatpush1.msra.mxu0 0.0
      %863 = vmatprep.subr.mxu0 0.0
      %864 = vmatpush1.msra.mxu0 0.0
      %865 = vmatprep.subr.mxu0 0.0
      %866 = vmatpush1.msra.mxu0 0.0
      %867 = vmatprep.subr.mxu0 0.0
      %868 = vmatpush1.msra.mxu0 0.0
      %869 = vmatprep.subr.mxu0 0.0
      %870 = vmatpush1.msra.mxu0 0.0
      %871 = vmatprep.subr.mxu0 0.0
      %872 = vmatpush1.msra.mxu0 0.0
      %873 = vmatprep.subr.mxu0 0.0
      %874 = vmatpush1.msra.mxu0 0.0
      %875 = vmatprep.subr.mxu0 0.0
      %876 = vmatpush1.msra.mxu0 0.0
      %877 = vmatprep.subr.mxu0 0.0
      %878 = vmatpush1.msra.mxu0 0.0
      %879 = vmatprep.subr.mxu0 0.0
      %880 = vmatpush1.msra.mxu0 0.0
      %881 = vmatprep.subr.mxu0 0.0
      %882 = vmatpush1.msra.mxu0 0.0
      %883 = vmatprep.subr.mxu0 0.0
      %884 = vmatpush1.msra.mxu0 0.0
      %885 = vmatprep.subr.mxu0 0.0
      %886 = vmatpush1.msra.mxu0 0.0
      %887 = vmatprep.subr.mxu0 0.0
      %888 = vmatpush1.msra.mxu0 0.0
      %889 = vmatprep.subr.mxu0 0.0
      %890 = vmatpush1.msra.mxu0 0.0
      %891 = vmatprep.subr.mxu0 0.0
      %892 = vmatpush1.msra.mxu0 0.0
      %893 = vmatprep.subr.mxu0 0.0
      %894 = vmatpush1.msra.mxu0 0.0
      %895 = vmatprep.subr.mxu0 0.0
      %896 = vmatpush1.msra.mxu0 0.0
      %897 = vmatprep.subr.mxu0 0.0
      %898 = vmatpush1.msra.mxu0 0.0
      %899 = vmatprep.subr.mxu0 0.0
      %900 = vmatpush1.msra.mxu0 0.0
      %901 = vmatprep.subr.mxu0 0.0
      %902 = vmatpush1.msra.mxu0 0.0
      %903 = vmatprep.subr.mxu0 0.0
      %904 = vmatpush1.msra.mxu0 0.0
      %905 = vmatprep.mubr.f32.mxu0 0.0
      %906 = vmatmul.mubr.f32.gmra.mrb[0].mxu0 %v731
      %v907 = vpop.f32.mrb[0].mxu0
      %v908 = vadd.f32 %v552, %v907
      %v909 = vpop.f32.mrb[0].mxu0
      %910 = vmatprep.mubr.f32.mxu0 0.0
      %911 = vmatmul.mubr.f32.gmra.mrb[0].mxu0 %v734
      %v912 = vpop.f32.mrb[0].mxu0
      %v913 = vadd.f32 %v557, %v912
      %v914 = vpop.f32.mrb[0].mxu0
      %915 = vmatprep.mubr.f32.mxu0 0.0
      %916 = vmatmul.mubr.f32.gmra.mrb[0].mxu0 %v737
      %v917 = vpop.f32.mrb[0].mxu0
      %v918 = vadd.f32 %v562, %v917
      %v919 = vpop.f32.mrb[0].mxu0
      %920 = vmatprep.mubr.f32.mxu0 0.0
      %921 = vmatmul.mubr.f32.gmra.mrb[0].mxu0 %v740
      %v922 = vpop.f32.mrb[0].mxu0
      %v923 = vadd.f32 %v567, %v922
      %v924 = vpop.f32.mrb[0].mxu0
      %925 = vmatprep.mubr.f32.mxu0 0.0
      %926 = vmatmul.mubr.f32.gmra.mrb[0].mxu0 %v743
      %v927 = vpop.f32.mrb[0].mxu0
      %v928 = vadd.f32 %v572, %v927
      %v929 = vpop.f32.mrb[0].mxu0
      %930 = vmatprep.mubr.f32.mxu0 0.0
      %931 = vmatmul.mubr.f32.gmra.mrb[0].mxu0 %v746
      %v932 = vpop.f32.mrb[0].mxu0
      %v933 = vadd.f32 %v577, %v932
      %v934 = vpop.f32.mrb[0].mxu0
      %935 = vmatprep.mubr.f32.mxu0 0.0
      %936 = vmatmul.mubr.f32.gmra.mrb[0].mxu0 %v749
      %v937 = vpop.f32.mrb[0].mxu0
      %v938 = vadd.f32 %v582, %v937
      %v939 = vpop.f32.mrb[0].mxu0
      %940 = vmatprep.mubr.f32.mxu0 0.0
      %941 = vmatmul.mubr.f32.gmra.mrb[0].mxu0 %v752
      %v942 = vpop.f32.mrb[0].mxu0
      %v943 = vadd.f32 %v587, %v942
      %v944 = vpop.f32.mrb[0].mxu0
      %945 = vmatprep.mubr.f32.mxu0 0.0
      %946 = vmatmul.mubr.f32.gmra.mrb[0].mxu0 %v755
      %v947 = vpop.f32.mrb[0].mxu0
      %v948 = vadd.f32 %v592, %v947
      %v949 = vpop.f32.mrb[0].mxu0
      %950 = vmatprep.mubr.f32.mxu0 0.0
      %951 = vmatmul.mubr.f32.gmra.mrb[0].mxu0 %v758
      %v952 = vpop.f32.mrb[0].mxu0
      %v953 = vadd.f32 %v597, %v952
      %v954 = vpop.f32.mrb[0].mxu0
      %955 = vmatprep.mubr.f32.mxu0 0.0
      %956 = vmatmul.mubr.f32.gmra.mrb[0].mxu0 %v761
      %v957 = vpop.f32.mrb[0].mxu0
      %v958 = vadd.f32 %v602, %v957
      %v959 = vpop.f32.mrb[0].mxu0
      %960 = vmatprep.mubr.f32.mxu0 0.0
      %961 = vmatmul.mubr.f32.gmra.mrb[0].mxu0 %v764
      %v962 = vpop.f32.mrb[0].mxu0
      %v963 = vadd.f32 %v607, %v962
      %v964 = vpop.f32.mrb[0].mxu0
      %965 = vmatprep.mubr.f32.mxu0 0.0
      %966 = vmatmul.mubr.f32.gmra.mrb[0].mxu0 %v767
      %v967 = vpop.f32.mrb[0].mxu0
      %v968 = vadd.f32 %v612, %v967
      %v969 = vpop.f32.mrb[0].mxu0
      %970 = vmatprep.mubr.f32.mxu0 0.0
      %971 = vmatmul.mubr.f32.gmra.mrb[0].mxu0 %v770
      %v972 = vpop.f32.mrb[0].mxu0
      %v973 = vadd.f32 %v617, %v972
      %v974 = vpop.f32.mrb[0].mxu0
      %975 = vmatprep.mubr.f32.mxu0 0.0
      %976 = vmatmul.mubr.f32.gmra.mrb[0].mxu0 %v773
      %v977 = vpop.f32.mrb[0].mxu0
      %v978 = vadd.f32 %v622, %v977
      %v979 = vpop.f32.mrb[0].mxu0
      %980 = vmatprep.mubr.f32.mxu0 0.0
      %981 = vmatmul.mubr.f32.gmra.mrb[0].mxu0 %v776
      %v982 = vpop.f32.mrb[0].mxu0
      %v983 = vadd.f32 %v627, %v982
      %v984 = vpop.f32.mrb[0].mxu0
      %985 = vmatprep.mubr.f32.mxu0 0.0
      %986 = vmatmul.mubr.f32.gmra.mrb[0].mxu0 %v779
      %v987 = vpop.f32.mrb[0].mxu0
      %v988 = vadd.f32 %v632, %v987
      %v989 = vpop.f32.mrb[0].mxu0
      %990 = vmatprep.mubr.f32.mxu0 0.0
      %991 = vmatmul.mubr.f32.gmra.mrb[0].mxu0 %v782
      %v992 = vpop.f32.mrb[0].mxu0
      %v993 = vadd.f32 %v637, %v992
      %v994 = vpop.f32.mrb[0].mxu0
      %995 = vmatprep.mubr.f32.mxu0 0.0
      %996 = vmatmul.mubr.f32.gmra.mrb[0].mxu0 %v785
      %v997 = vpop.f32.mrb[0].mxu0
      %v998 = vadd.f32 %v642, %v997
      %v999 = vpop.f32.mrb[0].mxu0
      %1000 = vmatprep.mubr.f32.mxu0 0.0
      %1001 = vmatmul.mubr.f32.gmra.mrb[0].mxu0 %v788
      %v1002 = vpop.f32.mrb[0].mxu0
      %v1003 = vadd.f32 %v647, %v1002
      %v1004 = vpop.f32.mrb[0].mxu0
      %1005 = vmatprep.mubr.f32.mxu0 0.0
      %1006 = vmatmul.mubr.f32.gmra.mrb[0].mxu0 %v791
      %v1007 = vpop.f32.mrb[0].mxu0
      %v1008 = vadd.f32 %v652, %v1007
      %v1009 = vpop.f32.mrb[0].mxu0
      %1010 = vmatprep.mubr.f32.mxu0 0.0
      %1011 = vmatmul.mubr.f32.gmra.mrb[0].mxu0 %v794
      %v1012 = vpop.f32.mrb[0].mxu0
      %v1013 = vadd.f32 %v657, %v1012
      %v1014 = vpop.f32.mrb[0].mxu0
      %1015 = vmatprep.mubr.f32.mxu0 0.0
      %1016 = vmatmul.mubr.f32.gmra.mrb[0].mxu0 %v797
      %v1017 = vpop.f32.mrb[0].mxu0
      %v1018 = vadd.f32 %v662, %v1017
      %v1019 = vpop.f32.mrb[0].mxu0
      %1020 = vmatprep.mubr.f32.mxu0 0.0
      %1021 = vmatmul.mubr.f32.gmra.mrb[0].mxu0 %v800
      %v1022 = vpop.f32.mrb[0].mxu0
      %v1023 = vadd.f32 %v667, %v1022
      %v1024 = vpop.f32.mrb[0].mxu0
      %1025 = vmatprep.mubr.f32.mxu0 0.0
      %1026 = vmatmul.mubr.f32.gmra.mrb[0].mxu0 %v803
      %v1027 = vpop.f32.mrb[0].mxu0
      %v1028 = vadd.f32 %v672, %v1027
      %v1029 = vpop.f32.mrb[0].mxu0
      %1030 = vmatprep.mubr.f32.mxu0 0.0
      %1031 = vmatmul.mubr.f32.gmra.mrb[0].mxu0 %v806
      %v1032 = vpop.f32.mrb[0].mxu0
      %v1033 = vadd.f32 %v677, %v1032
      %v1034 = vpop.f32.mrb[0].mxu0
      %1035 = vmatprep.mubr.f32.mxu0 0.0
      %1036 = vmatmul.mubr.f32.gmra.mrb[0].mxu0 %v809
      %v1037 = vpop.f32.mrb[0].mxu0
      %v1038 = vadd.f32 %v682, %v1037
      %v1039 = vpop.f32.mrb[0].mxu0
      %1040 = vmatprep.mubr.f32.mxu0 0.0
      %1041 = vmatmul.mubr.f32.gmra.mrb[0].mxu0 %v812
      %v1042 = vpop.f32.mrb[0].mxu0
      %v1043 = vadd.f32 %v687, %v1042
      %v1044 = vpop.f32.mrb[0].mxu0
      %1045 = vmatprep.mubr.f32.mxu0 0.0
      %1046 = vmatmul.mubr.f32.gmra.mrb[0].mxu0 %v815
      %v1047 = vpop.f32.mrb[0].mxu0
      %v1048 = vadd.f32 %v692, %v1047
      %v1049 = vpop.f32.mrb[0].mxu0
      %1050 = vmatprep.mubr.f32.mxu0 0.0
      %1051 = vmatmul.mubr.f32.gmra.mrb[0].mxu0 %v818
      %v1052 = vpop.f32.mrb[0].mxu0
      %v1053 = vadd.f32 %v697, %v1052
      %v1054 = vpop.f32.mrb[0].mxu0
      %1055 = vmatprep.mubr.f32.mxu0 0.0
      %1056 = vmatmul.mubr.f32.gmra.mrb[0].mxu0 %v821
      %v1057 = vpop.f32.mrb[0].mxu0
      %v1058 = vadd.f32 %v702, %v1057
      %v1059 = vpop.f32.mrb[0].mxu0
      %1060 = vmatprep.mubr.f32.mxu0 0.0
      %1061 = vmatmul.mubr.f32.gmra.mrb[0].mxu0 %v824
      %v1062 = vpop.f32.mrb[0].mxu0
      %v1063 = vadd.f32 %v707, %v1062
      %v1064 = vpop.f32.mrb[0].mxu0
      %1065 = vmatprep.mubr.f32.mxu0 0.0
      %1066 = vmatmul.mubr.f32.gmra.mrb[0].mxu0 %v827
      %v1067 = vpop.f32.mrb[0].mxu0
      %v1068 = vadd.f32 %v712, %v1067
      %v1069 = vpop.f32.mrb[0].mxu0
      %1070 = vmatprep.mubr.f32.mxu0 0.0
      %1071 = vmatmul.mubr.f32.gmra.mrb[0].mxu0 %v830
      %v1072 = vpop.f32.mrb[0].mxu0
      %v1073 = vadd.f32 %v717, %v1072
      %v1074 = vpop.f32.mrb[0].mxu0
      %1075 = vmatprep.mubr.f32.mxu0 0.0
      %1076 = vmatmul.mubr.f32.gmra.mrb[0].mxu0 %v833
      %v1077 = vpop.f32.mrb[0].mxu0
      %v1078 = vadd.f32 %v722, %v1077
      %v1079 = vpop.f32.mrb[0].mxu0
      %1080 = vmatprep.mubr.f32.mxu0 0.0
      %1081 = vmatmul.mubr.f32.gmra.mrb[0].mxu0 %v836
      %v1082 = vpop.f32.mrb[0].mxu0
      %v1083 = vadd.f32 %v727, %v1082
      %v1084 = vpop.f32.mrb[0].mxu0
      %1085 = vdwg.mxu0
      %v1086 = vld [vmem:[%s219 + $0x2] sm:$0xff]
      %v1087 = vld [vmem:[%s219 + $0xa] sm:$0xff]
      %v1088 = vld [vmem:[%s219 + $0x12] sm:$0xff]
      %v1089 = vld [vmem:[%s219 + $0x1a] sm:$0xff]
      %v1090 = vld [vmem:[%s219 + $0x22] sm:$0xff]
      %v1091 = vld [vmem:[%s219 + $0x2a] sm:$0xff]
      %v1092 = vld [vmem:[%s219 + $0x32] sm:$0xff]
      %v1093 = vld [vmem:[%s219 + $0x3a] sm:$0xff]
      %v1094 = vld [vmem:[%s219 + $0x42] sm:$0xff]
      %v1095 = vld [vmem:[%s219 + $0x4a] sm:$0xff]
      %v1096 = vld [vmem:[%s219 + $0x52] sm:$0xff]
      %v1097 = vld [vmem:[%s219 + $0x5a] sm:$0xff]
      %v1098 = vld [vmem:[%s219 + $0x62] sm:$0xff]
      %v1099 = vld [vmem:[%s219 + $0x6a] sm:$0xff]
      %v1100 = vld [vmem:[%s219 + $0x72] sm:$0xff]
      %v1101 = vld [vmem:[%s219 + $0x7a] sm:$0xff]
      %v1102 = vld [vmem:[%s219 + $0x82] sm:$0xff]
      %v1103 = vld [vmem:[%s219 + $0x8a] sm:$0xff]
      %v1104 = vld [vmem:[%s219 + $0x92] sm:$0xff]
      %v1105 = vld [vmem:[%s219 + $0x9a] sm:$0xff]
      %v1106 = vld [vmem:[%s219 + $0xa2] sm:$0xff]
      %v1107 = vld [vmem:[%s219 + $0xaa] sm:$0xff]
      %v1108 = vld [vmem:[%s219 + $0xb2] sm:$0xff]
      %v1109 = vld [vmem:[%s219 + $0xba] sm:$0xff]
      %v1110 = vld [vmem:[%s219 + $0xc2] sm:$0xff]
      %v1111 = vld [vmem:[%s219 + $0xca] sm:$0xff]
      %v1112 = vld [vmem:[%s219 + $0xd2] sm:$0xff]
      %v1113 = vld [vmem:[%s219 + $0xda] sm:$0xff]
      %v1114 = vld [vmem:[%s219 + $0xe2] sm:$0xff]
      %v1115 = vld [vmem:[%s219 + $0xea] sm:$0xff]
      %v1116 = vld [vmem:[%s219 + $0xf2] sm:$0xff]
      %v1117 = vld [vmem:[%s219 + $0xfa] sm:$0xff]
      %v1118 = vld [vmem:[%s219 + $0x102] sm:$0xff]
      %v1119 = vld [vmem:[%s219 + $0x10a] sm:$0xff]
      %v1120 = vld [vmem:[%s219 + $0x112] sm:$0xff]
      %v1121 = vld [vmem:[%s219 + $0x11a] sm:$0xff]
      %v1122 = vmax.f32 %v1086, 0.0
      %v1123 = vmax.f32 %v1087, 0.0
      %v1124 = vmax.f32 %v1088, 0.0
      %v1125 = vmax.f32 %v1089, 0.0
      %v1126 = vmax.f32 %v1090, 0.0
      %v1127 = vmax.f32 %v1091, 0.0
      %v1128 = vmax.f32 %v1092, 0.0
      %v1129 = vmax.f32 %v1093, 0.0
      %v1130 = vmax.f32 %v1094, 0.0
      %v1131 = vmax.f32 %v1095, 0.0
      %v1132 = vmax.f32 %v1096, 0.0
      %v1133 = vmax.f32 %v1097, 0.0
      %v1134 = vmax.f32 %v1098, 0.0
      %v1135 = vmax.f32 %v1099, 0.0
      %v1136 = vmax.f32 %v1100, 0.0
      %v1137 = vmax.f32 %v1101, 0.0
      %v1138 = vmax.f32 %v1102, 0.0
      %v1139 = vmax.f32 %v1103, 0.0
      %v1140 = vmax.f32 %v1104, 0.0
      %v1141 = vmax.f32 %v1105, 0.0
      %v1142 = vmax.f32 %v1106, 0.0
      %v1143 = vmax.f32 %v1107, 0.0
      %v1144 = vmax.f32 %v1108, 0.0
      %v1145 = vmax.f32 %v1109, 0.0
      %v1146 = vmax.f32 %v1110, 0.0
      %v1147 = vmax.f32 %v1111, 0.0
      %v1148 = vmax.f32 %v1112, 0.0
      %v1149 = vmax.f32 %v1113, 0.0
      %v1150 = vmax.f32 %v1114, 0.0
      %v1151 = vmax.f32 %v1115, 0.0
      %v1152 = vmax.f32 %v1116, 0.0
      %v1153 = vmax.f32 %v1117, 0.0
      %v1154 = vmax.f32 %v1118, 0.0
      %v1155 = vmax.f32 %v1119, 0.0
      %v1156 = vmax.f32 %v1120, 0.0
      %v1157 = vmax.f32 %v1121, 0.0
      %s1158 = scalar_lea.vmem %s1, 8
      %v1159 = vld [vmem:[%s1158] sm:$0xf]
      %v1161 = vsel %vm372, %v1122, 0
      %v1164 = vsel %vm372, %v1123, 0
      %v1167 = vsel %vm372, %v1124, 0
      %v1170 = vsel %vm372, %v1125, 0
      %v1173 = vsel %vm372, %v1126, 0
      %v1176 = vsel %vm372, %v1127, 0
      %v1179 = vsel %vm372, %v1128, 0
      %v1182 = vsel %vm372, %v1129, 0
      %v1185 = vsel %vm372, %v1130, 0
      %v1188 = vsel %vm372, %v1131, 0
      %v1191 = vsel %vm372, %v1132, 0
      %v1194 = vsel %vm372, %v1133, 0
      %v1197 = vsel %vm372, %v1134, 0
      %v1200 = vsel %vm372, %v1135, 0
      %v1203 = vsel %vm372, %v1136, 0
      %v1206 = vsel %vm372, %v1137, 0
      %v1209 = vsel %vm372, %v1138, 0
      %v1212 = vsel %vm372, %v1139, 0
      %v1215 = vsel %vm372, %v1140, 0
      %v1218 = vsel %vm372, %v1141, 0
      %v1221 = vsel %vm372, %v1142, 0
      %v1224 = vsel %vm372, %v1143, 0
      %v1227 = vsel %vm372, %v1144, 0
      %v1230 = vsel %vm372, %v1145, 0
      %v1233 = vsel %vm372, %v1146, 0
      %v1236 = vsel %vm372, %v1147, 0
      %v1239 = vsel %vm372, %v1148, 0
      %v1242 = vsel %vm372, %v1149, 0
      %v1245 = vsel %vm372, %v1150, 0
      %v1248 = vsel %vm372, %v1151, 0
      %v1251 = vsel %vm372, %v1152, 0
      %v1254 = vsel %vm372, %v1153, 0
      %v1257 = vsel %vm372, %v1154, 0
      %v1260 = vsel %vm372, %v1155, 0
      %v1263 = vsel %vm372, %v1156, 0
      %v1266 = vsel %vm372, %v1157, 0
      %v1269 = vsel %vm481, %v1159, 0
      %1271 = vmatprep.subr.mxu0 0.0
      %1272 = vmatpush1.msra.mxu0 %v1269
      %1273 = vmatprep.subr.mxu0 0.0
      %1274 = vmatpush1.msra.mxu0 0.0
      %1275 = vmatprep.subr.mxu0 0.0
      %1276 = vmatpush1.msra.mxu0 0.0
      %1277 = vmatprep.subr.mxu0 0.0
      %1278 = vmatpush1.msra.mxu0 0.0
      %1279 = vmatprep.subr.mxu0 0.0
      %1280 = vmatpush1.msra.mxu0 0.0
      %1281 = vmatprep.subr.mxu0 0.0
      %1282 = vmatpush1.msra.mxu0 0.0
      %1283 = vmatprep.subr.mxu0 0.0
      %1284 = vmatpush1.msra.mxu0 0.0
      %1285 = vmatprep.subr.mxu0 0.0
      %1286 = vmatpush1.msra.mxu0 0.0
      %1287 = vmatprep.subr.mxu0 0.0
      %1288 = vmatpush1.msra.mxu0 0.0
      %1289 = vmatprep.subr.mxu0 0.0
      %1290 = vmatpush1.msra.mxu0 0.0
      %1291 = vmatprep.subr.mxu0 0.0
      %1292 = vmatpush1.msra.mxu0 0.0
      %1293 = vmatprep.subr.mxu0 0.0
      %1294 = vmatpush1.msra.mxu0 0.0
      %1295 = vmatprep.subr.mxu0 0.0
      %1296 = vmatpush1.msra.mxu0 0.0
      %1297 = vmatprep.subr.mxu0 0.0
      %1298 = vmatpush1.msra.mxu0 0.0
      %1299 = vmatprep.subr.mxu0 0.0
      %1300 = vmatpush1.msra.mxu0 0.0
      %1301 = vmatprep.subr.mxu0 0.0
      %1302 = vmatpush1.msra.mxu0 0.0
      %1303 = vmatprep.subr.mxu0 0.0
      %1304 = vmatpush1.msra.mxu0 0.0
      %1305 = vmatprep.subr.mxu0 0.0
      %1306 = vmatpush1.msra.mxu0 0.0
      %1307 = vmatprep.subr.mxu0 0.0
      %1308 = vmatpush1.msra.mxu0 0.0
      %1309 = vmatprep.subr.mxu0 0.0
      %1310 = vmatpush1.msra.mxu0 0.0
      %1311 = vmatprep.subr.mxu0 0.0
      %1312 = vmatpush1.msra.mxu0 0.0
      %1313 = vmatprep.subr.mxu0 0.0
      %1314 = vmatpush1.msra.mxu0 0.0
      %1315 = vmatprep.subr.mxu0 0.0
      %1316 = vmatpush1.msra.mxu0 0.0
      %1317 = vmatprep.subr.mxu0 0.0
      %1318 = vmatpush1.msra.mxu0 0.0
      %1319 = vmatprep.subr.mxu0 0.0
      %1320 = vmatpush1.msra.mxu0 0.0
      %1321 = vmatprep.subr.mxu0 0.0
      %1322 = vmatpush1.msra.mxu0 0.0
      %1323 = vmatprep.subr.mxu0 0.0
      %1324 = vmatpush1.msra.mxu0 0.0
      %1325 = vmatprep.subr.mxu0 0.0
      %1326 = vmatpush1.msra.mxu0 0.0
      %1327 = vmatprep.subr.mxu0 0.0
      %1328 = vmatpush1.msra.mxu0 0.0
      %1329 = vmatprep.subr.mxu0 0.0
      %1330 = vmatpush1.msra.mxu0 0.0
      %1331 = vmatprep.subr.mxu0 0.0
      %1332 = vmatpush1.msra.mxu0 0.0
      %1333 = vmatprep.subr.mxu0 0.0
      %1334 = vmatpush1.msra.mxu0 0.0
      %1335 = vmatprep.mubr.f32.mxu0 0.0
      %1336 = vmatmul.mubr.f32.gmra.mrb[0].mxu0 %v1161
      %v1337 = vpop.f32.mrb[0].mxu0
      %v1338 = vadd.f32 0.0, %v1337
      %v1339 = vpop.f32.mrb[0].mxu0
      %1340 = vmatprep.mubr.f32.mxu0 0.0
      %1341 = vmatmul.mubr.f32.gmra.mrb[0].mxu0 %v1164
      %v1342 = vpop.f32.mrb[0].mxu0
      %v1343 = vadd.f32 0.0, %v1342
      %v1344 = vpop.f32.mrb[0].mxu0
      %1345 = vmatprep.mubr.f32.mxu0 0.0
      %1346 = vmatmul.mubr.f32.gmra.mrb[0].mxu0 %v1167
      %v1347 = vpop.f32.mrb[0].mxu0
      %v1348 = vadd.f32 0.0, %v1347
      %v1349 = vpop.f32.mrb[0].mxu0
      %1350 = vmatprep.mubr.f32.mxu0 0.0
      %1351 = vmatmul.mubr.f32.gmra.mrb[0].mxu0 %v1170
      %v1352 = vpop.f32.mrb[0].mxu0
      %v1353 = vadd.f32 0.0, %v1352
      %v1354 = vpop.f32.mrb[0].mxu0
      %1355 = vmatprep.mubr.f32.mxu0 0.0
      %1356 = vmatmul.mubr.f32.gmra.mrb[0].mxu0 %v1173
      %v1357 = vpop.f32.mrb[0].mxu0
      %v1358 = vadd.f32 0.0, %v1357
      %v1359 = vpop.f32.mrb[0].mxu0
      %1360 = vmatprep.mubr.f32.mxu0 0.0
      %1361 = vmatmul.mubr.f32.gmra.mrb[0].mxu0 %v1176
      %v1362 = vpop.f32.mrb[0].mxu0
      %v1363 = vadd.f32 0.0, %v1362
      %v1364 = vpop.f32.mrb[0].mxu0
      %1365 = vmatprep.mubr.f32.mxu0 0.0
      %1366 = vmatmul.mubr.f32.gmra.mrb[0].mxu0 %v1179
      %v1367 = vpop.f32.mrb[0].mxu0
      %v1368 = vadd.f32 0.0, %v1367
      %v1369 = vpop.f32.mrb[0].mxu0
      %1370 = vmatprep.mubr.f32.mxu0 0.0
      %1371 = vmatmul.mubr.f32.gmra.mrb[0].mxu0 %v1182
      %v1372 = vpop.f32.mrb[0].mxu0
      %v1373 = vadd.f32 0.0, %v1372
      %v1374 = vpop.f32.mrb[0].mxu0
      %1375 = vmatprep.mubr.f32.mxu0 0.0
      %1376 = vmatmul.mubr.f32.gmra.mrb[0].mxu0 %v1185
      %v1377 = vpop.f32.mrb[0].mxu0
      %v1378 = vadd.f32 0.0, %v1377
      %v1379 = vpop.f32.mrb[0].mxu0
      %1380 = vmatprep.mubr.f32.mxu0 0.0
      %1381 = vmatmul.mubr.f32.gmra.mrb[0].mxu0 %v1188
      %v1382 = vpop.f32.mrb[0].mxu0
      %v1383 = vadd.f32 0.0, %v1382
      %v1384 = vpop.f32.mrb[0].mxu0
      %1385 = vmatprep.mubr.f32.mxu0 0.0
      %1386 = vmatmul.mubr.f32.gmra.mrb[0].mxu0 %v1191
      %v1387 = vpop.f32.mrb[0].mxu0
      %v1388 = vadd.f32 0.0, %v1387
      %v1389 = vpop.f32.mrb[0].mxu0
      %1390 = vmatprep.mubr.f32.mxu0 0.0
      %1391 = vmatmul.mubr.f32.gmra.mrb[0].mxu0 %v1194
      %v1392 = vpop.f32.mrb[0].mxu0
      %v1393 = vadd.f32 0.0, %v1392
      %v1394 = vpop.f32.mrb[0].mxu0
      %1395 = vmatprep.mubr.f32.mxu0 0.0
      %1396 = vmatmul.mubr.f32.gmra.mrb[0].mxu0 %v1197
      %v1397 = vpop.f32.mrb[0].mxu0
      %v1398 = vadd.f32 0.0, %v1397
      %v1399 = vpop.f32.mrb[0].mxu0
      %1400 = vmatprep.mubr.f32.mxu0 0.0
      %1401 = vmatmul.mubr.f32.gmra.mrb[0].mxu0 %v1200
      %v1402 = vpop.f32.mrb[0].mxu0
      %v1403 = vadd.f32 0.0, %v1402
      %v1404 = vpop.f32.mrb[0].mxu0
      %1405 = vmatprep.mubr.f32.mxu0 0.0
      %1406 = vmatmul.mubr.f32.gmra.mrb[0].mxu0 %v1203
      %v1407 = vpop.f32.mrb[0].mxu0
      %v1408 = vadd.f32 0.0, %v1407
      %v1409 = vpop.f32.mrb[0].mxu0
      %1410 = vmatprep.mubr.f32.mxu0 0.0
      %1411 = vmatmul.mubr.f32.gmra.mrb[0].mxu0 %v1206
      %v1412 = vpop.f32.mrb[0].mxu0
      %v1413 = vadd.f32 0.0, %v1412
      %v1414 = vpop.f32.mrb[0].mxu0
      %1415 = vmatprep.mubr.f32.mxu0 0.0
      %1416 = vmatmul.mubr.f32.gmra.mrb[0].mxu0 %v1209
      %v1417 = vpop.f32.mrb[0].mxu0
      %v1418 = vadd.f32 0.0, %v1417
      %v1419 = vpop.f32.mrb[0].mxu0
      %1420 = vmatprep.mubr.f32.mxu0 0.0
      %1421 = vmatmul.mubr.f32.gmra.mrb[0].mxu0 %v1212
      %v1422 = vpop.f32.mrb[0].mxu0
      %v1423 = vadd.f32 0.0, %v1422
      %v1424 = vpop.f32.mrb[0].mxu0
      %1425 = vmatprep.mubr.f32.mxu0 0.0
      %1426 = vmatmul.mubr.f32.gmra.mrb[0].mxu0 %v1215
      %v1427 = vpop.f32.mrb[0].mxu0
      %v1428 = vadd.f32 0.0, %v1427
      %v1429 = vpop.f32.mrb[0].mxu0
      %1430 = vmatprep.mubr.f32.mxu0 0.0
      %1431 = vmatmul.mubr.f32.gmra.mrb[0].mxu0 %v1218
      %v1432 = vpop.f32.mrb[0].mxu0
      %v1433 = vadd.f32 0.0, %v1432
      %v1434 = vpop.f32.mrb[0].mxu0
      %1435 = vmatprep.mubr.f32.mxu0 0.0
      %1436 = vmatmul.mubr.f32.gmra.mrb[0].mxu0 %v1221
      %v1437 = vpop.f32.mrb[0].mxu0
      %v1438 = vadd.f32 0.0, %v1437
      %v1439 = vpop.f32.mrb[0].mxu0
      %1440 = vmatprep.mubr.f32.mxu0 0.0
      %1441 = vmatmul.mubr.f32.gmra.mrb[0].mxu0 %v1224
      %v1442 = vpop.f32.mrb[0].mxu0
      %v1443 = vadd.f32 0.0, %v1442
      %v1444 = vpop.f32.mrb[0].mxu0
      %1445 = vmatprep.mubr.f32.mxu0 0.0
      %1446 = vmatmul.mubr.f32.gmra.mrb[0].mxu0 %v1227
      %v1447 = vpop.f32.mrb[0].mxu0
      %v1448 = vadd.f32 0.0, %v1447
      %v1449 = vpop.f32.mrb[0].mxu0
      %1450 = vmatprep.mubr.f32.mxu0 0.0
      %1451 = vmatmul.mubr.f32.gmra.mrb[0].mxu0 %v1230
      %v1452 = vpop.f32.mrb[0].mxu0
      %v1453 = vadd.f32 0.0, %v1452
      %v1454 = vpop.f32.mrb[0].mxu0
      %1455 = vmatprep.mubr.f32.mxu0 0.0
      %1456 = vmatmul.mubr.f32.gmra.mrb[0].mxu0 %v1233
      %v1457 = vpop.f32.mrb[0].mxu0
      %v1458 = vadd.f32 0.0, %v1457
      %v1459 = vpop.f32.mrb[0].mxu0
      %1460 = vmatprep.mubr.f32.mxu0 0.0
      %1461 = vmatmul.mubr.f32.gmra.mrb[0].mxu0 %v1236
      %v1462 = vpop.f32.mrb[0].mxu0
      %v1463 = vadd.f32 0.0, %v1462
      %v1464 = vpop.f32.mrb[0].mxu0
      %1465 = vmatprep.mubr.f32.mxu0 0.0
      %1466 = vmatmul.mubr.f32.gmra.mrb[0].mxu0 %v1239
      %v1467 = vpop.f32.mrb[0].mxu0
      %v1468 = vadd.f32 0.0, %v1467
      %v1469 = vpop.f32.mrb[0].mxu0
      %1470 = vmatprep.mubr.f32.mxu0 0.0
      %1471 = vmatmul.mubr.f32.gmra.mrb[0].mxu0 %v1242
      %v1472 = vpop.f32.mrb[0].mxu0
      %v1473 = vadd.f32 0.0, %v1472
      %v1474 = vpop.f32.mrb[0].mxu0
      %1475 = vmatprep.mubr.f32.mxu0 0.0
      %1476 = vmatmul.mubr.f32.gmra.mrb[0].mxu0 %v1245
      %v1477 = vpop.f32.mrb[0].mxu0
      %v1478 = vadd.f32 0.0, %v1477
      %v1479 = vpop.f32.mrb[0].mxu0
      %1480 = vmatprep.mubr.f32.mxu0 0.0
      %1481 = vmatmul.mubr.f32.gmra.mrb[0].mxu0 %v1248
      %v1482 = vpop.f32.mrb[0].mxu0
      %v1483 = vadd.f32 0.0, %v1482
      %v1484 = vpop.f32.mrb[0].mxu0
      %1485 = vmatprep.mubr.f32.mxu0 0.0
      %1486 = vmatmul.mubr.f32.gmra.mrb[0].mxu0 %v1251
      %v1487 = vpop.f32.mrb[0].mxu0
      %v1488 = vadd.f32 0.0, %v1487
      %v1489 = vpop.f32.mrb[0].mxu0
      %1490 = vmatprep.mubr.f32.mxu0 0.0
      %1491 = vmatmul.mubr.f32.gmra.mrb[0].mxu0 %v1254
      %v1492 = vpop.f32.mrb[0].mxu0
      %v1493 = vadd.f32 0.0, %v1492
      %v1494 = vpop.f32.mrb[0].mxu0
      %1495 = vmatprep.mubr.f32.mxu0 0.0
      %1496 = vmatmul.mubr.f32.gmra.mrb[0].mxu0 %v1257
      %v1497 = vpop.f32.mrb[0].mxu0
      %v1498 = vadd.f32 0.0, %v1497
      %v1499 = vpop.f32.mrb[0].mxu0
      %1500 = vmatprep.mubr.f32.mxu0 0.0
      %1501 = vmatmul.mubr.f32.gmra.mrb[0].mxu0 %v1260
      %v1502 = vpop.f32.mrb[0].mxu0
      %v1503 = vadd.f32 0.0, %v1502
      %v1504 = vpop.f32.mrb[0].mxu0
      %1505 = vmatprep.mubr.f32.mxu0 0.0
      %1506 = vmatmul.mubr.f32.gmra.mrb[0].mxu0 %v1263
      %v1507 = vpop.f32.mrb[0].mxu0
      %v1508 = vadd.f32 0.0, %v1507
      %v1509 = vpop.f32.mrb[0].mxu0
      %1510 = vmatprep.mubr.f32.mxu0 0.0
      %1511 = vmatmul.mubr.f32.gmra.mrb[0].mxu0 %v1266
      %v1512 = vpop.f32.mrb[0].mxu0
      %v1513 = vadd.f32 0.0, %v1512
      %v1514 = vpop.f32.mrb[0].mxu0
      %1515 = vdwg.mxu0
      %v1516 = vadd.f32 %v908, %v1338
      %v1517 = vadd.f32 %v913, %v1343
      %v1518 = vadd.f32 %v918, %v1348
      %v1519 = vadd.f32 %v923, %v1353
      %v1520 = vadd.f32 %v928, %v1358
      %v1521 = vadd.f32 %v933, %v1363
      %v1522 = vadd.f32 %v938, %v1368
      %v1523 = vadd.f32 %v943, %v1373
      %v1524 = vadd.f32 %v948, %v1378
      %v1525 = vadd.f32 %v953, %v1383
      %v1526 = vadd.f32 %v958, %v1388
      %v1527 = vadd.f32 %v963, %v1393
      %v1528 = vadd.f32 %v968, %v1398
      %v1529 = vadd.f32 %v973, %v1403
      %v1530 = vadd.f32 %v978, %v1408
      %v1531 = vadd.f32 %v983, %v1413
      %v1532 = vadd.f32 %v988, %v1418
      %v1533 = vadd.f32 %v993, %v1423
      %v1534 = vadd.f32 %v998, %v1428
      %v1535 = vadd.f32 %v1003, %v1433
      %v1536 = vadd.f32 %v1008, %v1438
      %v1537 = vadd.f32 %v1013, %v1443
      %v1538 = vadd.f32 %v1018, %v1448
      %v1539 = vadd.f32 %v1023, %v1453
      %v1540 = vadd.f32 %v1028, %v1458
      %v1541 = vadd.f32 %v1033, %v1463
      %v1542 = vadd.f32 %v1038, %v1468
      %v1543 = vadd.f32 %v1043, %v1473
      %v1544 = vadd.f32 %v1048, %v1478
      %v1545 = vadd.f32 %v1053, %v1483
      %v1546 = vadd.f32 %v1058, %v1488
      %v1547 = vadd.f32 %v1063, %v1493
      %v1548 = vadd.f32 %v1068, %v1498
      %v1549 = vadd.f32 %v1073, %v1503
      %v1550 = vadd.f32 %v1078, %v1508
      %v1551 = vadd.f32 %v1083, %v1513
      %v1552 = vld [vmem:[%s219 + $0x12] sm:$0xff]
      %v1553 = vld [vmem:[%s219 + $0x1a] sm:$0xff]
      %v1554 = vld [vmem:[%s219 + $0x22] sm:$0xff]
      %v1555 = vld [vmem:[%s219 + $0x2a] sm:$0xff]
      %v1556 = vld [vmem:[%s219 + $0x32] sm:$0xff]
      %v1557 = vld [vmem:[%s219 + $0x3a] sm:$0xff]
      %v1558 = vld [vmem:[%s219 + $0x42] sm:$0xff]
      %v1559 = vld [vmem:[%s219 + $0x4a] sm:$0xff]
      %v1560 = vld [vmem:[%s219 + $0x52] sm:$0xff]
      %v1561 = vld [vmem:[%s219 + $0x5a] sm:$0xff]
      %v1562 = vld [vmem:[%s219 + $0x62] sm:$0xff]
      %v1563 = vld [vmem:[%s219 + $0x6a] sm:$0xff]
      %v1564 = vld [vmem:[%s219 + $0x72] sm:$0xff]
      %v1565 = vld [vmem:[%s219 + $0x7a] sm:$0xff]
      %v1566 = vld [vmem:[%s219 + $0x82] sm:$0xff]
      %v1567 = vld [vmem:[%s219 + $0x8a] sm:$0xff]
      %v1568 = vld [vmem:[%s219 + $0x92] sm:$0xff]
      %v1569 = vld [vmem:[%s219 + $0x9a] sm:$0xff]
      %v1570 = vld [vmem:[%s219 + $0xa2] sm:$0xff]
      %v1571 = vld [vmem:[%s219 + $0xaa] sm:$0xff]
      %v1572 = vld [vmem:[%s219 + $0xb2] sm:$0xff]
      %v1573 = vld [vmem:[%s219 + $0xba] sm:$0xff]
      %v1574 = vld [vmem:[%s219 + $0xc2] sm:$0xff]
      %v1575 = vld [vmem:[%s219 + $0xca] sm:$0xff]
      %v1576 = vld [vmem:[%s219 + $0xd2] sm:$0xff]
      %v1577 = vld [vmem:[%s219 + $0xda] sm:$0xff]
      %v1578 = vld [vmem:[%s219 + $0xe2] sm:$0xff]
      %v1579 = vld [vmem:[%s219 + $0xea] sm:$0xff]
      %v1580 = vld [vmem:[%s219 + $0xf2] sm:$0xff]
      %v1581 = vld [vmem:[%s219 + $0xfa] sm:$0xff]
      %v1582 = vld [vmem:[%s219 + $0x102] sm:$0xff]
      %v1583 = vld [vmem:[%s219 + $0x10a] sm:$0xff]
      %v1584 = vld [vmem:[%s219 + $0x112] sm:$0xff]
      %v1585 = vld [vmem:[%s219 + $0x11a] sm:$0xff]
      %v1586 = vld [vmem:[%s219 + $0x122] sm:$0xff]
      %v1587 = vld [vmem:[%s219 + $0x12a] sm:$0xff]
      %v1588 = vmax.f32 %v1552, 0.0
      %v1589 = vmax.f32 %v1553, 0.0
      %v1590 = vmax.f32 %v1554, 0.0
      %v1591 = vmax.f32 %v1555, 0.0
      %v1592 = vmax.f32 %v1556, 0.0
      %v1593 = vmax.f32 %v1557, 0.0
      %v1594 = vmax.f32 %v1558, 0.0
      %v1595 = vmax.f32 %v1559, 0.0
      %v1596 = vmax.f32 %v1560, 0.0
      %v1597 = vmax.f32 %v1561, 0.0
      %v1598 = vmax.f32 %v1562, 0.0
      %v1599 = vmax.f32 %v1563, 0.0
      %v1600 = vmax.f32 %v1564, 0.0
      %v1601 = vmax.f32 %v1565, 0.0
      %v1602 = vmax.f32 %v1566, 0.0
      %v1603 = vmax.f32 %v1567, 0.0
      %v1604 = vmax.f32 %v1568, 0.0
      %v1605 = vmax.f32 %v1569, 0.0
      %v1606 = vmax.f32 %v1570, 0.0
      %v1607 = vmax.f32 %v1571, 0.0
      %v1608 = vmax.f32 %v1572, 0.0
      %v1609 = vmax.f32 %v1573, 0.0
      %v1610 = vmax.f32 %v1574, 0.0
      %v1611 = vmax.f32 %v1575, 0.0
      %v1612 = vmax.f32 %v1576, 0.0
      %v1613 = vmax.f32 %v1577, 0.0
      %v1614 = vmax.f32 %v1578, 0.0
      %v1615 = vmax.f32 %v1579, 0.0
      %v1616 = vmax.f32 %v1580, 0.0
      %v1617 = vmax.f32 %v1581, 0.0
      %v1618 = vmax.f32 %v1582, 0.0
      %v1619 = vmax.f32 %v1583, 0.0
      %v1620 = vmax.f32 %v1584, 0.0
      %v1621 = vmax.f32 %v1585, 0.0
      %v1622 = vmax.f32 %v1586, 0.0
      %v1623 = vmax.f32 %v1587, 0.0
      %s1624 = scalar_lea.vmem %s1, 12
      %v1625 = vld [vmem:[%s1624] sm:$0xf]
      %v1627 = vsel %vm372, %v1588, 0
      %v1630 = vsel %vm372, %v1589, 0
      %v1633 = vsel %vm372, %v1590, 0
      %v1636 = vsel %vm372, %v1591, 0
      %v1639 = vsel %vm372, %v1592, 0
      %v1642 = vsel %vm372, %v1593, 0
      %v1645 = vsel %vm372, %v1594, 0
      %v1648 = vsel %vm372, %v1595, 0
      %v1651 = vsel %vm372, %v1596, 0
      %v1654 = vsel %vm372, %v1597, 0
      %v1657 = vsel %vm372, %v1598, 0
      %v1660 = vsel %vm372, %v1599, 0
      %v1663 = vsel %vm372, %v1600, 0
      %v1666 = vsel %vm372, %v1601, 0
      %v1669 = vsel %vm372, %v1602, 0
      %v1672 = vsel %vm372, %v1603, 0
      %v1675 = vsel %vm372, %v1604, 0
      %v1678 = vsel %vm372, %v1605, 0
      %v1681 = vsel %vm372, %v1606, 0
      %v1684 = vsel %vm372, %v1607, 0
      %v1687 = vsel %vm372, %v1608, 0
      %v1690 = vsel %vm372, %v1609, 0
      %v1693 = vsel %vm372, %v1610, 0
      %v1696 = vsel %vm372, %v1611, 0
      %v1699 = vsel %vm372, %v1612, 0
      %v1702 = vsel %vm372, %v1613, 0
      %v1705 = vsel %vm372, %v1614, 0
      %v1708 = vsel %vm372, %v1615, 0
      %v1711 = vsel %vm372, %v1616, 0
      %v1714 = vsel %vm372, %v1617, 0
      %v1717 = vsel %vm372, %v1618, 0
      %v1720 = vsel %vm372, %v1619, 0
      %v1723 = vsel %vm372, %v1620, 0
      %v1726 = vsel %vm372, %v1621, 0
      %v1729 = vsel %vm372, %v1622, 0
      %v1732 = vsel %vm372, %v1623, 0
      %v1735 = vsel %vm481, %v1625, 0
      %1737 = vmatprep.subr.mxu0 0.0
      %1738 = vmatpush1.msra.mxu0 %v1735
      %1739 = vmatprep.subr.mxu0 0.0
      %1740 = vmatpush1.msra.mxu0 0.0
      %1741 = vmatprep.subr.mxu0 0.0
      %1742 = vmatpush1.msra.mxu0 0.0
      %1743 = vmatprep.subr.mxu0 0.0
      %1744 = vmatpush1.msra.mxu0 0.0
      %1745 = vmatprep.subr.mxu0 0.0
      %1746 = vmatpush1.msra.mxu0 0.0
      %1747 = vmatprep.subr.mxu0 0.0
      %1748 = vmatpush1.msra.mxu0 0.0
      %1749 = vmatprep.subr.mxu0 0.0
      %1750 = vmatpush1.msra.mxu0 0.0
      %1751 = vmatprep.subr.mxu0 0.0
      %1752 = vmatpush1.msra.mxu0 0.0
      %1753 = vmatprep.subr.mxu0 0.0
      %1754 = vmatpush1.msra.mxu0 0.0
      %1755 = vmatprep.subr.mxu0 0.0
      %1756 = vmatpush1.msra.mxu0 0.0
      %1757 = vmatprep.subr.mxu0 0.0
      %1758 = vmatpush1.msra.mxu0 0.0
      %1759 = vmatprep.subr.mxu0 0.0
      %1760 = vmatpush1.msra.mxu0 0.0
      %1761 = vmatprep.subr.mxu0 0.0
      %1762 = vmatpush1.msra.mxu0 0.0
      %1763 = vmatprep.subr.mxu0 0.0
      %1764 = vmatpush1.msra.mxu0 0.0
      %1765 = vmatprep.subr.mxu0 0.0
      %1766 = vmatpush1.msra.mxu0 0.0
      %1767 = vmatprep.subr.mxu0 0.0
      %1768 = vmatpush1.msra.mxu0 0.0
      %1769 = vmatprep.subr.mxu0 0.0
      %1770 = vmatpush1.msra.mxu0 0.0
      %1771 = vmatprep.subr.mxu0 0.0
      %1772 = vmatpush1.msra.mxu0 0.0
      %1773 = vmatprep.subr.mxu0 0.0
      %1774 = vmatpush1.msra.mxu0 0.0
      %1775 = vmatprep.subr.mxu0 0.0
      %1776 = vmatpush1.msra.mxu0 0.0
      %1777 = vmatprep.subr.mxu0 0.0
      %1778 = vmatpush1.msra.mxu0 0.0
      %1779 = vmatprep.subr.mxu0 0.0
      %1780 = vmatpush1.msra.mxu0 0.0
      %1781 = vmatprep.subr.mxu0 0.0
      %1782 = vmatpush1.msra.mxu0 0.0
      %1783 = vmatprep.subr.mxu0 0.0
      %1784 = vmatpush1.msra.mxu0 0.0
      %1785 = vmatprep.subr.mxu0 0.0
      %1786 = vmatpush1.msra.mxu0 0.0
      %1787 = vmatprep.subr.mxu0 0.0
      %1788 = vmatpush1.msra.mxu0 0.0
      %1789 = vmatprep.subr.mxu0 0.0
      %1790 = vmatpush1.msra.mxu0 0.0
      %1791 = vmatprep.subr.mxu0 0.0
      %1792 = vmatpush1.msra.mxu0 0.0
      %1793 = vmatprep.subr.mxu0 0.0
      %1794 = vmatpush1.msra.mxu0 0.0
      %1795 = vmatprep.subr.mxu0 0.0
      %1796 = vmatpush1.msra.mxu0 0.0
      %1797 = vmatprep.subr.mxu0 0.0
      %1798 = vmatpush1.msra.mxu0 0.0
      %1799 = vmatprep.subr.mxu0 0.0
      %1800 = vmatpush1.msra.mxu0 0.0
      %1801 = vmatprep.mubr.f32.mxu0 0.0
      %1802 = vmatmul.mubr.f32.gmra.mrb[0].mxu0 %v1627
      %v1803 = vpop.f32.mrb[0].mxu0
      %v1804 = vadd.f32 0.0, %v1803
      %v1805 = vpop.f32.mrb[0].mxu0
      %1806 = vmatprep.mubr.f32.mxu0 0.0
      %1807 = vmatmul.mubr.f32.gmra.mrb[0].mxu0 %v1630
      %v1808 = vpop.f32.mrb[0].mxu0
      %v1809 = vadd.f32 0.0, %v1808
      %v1810 = vpop.f32.mrb[0].mxu0
      %1811 = vmatprep.mubr.f32.mxu0 0.0
      %1812 = vmatmul.mubr.f32.gmra.mrb[0].mxu0 %v1633
      %v1813 = vpop.f32.mrb[0].mxu0
      %v1814 = vadd.f32 0.0, %v1813
      %v1815 = vpop.f32.mrb[0].mxu0
      %1816 = vmatprep.mubr.f32.mxu0 0.0
      %1817 = vmatmul.mubr.f32.gmra.mrb[0].mxu0 %v1636
      %v1818 = vpop.f32.mrb[0].mxu0
      %v1819 = vadd.f32 0.0, %v1818
      %v1820 = vpop.f32.mrb[0].mxu0
      %1821 = vmatprep.mubr.f32.mxu0 0.0
      %1822 = vmatmul.mubr.f32.gmra.mrb[0].mxu0 %v1639
      %v1823 = vpop.f32.mrb[0].mxu0
      %v1824 = vadd.f32 0.0, %v1823
      %v1825 = vpop.f32.mrb[0].mxu0
      %1826 = vmatprep.mubr.f32.mxu0 0.0
      %1827 = vmatmul.mubr.f32.gmra.mrb[0].mxu0 %v1642
      %v1828 = vpop.f32.mrb[0].mxu0
      %v1829 = vadd.f32 0.0, %v1828
      %v1830 = vpop.f32.mrb[0].mxu0
      %1831 = vmatprep.mubr.f32.mxu0 0.0
      %1832 = vmatmul.mubr.f32.gmra.mrb[0].mxu0 %v1645
      %v1833 = vpop.f32.mrb[0].mxu0
      %v1834 = vadd.f32 0.0, %v1833
      %v1835 = vpop.f32.mrb[0].mxu0
      %1836 = vmatprep.mubr.f32.mxu0 0.0
      %1837 = vmatmul.mubr.f32.gmra.mrb[0].mxu0 %v1648
      %v1838 = vpop.f32.mrb[0].mxu0
      %v1839 = vadd.f32 0.0, %v1838
      %v1840 = vpop.f32.mrb[0].mxu0
      %1841 = vmatprep.mubr.f32.mxu0 0.0
      %1842 = vmatmul.mubr.f32.gmra.mrb[0].mxu0 %v1651
      %v1843 = vpop.f32.mrb[0].mxu0
      %v1844 = vadd.f32 0.0, %v1843
      %v1845 = vpop.f32.mrb[0].mxu0
      %1846 = vmatprep.mubr.f32.mxu0 0.0
      %1847 = vmatmul.mubr.f32.gmra.mrb[0].mxu0 %v1654
      %v1848 = vpop.f32.mrb[0].mxu0
      %v1849 = vadd.f32 0.0, %v1848
      %v1850 = vpop.f32.mrb[0].mxu0
      %1851 = vmatprep.mubr.f32.mxu0 0.0
      %1852 = vmatmul.mubr.f32.gmra.mrb[0].mxu0 %v1657
      %v1853 = vpop.f32.mrb[0].mxu0
      %v1854 = vadd.f32 0.0, %v1853
      %v1855 = vpop.f32.mrb[0].mxu0
      %1856 = vmatprep.mubr.f32.mxu0 0.0
      %1857 = vmatmul.mubr.f32.gmra.mrb[0].mxu0 %v1660
      %v1858 = vpop.f32.mrb[0].mxu0
      %v1859 = vadd.f32 0.0, %v1858
      %v1860 = vpop.f32.mrb[0].mxu0
      %1861 = vmatprep.mubr.f32.mxu0 0.0
      %1862 = vmatmul.mubr.f32.gmra.mrb[0].mxu0 %v1663
      %v1863 = vpop.f32.mrb[0].mxu0
      %v1864 = vadd.f32 0.0, %v1863
      %v1865 = vpop.f32.mrb[0].mxu0
      %1866 = vmatprep.mubr.f32.mxu0 0.0
      %1867 = vmatmul.mubr.f32.gmra.mrb[0].mxu0 %v1666
      %v1868 = vpop.f32.mrb[0].mxu0
      %v1869 = vadd.f32 0.0, %v1868
      %v1870 = vpop.f32.mrb[0].mxu0
      %1871 = vmatprep.mubr.f32.mxu0 0.0
      %1872 = vmatmul.mubr.f32.gmra.mrb[0].mxu0 %v1669
      %v1873 = vpop.f32.mrb[0].mxu0
      %v1874 = vadd.f32 0.0, %v1873
      %v1875 = vpop.f32.mrb[0].mxu0
      %1876 = vmatprep.mubr.f32.mxu0 0.0
      %1877 = vmatmul.mubr.f32.gmra.mrb[0].mxu0 %v1672
      %v1878 = vpop.f32.mrb[0].mxu0
      %v1879 = vadd.f32 0.0, %v1878
      %v1880 = vpop.f32.mrb[0].mxu0
      %1881 = vmatprep.mubr.f32.mxu0 0.0
      %1882 = vmatmul.mubr.f32.gmra.mrb[0].mxu0 %v1675
      %v1883 = vpop.f32.mrb[0].mxu0
      %v1884 = vadd.f32 0.0, %v1883
      %v1885 = vpop.f32.mrb[0].mxu0
      %1886 = vmatprep.mubr.f32.mxu0 0.0
      %1887 = vmatmul.mubr.f32.gmra.mrb[0].mxu0 %v1678
      %v1888 = vpop.f32.mrb[0].mxu0
      %v1889 = vadd.f32 0.0, %v1888
      %v1890 = vpop.f32.mrb[0].mxu0
      %1891 = vmatprep.mubr.f32.mxu0 0.0
      %1892 = vmatmul.mubr.f32.gmra.mrb[0].mxu0 %v1681
      %v1893 = vpop.f32.mrb[0].mxu0
      %v1894 = vadd.f32 0.0, %v1893
      %v1895 = vpop.f32.mrb[0].mxu0
      %1896 = vmatprep.mubr.f32.mxu0 0.0
      %1897 = vmatmul.mubr.f32.gmra.mrb[0].mxu0 %v1684
      %v1898 = vpop.f32.mrb[0].mxu0
      %v1899 = vadd.f32 0.0, %v1898
      %v1900 = vpop.f32.mrb[0].mxu0
      %1901 = vmatprep.mubr.f32.mxu0 0.0
      %1902 = vmatmul.mubr.f32.gmra.mrb[0].mxu0 %v1687
      %v1903 = vpop.f32.mrb[0].mxu0
      %v1904 = vadd.f32 0.0, %v1903
      %v1905 = vpop.f32.mrb[0].mxu0
      %1906 = vmatprep.mubr.f32.mxu0 0.0
      %1907 = vmatmul.mubr.f32.gmra.mrb[0].mxu0 %v1690
      %v1908 = vpop.f32.mrb[0].mxu0
      %v1909 = vadd.f32 0.0, %v1908
      %v1910 = vpop.f32.mrb[0].mxu0
      %1911 = vmatprep.mubr.f32.mxu0 0.0
      %1912 = vmatmul.mubr.f32.gmra.mrb[0].mxu0 %v1693
      %v1913 = vpop.f32.mrb[0].mxu0
      %v1914 = vadd.f32 0.0, %v1913
      %v1915 = vpop.f32.mrb[0].mxu0
      %1916 = vmatprep.mubr.f32.mxu0 0.0
      %1917 = vmatmul.mubr.f32.gmra.mrb[0].mxu0 %v1696
      %v1918 = vpop.f32.mrb[0].mxu0
      %v1919 = vadd.f32 0.0, %v1918
      %v1920 = vpop.f32.mrb[0].mxu0
      %1921 = vmatprep.mubr.f32.mxu0 0.0
      %1922 = vmatmul.mubr.f32.gmra.mrb[0].mxu0 %v1699
      %v1923 = vpop.f32.mrb[0].mxu0
      %v1924 = vadd.f32 0.0, %v1923
      %v1925 = vpop.f32.mrb[0].mxu0
      %1926 = vmatprep.mubr.f32.mxu0 0.0
      %1927 = vmatmul.mubr.f32.gmra.mrb[0].mxu0 %v1702
      %v1928 = vpop.f32.mrb[0].mxu0
      %v1929 = vadd.f32 0.0, %v1928
      %v1930 = vpop.f32.mrb[0].mxu0
      %1931 = vmatprep.mubr.f32.mxu0 0.0
      %1932 = vmatmul.mubr.f32.gmra.mrb[0].mxu0 %v1705
      %v1933 = vpop.f32.mrb[0].mxu0
      %v1934 = vadd.f32 0.0, %v1933
      %v1935 = vpop.f32.mrb[0].mxu0
      %1936 = vmatprep.mubr.f32.mxu0 0.0
      %1937 = vmatmul.mubr.f32.gmra.mrb[0].mxu0 %v1708
      %v1938 = vpop.f32.mrb[0].mxu0
      %v1939 = vadd.f32 0.0, %v1938
      %v1940 = vpop.f32.mrb[0].mxu0
      %1941 = vmatprep.mubr.f32.mxu0 0.0
      %1942 = vmatmul.mubr.f32.gmra.mrb[0].mxu0 %v1711
      %v1943 = vpop.f32.mrb[0].mxu0
      %v1944 = vadd.f32 0.0, %v1943
      %v1945 = vpop.f32.mrb[0].mxu0
      %1946 = vmatprep.mubr.f32.mxu0 0.0
      %1947 = vmatmul.mubr.f32.gmra.mrb[0].mxu0 %v1714
      %v1948 = vpop.f32.mrb[0].mxu0
      %v1949 = vadd.f32 0.0, %v1948
      %v1950 = vpop.f32.mrb[0].mxu0
      %1951 = vmatprep.mubr.f32.mxu0 0.0
      %1952 = vmatmul.mubr.f32.gmra.mrb[0].mxu0 %v1717
      %v1953 = vpop.f32.mrb[0].mxu0
      %v1954 = vadd.f32 0.0, %v1953
      %v1955 = vpop.f32.mrb[0].mxu0
      %1956 = vmatprep.mubr.f32.mxu0 0.0
      %1957 = vmatmul.mubr.f32.gmra.mrb[0].mxu0 %v1720
      %v1958 = vpop.f32.mrb[0].mxu0
      %v1959 = vadd.f32 0.0, %v1958
      %v1960 = vpop.f32.mrb[0].mxu0
      %1961 = vmatprep.mubr.f32.mxu0 0.0
      %1962 = vmatmul.mubr.f32.gmra.mrb[0].mxu0 %v1723
      %v1963 = vpop.f32.mrb[0].mxu0
      %v1964 = vadd.f32 0.0, %v1963
      %v1965 = vpop.f32.mrb[0].mxu0
      %1966 = vmatprep.mubr.f32.mxu0 0.0
      %1967 = vmatmul.mubr.f32.gmra.mrb[0].mxu0 %v1726
      %v1968 = vpop.f32.mrb[0].mxu0
      %v1969 = vadd.f32 0.0, %v1968
      %v1970 = vpop.f32.mrb[0].mxu0
      %1971 = vmatprep.mubr.f32.mxu0 0.0
      %1972 = vmatmul.mubr.f32.gmra.mrb[0].mxu0 %v1729
      %v1973 = vpop.f32.mrb[0].mxu0
      %v1974 = vadd.f32 0.0, %v1973
      %v1975 = vpop.f32.mrb[0].mxu0
      %1976 = vmatprep.mubr.f32.mxu0 0.0
      %1977 = vmatmul.mubr.f32.gmra.mrb[0].mxu0 %v1732
      %v1978 = vpop.f32.mrb[0].mxu0
      %v1979 = vadd.f32 0.0, %v1978
      %v1980 = vpop.f32.mrb[0].mxu0
      %1981 = vdwg.mxu0
      %v1982 = vadd.f32 %v1516, %v1804
      %v1983 = vadd.f32 %v1517, %v1809
      %v1984 = vadd.f32 %v1518, %v1814
      %v1985 = vadd.f32 %v1519, %v1819
      %v1986 = vadd.f32 %v1520, %v1824
      %v1987 = vadd.f32 %v1521, %v1829
      %v1988 = vadd.f32 %v1522, %v1834
      %v1989 = vadd.f32 %v1523, %v1839
      %v1990 = vadd.f32 %v1524, %v1844
      %v1991 = vadd.f32 %v1525, %v1849
      %v1992 = vadd.f32 %v1526, %v1854
      %v1993 = vadd.f32 %v1527, %v1859
      %v1994 = vadd.f32 %v1528, %v1864
      %v1995 = vadd.f32 %v1529, %v1869
      %v1996 = vadd.f32 %v1530, %v1874
      %v1997 = vadd.f32 %v1531, %v1879
      %v1998 = vadd.f32 %v1532, %v1884
      %v1999 = vadd.f32 %v1533, %v1889
      %v2000 = vadd.f32 %v1534, %v1894
      %v2001 = vadd.f32 %v1535, %v1899
      %v2002 = vadd.f32 %v1536, %v1904
      %v2003 = vadd.f32 %v1537, %v1909
      %v2004 = vadd.f32 %v1538, %v1914
      %v2005 = vadd.f32 %v1539, %v1919
      %v2006 = vadd.f32 %v1540, %v1924
      %v2007 = vadd.f32 %v1541, %v1929
      %v2008 = vadd.f32 %v1542, %v1934
      %v2009 = vadd.f32 %v1543, %v1939
      %v2010 = vadd.f32 %v1544, %v1944
      %v2011 = vadd.f32 %v1545, %v1949
      %v2012 = vadd.f32 %v1546, %v1954
      %v2013 = vadd.f32 %v1547, %v1959
      %v2014 = vadd.f32 %v1548, %v1964
      %v2015 = vadd.f32 %v1549, %v1969
      %v2016 = vadd.f32 %v1550, %v1974
      %v2017 = vadd.f32 %v1551, %v1979
      %v2018 = vld [vmem:[%s219 + $0x13] sm:$0xff]
      %v2019 = vld [vmem:[%s219 + $0x1b] sm:$0xff]
      %v2020 = vld [vmem:[%s219 + $0x23] sm:$0xff]
      %v2021 = vld [vmem:[%s219 + $0x2b] sm:$0xff]
      %v2022 = vld [vmem:[%s219 + $0x33] sm:$0xff]
      %v2023 = vld [vmem:[%s219 + $0x3b] sm:$0xff]
      %v2024 = vld [vmem:[%s219 + $0x43] sm:$0xff]
      %v2025 = vld [vmem:[%s219 + $0x4b] sm:$0xff]
      %v2026 = vld [vmem:[%s219 + $0x53] sm:$0xff]
      %v2027 = vld [vmem:[%s219 + $0x5b] sm:$0xff]
      %v2028 = vld [vmem:[%s219 + $0x63] sm:$0xff]
      %v2029 = vld [vmem:[%s219 + $0x6b] sm:$0xff]
      %v2030 = vld [vmem:[%s219 + $0x73] sm:$0xff]
      %v2031 = vld [vmem:[%s219 + $0x7b] sm:$0xff]
      %v2032 = vld [vmem:[%s219 + $0x83] sm:$0xff]
      %v2033 = vld [vmem:[%s219 + $0x8b] sm:$0xff]
      %v2034 = vld [vmem:[%s219 + $0x93] sm:$0xff]
      %v2035 = vld [vmem:[%s219 + $0x9b] sm:$0xff]
      %v2036 = vld [vmem:[%s219 + $0xa3] sm:$0xff]
      %v2037 = vld [vmem:[%s219 + $0xab] sm:$0xff]
      %v2038 = vld [vmem:[%s219 + $0xb3] sm:$0xff]
      %v2039 = vld [vmem:[%s219 + $0xbb] sm:$0xff]
      %v2040 = vld [vmem:[%s219 + $0xc3] sm:$0xff]
      %v2041 = vld [vmem:[%s219 + $0xcb] sm:$0xff]
      %v2042 = vld [vmem:[%s219 + $0xd3] sm:$0xff]
      %v2043 = vld [vmem:[%s219 + $0xdb] sm:$0xff]
      %v2044 = vld [vmem:[%s219 + $0xe3] sm:$0xff]
      %v2045 = vld [vmem:[%s219 + $0xeb] sm:$0xff]
      %v2046 = vld [vmem:[%s219 + $0xf3] sm:$0xff]
      %v2047 = vld [vmem:[%s219 + $0xfb] sm:$0xff]
      %v2048 = vld [vmem:[%s219 + $0x103] sm:$0xff]
      %v2049 = vld [vmem:[%s219 + $0x10b] sm:$0xff]
      %v2050 = vld [vmem:[%s219 + $0x113] sm:$0xff]
      %v2051 = vld [vmem:[%s219 + $0x11b] sm:$0xff]
      %v2052 = vld [vmem:[%s219 + $0x123] sm:$0xff]
      %v2053 = vld [vmem:[%s219 + $0x12b] sm:$0xff]
      %v2054 = vmax.f32 %v2018, 0.0
      %v2055 = vmax.f32 %v2019, 0.0
      %v2056 = vmax.f32 %v2020, 0.0
      %v2057 = vmax.f32 %v2021, 0.0
      %v2058 = vmax.f32 %v2022, 0.0
      %v2059 = vmax.f32 %v2023, 0.0
      %v2060 = vmax.f32 %v2024, 0.0
      %v2061 = vmax.f32 %v2025, 0.0
      %v2062 = vmax.f32 %v2026, 0.0
      %v2063 = vmax.f32 %v2027, 0.0
      %v2064 = vmax.f32 %v2028, 0.0
      %v2065 = vmax.f32 %v2029, 0.0
      %v2066 = vmax.f32 %v2030, 0.0
      %v2067 = vmax.f32 %v2031, 0.0
      %v2068 = vmax.f32 %v2032, 0.0
      %v2069 = vmax.f32 %v2033, 0.0
      %v2070 = vmax.f32 %v2034, 0.0
      %v2071 = vmax.f32 %v2035, 0.0
      %v2072 = vmax.f32 %v2036, 0.0
      %v2073 = vmax.f32 %v2037, 0.0
      %v2074 = vmax.f32 %v2038, 0.0
      %v2075 = vmax.f32 %v2039, 0.0
      %v2076 = vmax.f32 %v2040, 0.0
      %v2077 = vmax.f32 %v2041, 0.0
      %v2078 = vmax.f32 %v2042, 0.0
      %v2079 = vmax.f32 %v2043, 0.0
      %v2080 = vmax.f32 %v2044, 0.0
      %v2081 = vmax.f32 %v2045, 0.0
      %v2082 = vmax.f32 %v2046, 0.0
      %v2083 = vmax.f32 %v2047, 0.0
      %v2084 = vmax.f32 %v2048, 0.0
      %v2085 = vmax.f32 %v2049, 0.0
      %v2086 = vmax.f32 %v2050, 0.0
      %v2087 = vmax.f32 %v2051, 0.0
      %v2088 = vmax.f32 %v2052, 0.0
      %v2089 = vmax.f32 %v2053, 0.0
      %s2090 = scalar_lea.vmem %s1, 16
      %v2091 = vld [vmem:[%s2090] sm:$0xf]
      %v2093 = vsel %vm372, %v2054, 0
      %v2096 = vsel %vm372, %v2055, 0
      %v2099 = vsel %vm372, %v2056, 0
      %v2102 = vsel %vm372, %v2057, 0
      %v2105 = vsel %vm372, %v2058, 0
      %v2108 = vsel %vm372, %v2059, 0
      %v2111 = vsel %vm372, %v2060, 0
      %v2114 = vsel %vm372, %v2061, 0
      %v2117 = vsel %vm372, %v2062, 0
      %v2120 = vsel %vm372, %v2063, 0
      %v2123 = vsel %vm372, %v2064, 0
      %v2126 = vsel %vm372, %v2065, 0
      %v2129 = vsel %vm372, %v2066, 0
      %v2132 = vsel %vm372, %v2067, 0
      %v2135 = vsel %vm372, %v2068, 0
      %v2138 = vsel %vm372, %v2069, 0
      %v2141 = vsel %vm372, %v2070, 0
      %v2144 = vsel %vm372, %v2071, 0
      %v2147 = vsel %vm372, %v2072, 0
      %v2150 = vsel %vm372, %v2073, 0
      %v2153 = vsel %vm372, %v2074, 0
      %v2156 = vsel %vm372, %v2075, 0
      %v2159 = vsel %vm372, %v2076, 0
      %v2162 = vsel %vm372, %v2077, 0
      %v2165 = vsel %vm372, %v2078, 0
      %v2168 = vsel %vm372, %v2079, 0
      %v2171 = vsel %vm372, %v2080, 0
      %v2174 = vsel %vm372, %v2081, 0
      %v2177 = vsel %vm372, %v2082, 0
      %v2180 = vsel %vm372, %v2083, 0
      %v2183 = vsel %vm372, %v2084, 0
      %v2186 = vsel %vm372, %v2085, 0
      %v2189 = vsel %vm372, %v2086, 0
      %v2192 = vsel %vm372, %v2087, 0
      %v2195 = vsel %vm372, %v2088, 0
      %v2198 = vsel %vm372, %v2089, 0
      %v2201 = vsel %vm481, %v2091, 0
      %2203 = vmatprep.subr.mxu0 0.0
      %2204 = vmatpush1.msra.mxu0 %v2201
      %2205 = vmatprep.subr.mxu0 0.0
      %2206 = vmatpush1.msra.mxu0 0.0
      %2207 = vmatprep.subr.mxu0 0.0
      %2208 = vmatpush1.msra.mxu0 0.0
      %2209 = vmatprep.subr.mxu0 0.0
      %2210 = vmatpush1.msra.mxu0 0.0
      %2211 = vmatprep.subr.mxu0 0.0
      %2212 = vmatpush1.msra.mxu0 0.0
      %2213 = vmatprep.subr.mxu0 0.0
      %2214 = vmatpush1.msra.mxu0 0.0
      %2215 = vmatprep.subr.mxu0 0.0
      %2216 = vmatpush1.msra.mxu0 0.0
      %2217 = vmatprep.subr.mxu0 0.0
      %2218 = vmatpush1.msra.mxu0 0.0
      %2219 = vmatprep.subr.mxu0 0.0
      %2220 = vmatpush1.msra.mxu0 0.0
      %2221 = vmatprep.subr.mxu0 0.0
      %2222 = vmatpush1.msra.mxu0 0.0
      %2223 = vmatprep.subr.mxu0 0.0
      %2224 = vmatpush1.msra.mxu0 0.0
      %2225 = vmatprep.subr.mxu0 0.0
      %2226 = vmatpush1.msra.mxu0 0.0
      %2227 = vmatprep.subr.mxu0 0.0
      %2228 = vmatpush1.msra.mxu0 0.0
      %2229 = vmatprep.subr.mxu0 0.0
      %2230 = vmatpush1.msra.mxu0 0.0
      %2231 = vmatprep.subr.mxu0 0.0
      %2232 = vmatpush1.msra.mxu0 0.0
      %2233 = vmatprep.subr.mxu0 0.0
      %2234 = vmatpush1.msra.mxu0 0.0
      %2235 = vmatprep.subr.mxu0 0.0
      %2236 = vmatpush1.msra.mxu0 0.0
      %2237 = vmatprep.subr.mxu0 0.0
      %2238 = vmatpush1.msra.mxu0 0.0
      %2239 = vmatprep.subr.mxu0 0.0
      %2240 = vmatpush1.msra.mxu0 0.0
      %2241 = vmatprep.subr.mxu0 0.0
      %2242 = vmatpush1.msra.mxu0 0.0
      %2243 = vmatprep.subr.mxu0 0.0
      %2244 = vmatpush1.msra.mxu0 0.0
      %2245 = vmatprep.subr.mxu0 0.0
      %2246 = vmatpush1.msra.mxu0 0.0
      %2247 = vmatprep.subr.mxu0 0.0
      %2248 = vmatpush1.msra.mxu0 0.0
      %2249 = vmatprep.subr.mxu0 0.0
      %2250 = vmatpush1.msra.mxu0 0.0
      %2251 = vmatprep.subr.mxu0 0.0
      %2252 = vmatpush1.msra.mxu0 0.0
      %2253 = vmatprep.subr.mxu0 0.0
      %2254 = vmatpush1.msra.mxu0 0.0
      %2255 = vmatprep.subr.mxu0 0.0
      %2256 = vmatpush1.msra.mxu0 0.0
      %2257 = vmatprep.subr.mxu0 0.0
      %2258 = vmatpush1.msra.mxu0 0.0
      %2259 = vmatprep.subr.mxu0 0.0
      %2260 = vmatpush1.msra.mxu0 0.0
      %2261 = vmatprep.subr.mxu0 0.0
      %2262 = vmatpush1.msra.mxu0 0.0
      %2263 = vmatprep.subr.mxu0 0.0
      %2264 = vmatpush1.msra.mxu0 0.0
      %2265 = vmatprep.subr.mxu0 0.0
      %2266 = vmatpush1.msra.mxu0 0.0
      %2267 = vmatprep.mubr.f32.mxu0 0.0
      %2268 = vmatmul.mubr.f32.gmra.mrb[0].mxu0 %v2093
      %v2269 = vpop.f32.mrb[0].mxu0
      %v2270 = vadd.f32 0.0, %v2269
      %v2271 = vpop.f32.mrb[0].mxu0
      %2272 = vmatprep.mubr.f32.mxu0 0.0
      %2273 = vmatmul.mubr.f32.gmra.mrb[0].mxu0 %v2096
      %v2274 = vpop.f32.mrb[0].mxu0
      %v2275 = vadd.f32 0.0, %v2274
      %v2276 = vpop.f32.mrb[0].mxu0
      %2277 = vmatprep.mubr.f32.mxu0 0.0
      %2278 = vmatmul.mubr.f32.gmra.mrb[0].mxu0 %v2099
      %v2279 = vpop.f32.mrb[0].mxu0
      %v2280 = vadd.f32 0.0, %v2279
      %v2281 = vpop.f32.mrb[0].mxu0
      %2282 = vmatprep.mubr.f32.mxu0 0.0
      %2283 = vmatmul.mubr.f32.gmra.mrb[0].mxu0 %v2102
      %v2284 = vpop.f32.mrb[0].mxu0
      %v2285 = vadd.f32 0.0, %v2284
      %v2286 = vpop.f32.mrb[0].mxu0
      %2287 = vmatprep.mubr.f32.mxu0 0.0
      %2288 = vmatmul.mubr.f32.gmra.mrb[0].mxu0 %v2105
      %v2289 = vpop.f32.mrb[0].mxu0
      %v2290 = vadd.f32 0.0, %v2289
      %v2291 = vpop.f32.mrb[0].mxu0
      %2292 = vmatprep.mubr.f32.mxu0 0.0
      %2293 = vmatmul.mubr.f32.gmra.mrb[0].mxu0 %v2108
      %v2294 = vpop.f32.mrb[0].mxu0
      %v2295 = vadd.f32 0.0, %v2294
      %v2296 = vpop.f32.mrb[0].mxu0
      %2297 = vmatprep.mubr.f32.mxu0 0.0
      %2298 = vmatmul.mubr.f32.gmra.mrb[0].mxu0 %v2111
      %v2299 = vpop.f32.mrb[0].mxu0
      %v2300 = vadd.f32 0.0, %v2299
      %v2301 = vpop.f32.mrb[0].mxu0
      %2302 = vmatprep.mubr.f32.mxu0 0.0
      %2303 = vmatmul.mubr.f32.gmra.mrb[0].mxu0 %v2114
      %v2304 = vpop.f32.mrb[0].mxu0
      %v2305 = vadd.f32 0.0, %v2304
      %v2306 = vpop.f32.mrb[0].mxu0
      %2307 = vmatprep.mubr.f32.mxu0 0.0
      %2308 = vmatmul.mubr.f32.gmra.mrb[0].mxu0 %v2117
      %v2309 = vpop.f32.mrb[0].mxu0
      %v2310 = vadd.f32 0.0, %v2309
      %v2311 = vpop.f32.mrb[0].mxu0
      %2312 = vmatprep.mubr.f32.mxu0 0.0
      %2313 = vmatmul.mubr.f32.gmra.mrb[0].mxu0 %v2120
      %v2314 = vpop.f32.mrb[0].mxu0
      %v2315 = vadd.f32 0.0, %v2314
      %v2316 = vpop.f32.mrb[0].mxu0
      %2317 = vmatprep.mubr.f32.mxu0 0.0
      %2318 = vmatmul.mubr.f32.gmra.mrb[0].mxu0 %v2123
      %v2319 = vpop.f32.mrb[0].mxu0
      %v2320 = vadd.f32 0.0, %v2319
      %v2321 = vpop.f32.mrb[0].mxu0
      %2322 = vmatprep.mubr.f32.mxu0 0.0
      %2323 = vmatmul.mubr.f32.gmra.mrb[0].mxu0 %v2126
      %v2324 = vpop.f32.mrb[0].mxu0
      %v2325 = vadd.f32 0.0, %v2324
      %v2326 = vpop.f32.mrb[0].mxu0
      %2327 = vmatprep.mubr.f32.mxu0 0.0
      %2328 = vmatmul.mubr.f32.gmra.mrb[0].mxu0 %v2129
      %v2329 = vpop.f32.mrb[0].mxu0
      %v2330 = vadd.f32 0.0, %v2329
      %v2331 = vpop.f32.mrb[0].mxu0
      %2332 = vmatprep.mubr.f32.mxu0 0.0
      %2333 = vmatmul.mubr.f32.gmra.mrb[0].mxu0 %v2132
      %v2334 = vpop.f32.mrb[0].mxu0
      %v2335 = vadd.f32 0.0, %v2334
      %v2336 = vpop.f32.mrb[0].mxu0
      %2337 = vmatprep.mubr.f32.mxu0 0.0
      %2338 = vmatmul.mubr.f32.gmra.mrb[0].mxu0 %v2135
      %v2339 = vpop.f32.mrb[0].mxu0
      %v2340 = vadd.f32 0.0, %v2339
      %v2341 = vpop.f32.mrb[0].mxu0
      %2342 = vmatprep.mubr.f32.mxu0 0.0
      %2343 = vmatmul.mubr.f32.gmra.mrb[0].mxu0 %v2138
      %v2344 = vpop.f32.mrb[0].mxu0
      %v2345 = vadd.f32 0.0, %v2344
      %v2346 = vpop.f32.mrb[0].mxu0
      %2347 = vmatprep.mubr.f32.mxu0 0.0
      %2348 = vmatmul.mubr.f32.gmra.mrb[0].mxu0 %v2141
      %v2349 = vpop.f32.mrb[0].mxu0
      %v2350 = vadd.f32 0.0, %v2349
      %v2351 = vpop.f32.mrb[0].mxu0
      %2352 = vmatprep.mubr.f32.mxu0 0.0
      %2353 = vmatmul.mubr.f32.gmra.mrb[0].mxu0 %v2144
      %v2354 = vpop.f32.mrb[0].mxu0
      %v2355 = vadd.f32 0.0, %v2354
      %v2356 = vpop.f32.mrb[0].mxu0
      %2357 = vmatprep.mubr.f32.mxu0 0.0
      %2358 = vmatmul.mubr.f32.gmra.mrb[0].mxu0 %v2147
      %v2359 = vpop.f32.mrb[0].mxu0
      %v2360 = vadd.f32 0.0, %v2359
      %v2361 = vpop.f32.mrb[0].mxu0
      %2362 = vmatprep.mubr.f32.mxu0 0.0
      %2363 = vmatmul.mubr.f32.gmra.mrb[0].mxu0 %v2150
      %v2364 = vpop.f32.mrb[0].mxu0
      %v2365 = vadd.f32 0.0, %v2364
      %v2366 = vpop.f32.mrb[0].mxu0
      %2367 = vmatprep.mubr.f32.mxu0 0.0
      %2368 = vmatmul.mubr.f32.gmra.mrb[0].mxu0 %v2153
      %v2369 = vpop.f32.mrb[0].mxu0
      %v2370 = vadd.f32 0.0, %v2369
      %v2371 = vpop.f32.mrb[0].mxu0
      %2372 = vmatprep.mubr.f32.mxu0 0.0
      %2373 = vmatmul.mubr.f32.gmra.mrb[0].mxu0 %v2156
      %v2374 = vpop.f32.mrb[0].mxu0
      %v2375 = vadd.f32 0.0, %v2374
      %v2376 = vpop.f32.mrb[0].mxu0
      %2377 = vmatprep.mubr.f32.mxu0 0.0
      %2378 = vmatmul.mubr.f32.gmra.mrb[0].mxu0 %v2159
      %v2379 = vpop.f32.mrb[0].mxu0
      %v2380 = vadd.f32 0.0, %v2379
      %v2381 = vpop.f32.mrb[0].mxu0
      %2382 = vmatprep.mubr.f32.mxu0 0.0
      %2383 = vmatmul.mubr.f32.gmra.mrb[0].mxu0 %v2162
      %v2384 = vpop.f32.mrb[0].mxu0
      %v2385 = vadd.f32 0.0, %v2384
      %v2386 = vpop.f32.mrb[0].mxu0
      %2387 = vmatprep.mubr.f32.mxu0 0.0
      %2388 = vmatmul.mubr.f32.gmra.mrb[0].mxu0 %v2165
      %v2389 = vpop.f32.mrb[0].mxu0
      %v2390 = vadd.f32 0.0, %v2389
      %v2391 = vpop.f32.mrb[0].mxu0
      %2392 = vmatprep.mubr.f32.mxu0 0.0
      %2393 = vmatmul.mubr.f32.gmra.mrb[0].mxu0 %v2168
      %v2394 = vpop.f32.mrb[0].mxu0
      %v2395 = vadd.f32 0.0, %v2394
      %v2396 = vpop.f32.mrb[0].mxu0
      %2397 = vmatprep.mubr.f32.mxu0 0.0
      %2398 = vmatmul.mubr.f32.gmra.mrb[0].mxu0 %v2171
      %v2399 = vpop.f32.mrb[0].mxu0
      %v2400 = vadd.f32 0.0, %v2399
      %v2401 = vpop.f32.mrb[0].mxu0
      %2402 = vmatprep.mubr.f32.mxu0 0.0
      %2403 = vmatmul.mubr.f32.gmra.mrb[0].mxu0 %v2174
      %v2404 = vpop.f32.mrb[0].mxu0
      %v2405 = vadd.f32 0.0, %v2404
      %v2406 = vpop.f32.mrb[0].mxu0
      %2407 = vmatprep.mubr.f32.mxu0 0.0
      %2408 = vmatmul.mubr.f32.gmra.mrb[0].mxu0 %v2177
      %v2409 = vpop.f32.mrb[0].mxu0
      %v2410 = vadd.f32 0.0, %v2409
      %v2411 = vpop.f32.mrb[0].mxu0
      %2412 = vmatprep.mubr.f32.mxu0 0.0
      %2413 = vmatmul.mubr.f32.gmra.mrb[0].mxu0 %v2180
      %v2414 = vpop.f32.mrb[0].mxu0
      %v2415 = vadd.f32 0.0, %v2414
      %v2416 = vpop.f32.mrb[0].mxu0
      %2417 = vmatprep.mubr.f32.mxu0 0.0
      %2418 = vmatmul.mubr.f32.gmra.mrb[0].mxu0 %v2183
      %v2419 = vpop.f32.mrb[0].mxu0
      %v2420 = vadd.f32 0.0, %v2419
      %v2421 = vpop.f32.mrb[0].mxu0
      %2422 = vmatprep.mubr.f32.mxu0 0.0
      %2423 = vmatmul.mubr.f32.gmra.mrb[0].mxu0 %v2186
      %v2424 = vpop.f32.mrb[0].mxu0
      %v2425 = vadd.f32 0.0, %v2424
      %v2426 = vpop.f32.mrb[0].mxu0
      %2427 = vmatprep.mubr.f32.mxu0 0.0
      %2428 = vmatmul.mubr.f32.gmra.mrb[0].mxu0 %v2189
      %v2429 = vpop.f32.mrb[0].mxu0
      %v2430 = vadd.f32 0.0, %v2429
      %v2431 = vpop.f32.mrb[0].mxu0
      %2432 = vmatprep.mubr.f32.mxu0 0.0
      %2433 = vmatmul.mubr.f32.gmra.mrb[0].mxu0 %v2192
      %v2434 = vpop.f32.mrb[0].mxu0
      %v2435 = vadd.f32 0.0, %v2434
      %v2436 = vpop.f32.mrb[0].mxu0
      %2437 = vmatprep.mubr.f32.mxu0 0.0
      %2438 = vmatmul.mubr.f32.gmra.mrb[0].mxu0 %v2195
      %v2439 = vpop.f32.mrb[0].mxu0
      %v2440 = vadd.f32 0.0, %v2439
      %v2441 = vpop.f32.mrb[0].mxu0
      %2442 = vmatprep.mubr.f32.mxu0 0.0
      %2443 = vmatmul.mubr.f32.gmra.mrb[0].mxu0 %v2198
      %v2444 = vpop.f32.mrb[0].mxu0
      %v2445 = vadd.f32 0.0, %v2444
      %v2446 = vpop.f32.mrb[0].mxu0
      %2447 = vdwg.mxu0
      %v2448 = vadd.f32 %v1982, %v2270
      %v2449 = vadd.f32 %v1983, %v2275
      %v2450 = vadd.f32 %v1984, %v2280
      %v2451 = vadd.f32 %v1985, %v2285
      %v2452 = vadd.f32 %v1986, %v2290
      %v2453 = vadd.f32 %v1987, %v2295
      %v2454 = vadd.f32 %v1988, %v2300
      %v2455 = vadd.f32 %v1989, %v2305
      %v2456 = vadd.f32 %v1990, %v2310
      %v2457 = vadd.f32 %v1991, %v2315
      %v2458 = vadd.f32 %v1992, %v2320
      %v2459 = vadd.f32 %v1993, %v2325
      %v2460 = vadd.f32 %v1994, %v2330
      %v2461 = vadd.f32 %v1995, %v2335
      %v2462 = vadd.f32 %v1996, %v2340
      %v2463 = vadd.f32 %v1997, %v2345
      %v2464 = vadd.f32 %v1998, %v2350
      %v2465 = vadd.f32 %v1999, %v2355
      %v2466 = vadd.f32 %v2000, %v2360
      %v2467 = vadd.f32 %v2001, %v2365
      %v2468 = vadd.f32 %v2002, %v2370
      %v2469 = vadd.f32 %v2003, %v2375
      %v2470 = vadd.f32 %v2004, %v2380
      %v2471 = vadd.f32 %v2005, %v2385
      %v2472 = vadd.f32 %v2006, %v2390
      %v2473 = vadd.f32 %v2007, %v2395
      %v2474 = vadd.f32 %v2008, %v2400
      %v2475 = vadd.f32 %v2009, %v2405
      %v2476 = vadd.f32 %v2010, %v2410
      %v2477 = vadd.f32 %v2011, %v2415
      %v2478 = vadd.f32 %v2012, %v2420
      %v2479 = vadd.f32 %v2013, %v2425
      %v2480 = vadd.f32 %v2014, %v2430
      %v2481 = vadd.f32 %v2015, %v2435
      %v2482 = vadd.f32 %v2016, %v2440
      %v2483 = vadd.f32 %v2017, %v2445
      %v2484 = vld [vmem:[%s219 + $0x14] sm:$0xff]
      %v2485 = vld [vmem:[%s219 + $0x1c] sm:$0xff]
      %v2486 = vld [vmem:[%s219 + $0x24] sm:$0xff]
      %v2487 = vld [vmem:[%s219 + $0x2c] sm:$0xff]
      %v2488 = vld [vmem:[%s219 + $0x34] sm:$0xff]
      %v2489 = vld [vmem:[%s219 + $0x3c] sm:$0xff]
      %v2490 = vld [vmem:[%s219 + $0x44] sm:$0xff]
      %v2491 = vld [vmem:[%s219 + $0x4c] sm:$0xff]
      %v2492 = vld [vmem:[%s219 + $0x54] sm:$0xff]
      %v2493 = vld [vmem:[%s219 + $0x5c] sm:$0xff]
      %v2494 = vld [vmem:[%s219 + $0x64] sm:$0xff]
      %v2495 = vld [vmem:[%s219 + $0x6c] sm:$0xff]
      %v2496 = vld [vmem:[%s219 + $0x74] sm:$0xff]
      %v2497 = vld [vmem:[%s219 + $0x7c] sm:$0xff]
      %v2498 = vld [vmem:[%s219 + $0x84] sm:$0xff]
      %v2499 = vld [vmem:[%s219 + $0x8c] sm:$0xff]
      %v2500 = vld [vmem:[%s219 + $0x94] sm:$0xff]
      %v2501 = vld [vmem:[%s219 + $0x9c] sm:$0xff]
      %v2502 = vld [vmem:[%s219 + $0xa4] sm:$0xff]
      %v2503 = vld [vmem:[%s219 + $0xac] sm:$0xff]
      %v2504 = vld [vmem:[%s219 + $0xb4] sm:$0xff]
      %v2505 = vld [vmem:[%s219 + $0xbc] sm:$0xff]
      %v2506 = vld [vmem:[%s219 + $0xc4] sm:$0xff]
      %v2507 = vld [vmem:[%s219 + $0xcc] sm:$0xff]
      %v2508 = vld [vmem:[%s219 + $0xd4] sm:$0xff]
      %v2509 = vld [vmem:[%s219 + $0xdc] sm:$0xff]
      %v2510 = vld [vmem:[%s219 + $0xe4] sm:$0xff]
      %v2511 = vld [vmem:[%s219 + $0xec] sm:$0xff]
      %v2512 = vld [vmem:[%s219 + $0xf4] sm:$0xff]
      %v2513 = vld [vmem:[%s219 + $0xfc] sm:$0xff]
      %v2514 = vld [vmem:[%s219 + $0x104] sm:$0xff]
      %v2515 = vld [vmem:[%s219 + $0x10c] sm:$0xff]
      %v2516 = vld [vmem:[%s219 + $0x114] sm:$0xff]
      %v2517 = vld [vmem:[%s219 + $0x11c] sm:$0xff]
      %v2518 = vld [vmem:[%s219 + $0x124] sm:$0xff]
      %v2519 = vld [vmem:[%s219 + $0x12c] sm:$0xff]
      %v2520 = vmax.f32 %v2484, 0.0
      %v2521 = vmax.f32 %v2485, 0.0
      %v2522 = vmax.f32 %v2486, 0.0
      %v2523 = vmax.f32 %v2487, 0.0
      %v2524 = vmax.f32 %v2488, 0.0
      %v2525 = vmax.f32 %v2489, 0.0
      %v2526 = vmax.f32 %v2490, 0.0
      %v2527 = vmax.f32 %v2491, 0.0
      %v2528 = vmax.f32 %v2492, 0.0
      %v2529 = vmax.f32 %v2493, 0.0
      %v2530 = vmax.f32 %v2494, 0.0
      %v2531 = vmax.f32 %v2495, 0.0
      %v2532 = vmax.f32 %v2496, 0.0
      %v2533 = vmax.f32 %v2497, 0.0
      %v2534 = vmax.f32 %v2498, 0.0
      %v2535 = vmax.f32 %v2499, 0.0
      %v2536 = vmax.f32 %v2500, 0.0
      %v2537 = vmax.f32 %v2501, 0.0
      %v2538 = vmax.f32 %v2502, 0.0
      %v2539 = vmax.f32 %v2503, 0.0
      %v2540 = vmax.f32 %v2504, 0.0
      %v2541 = vmax.f32 %v2505, 0.0
      %v2542 = vmax.f32 %v2506, 0.0
      %v2543 = vmax.f32 %v2507, 0.0
      %v2544 = vmax.f32 %v2508, 0.0
      %v2545 = vmax.f32 %v2509, 0.0
      %v2546 = vmax.f32 %v2510, 0.0
      %v2547 = vmax.f32 %v2511, 0.0
      %v2548 = vmax.f32 %v2512, 0.0
      %v2549 = vmax.f32 %v2513, 0.0
      %v2550 = vmax.f32 %v2514, 0.0
      %v2551 = vmax.f32 %v2515, 0.0
      %v2552 = vmax.f32 %v2516, 0.0
      %v2553 = vmax.f32 %v2517, 0.0
      %v2554 = vmax.f32 %v2518, 0.0
      %v2555 = vmax.f32 %v2519, 0.0
      %s2556 = scalar_lea.vmem %s1, 20
      %v2557 = vld [vmem:[%s2556] sm:$0xf]
      %v2559 = vsel %vm372, %v2520, 0
      %v2562 = vsel %vm372, %v2521, 0
      %v2565 = vsel %vm372, %v2522, 0
      %v2568 = vsel %vm372, %v2523, 0
      %v2571 = vsel %vm372, %v2524, 0
      %v2574 = vsel %vm372, %v2525, 0
      %v2577 = vsel %vm372, %v2526, 0
      %v2580 = vsel %vm372, %v2527, 0
      %v2583 = vsel %vm372, %v2528, 0
      %v2586 = vsel %vm372, %v2529, 0
      %v2589 = vsel %vm372, %v2530, 0
      %v2592 = vsel %vm372, %v2531, 0
      %v2595 = vsel %vm372, %v2532, 0
      %v2598 = vsel %vm372, %v2533, 0
      %v2601 = vsel %vm372, %v2534, 0
      %v2604 = vsel %vm372, %v2535, 0
      %v2607 = vsel %vm372, %v2536, 0
      %v2610 = vsel %vm372, %v2537, 0
      %v2613 = vsel %vm372, %v2538, 0
      %v2616 = vsel %vm372, %v2539, 0
      %v2619 = vsel %vm372, %v2540, 0
      %v2622 = vsel %vm372, %v2541, 0
      %v2625 = vsel %vm372, %v2542, 0
      %v2628 = vsel %vm372, %v2543, 0
      %v2631 = vsel %vm372, %v2544, 0
      %v2634 = vsel %vm372, %v2545, 0
      %v2637 = vsel %vm372, %v2546, 0
      %v2640 = vsel %vm372, %v2547, 0
      %v2643 = vsel %vm372, %v2548, 0
      %v2646 = vsel %vm372, %v2549, 0
      %v2649 = vsel %vm372, %v2550, 0
      %v2652 = vsel %vm372, %v2551, 0
      %v2655 = vsel %vm372, %v2552, 0
      %v2658 = vsel %vm372, %v2553, 0
      %v2661 = vsel %vm372, %v2554, 0
      %v2664 = vsel %vm372, %v2555, 0
      %v2667 = vsel %vm481, %v2557, 0
      %2669 = vmatprep.subr.mxu0 0.0
      %2670 = vmatpush1.msra.mxu0 %v2667
      %2671 = vmatprep.subr.mxu0 0.0
      %2672 = vmatpush1.msra.mxu0 0.0
      %2673 = vmatprep.subr.mxu0 0.0
      %2674 = vmatpush1.msra.mxu0 0.0
      %2675 = vmatprep.subr.mxu0 0.0
      %2676 = vmatpush1.msra.mxu0 0.0
      %2677 = vmatprep.subr.mxu0 0.0
      %2678 = vmatpush1.msra.mxu0 0.0
      %2679 = vmatprep.subr.mxu0 0.0
      %2680 = vmatpush1.msra.mxu0 0.0
      %2681 = vmatprep.subr.mxu0 0.0
      %2682 = vmatpush1.msra.mxu0 0.0
      %2683 = vmatprep.subr.mxu0 0.0
      %2684 = vmatpush1.msra.mxu0 0.0
      %2685 = vmatprep.subr.mxu0 0.0
      %2686 = vmatpush1.msra.mxu0 0.0
      %2687 = vmatprep.subr.mxu0 0.0
      %2688 = vmatpush1.msra.mxu0 0.0
      %2689 = vmatprep.subr.mxu0 0.0
      %2690 = vmatpush1.msra.mxu0 0.0
      %2691 = vmatprep.subr.mxu0 0.0
      %2692 = vmatpush1.msra.mxu0 0.0
      %2693 = vmatprep.subr.mxu0 0.0
      %2694 = vmatpush1.msra.mxu0 0.0
      %2695 = vmatprep.subr.mxu0 0.0
      %2696 = vmatpush1.msra.mxu0 0.0
      %2697 = vmatprep.subr.mxu0 0.0
      %2698 = vmatpush1.msra.mxu0 0.0
      %2699 = vmatprep.subr.mxu0 0.0
      %2700 = vmatpush1.msra.mxu0 0.0
      %2701 = vmatprep.subr.mxu0 0.0
      %2702 = vmatpush1.msra.mxu0 0.0
      %2703 = vmatprep.subr.mxu0 0.0
      %2704 = vmatpush1.msra.mxu0 0.0
      %2705 = vmatprep.subr.mxu0 0.0
      %2706 = vmatpush1.msra.mxu0 0.0
      %2707 = vmatprep.subr.mxu0 0.0
      %2708 = vmatpush1.msra.mxu0 0.0
      %2709 = vmatprep.subr.mxu0 0.0
      %2710 = vmatpush1.msra.mxu0 0.0
      %2711 = vmatprep.subr.mxu0 0.0
      %2712 = vmatpush1.msra.mxu0 0.0
      %2713 = vmatprep.subr.mxu0 0.0
      %2714 = vmatpush1.msra.mxu0 0.0
      %2715 = vmatprep.subr.mxu0 0.0
      %2716 = vmatpush1.msra.mxu0 0.0
      %2717 = vmatprep.subr.mxu0 0.0
      %2718 = vmatpush1.msra.mxu0 0.0
      %2719 = vmatprep.subr.mxu0 0.0
      %2720 = vmatpush1.msra.mxu0 0.0
      %2721 = vmatprep.subr.mxu0 0.0
      %2722 = vmatpush1.msra.mxu0 0.0
      %2723 = vmatprep.subr.mxu0 0.0
      %2724 = vmatpush1.msra.mxu0 0.0
      %2725 = vmatprep.subr.mxu0 0.0
      %2726 = vmatpush1.msra.mxu0 0.0
      %2727 = vmatprep.subr.mxu0 0.0
      %2728 = vmatpush1.msra.mxu0 0.0
      %2729 = vmatprep.subr.mxu0 0.0
      %2730 = vmatpush1.msra.mxu0 0.0
      %2731 = vmatprep.subr.mxu0 0.0
      %2732 = vmatpush1.msra.mxu0 0.0
      %2733 = vmatprep.mubr.f32.mxu0 0.0
      %2734 = vmatmul.mubr.f32.gmra.mrb[0].mxu0 %v2559
      %v2735 = vpop.f32.mrb[0].mxu0
      %v2736 = vadd.f32 0.0, %v2735
      %v2737 = vpop.f32.mrb[0].mxu0
      %2738 = vmatprep.mubr.f32.mxu0 0.0
      %2739 = vmatmul.mubr.f32.gmra.mrb[0].mxu0 %v2562
      %v2740 = vpop.f32.mrb[0].mxu0
      %v2741 = vadd.f32 0.0, %v2740
      %v2742 = vpop.f32.mrb[0].mxu0
      %2743 = vmatprep.mubr.f32.mxu0 0.0
      %2744 = vmatmul.mubr.f32.gmra.mrb[0].mxu0 %v2565
      %v2745 = vpop.f32.mrb[0].mxu0
      %v2746 = vadd.f32 0.0, %v2745
      %v2747 = vpop.f32.mrb[0].mxu0
      %2748 = vmatprep.mubr.f32.mxu0 0.0
      %2749 = vmatmul.mubr.f32.gmra.mrb[0].mxu0 %v2568
      %v2750 = vpop.f32.mrb[0].mxu0
      %v2751 = vadd.f32 0.0, %v2750
      %v2752 = vpop.f32.mrb[0].mxu0
      %2753 = vmatprep.mubr.f32.mxu0 0.0
      %2754 = vmatmul.mubr.f32.gmra.mrb[0].mxu0 %v2571
      %v2755 = vpop.f32.mrb[0].mxu0
      %v2756 = vadd.f32 0.0, %v2755
      %v2757 = vpop.f32.mrb[0].mxu0
      %2758 = vmatprep.mubr.f32.mxu0 0.0
      %2759 = vmatmul.mubr.f32.gmra.mrb[0].mxu0 %v2574
      %v2760 = vpop.f32.mrb[0].mxu0
      %v2761 = vadd.f32 0.0, %v2760
      %v2762 = vpop.f32.mrb[0].mxu0
      %2763 = vmatprep.mubr.f32.mxu0 0.0
      %2764 = vmatmul.mubr.f32.gmra.mrb[0].mxu0 %v2577
      %v2765 = vpop.f32.mrb[0].mxu0
      %v2766 = vadd.f32 0.0, %v2765
      %v2767 = vpop.f32.mrb[0].mxu0
      %2768 = vmatprep.mubr.f32.mxu0 0.0
      %2769 = vmatmul.mubr.f32.gmra.mrb[0].mxu0 %v2580
      %v2770 = vpop.f32.mrb[0].mxu0
      %v2771 = vadd.f32 0.0, %v2770
      %v2772 = vpop.f32.mrb[0].mxu0
      %2773 = vmatprep.mubr.f32.mxu0 0.0
      %2774 = vmatmul.mubr.f32.gmra.mrb[0].mxu0 %v2583
      %v2775 = vpop.f32.mrb[0].mxu0
      %v2776 = vadd.f32 0.0, %v2775
      %v2777 = vpop.f32.mrb[0].mxu0
      %2778 = vmatprep.mubr.f32.mxu0 0.0
      %2779 = vmatmul.mubr.f32.gmra.mrb[0].mxu0 %v2586
      %v2780 = vpop.f32.mrb[0].mxu0
      %v2781 = vadd.f32 0.0, %v2780
      %v2782 = vpop.f32.mrb[0].mxu0
      %2783 = vmatprep.mubr.f32.mxu0 0.0
      %2784 = vmatmul.mubr.f32.gmra.mrb[0].mxu0 %v2589
      %v2785 = vpop.f32.mrb[0].mxu0
      %v2786 = vadd.f32 0.0, %v2785
      %v2787 = vpop.f32.mrb[0].mxu0
      %2788 = vmatprep.mubr.f32.mxu0 0.0
      %2789 = vmatmul.mubr.f32.gmra.mrb[0].mxu0 %v2592
      %v2790 = vpop.f32.mrb[0].mxu0
      %v2791 = vadd.f32 0.0, %v2790
      %v2792 = vpop.f32.mrb[0].mxu0
      %2793 = vmatprep.mubr.f32.mxu0 0.0
      %2794 = vmatmul.mubr.f32.gmra.mrb[0].mxu0 %v2595
      %v2795 = vpop.f32.mrb[0].mxu0
      %v2796 = vadd.f32 0.0, %v2795
      %v2797 = vpop.f32.mrb[0].mxu0
      %2798 = vmatprep.mubr.f32.mxu0 0.0
      %2799 = vmatmul.mubr.f32.gmra.mrb[0].mxu0 %v2598
      %v2800 = vpop.f32.mrb[0].mxu0
      %v2801 = vadd.f32 0.0, %v2800
      %v2802 = vpop.f32.mrb[0].mxu0
      %2803 = vmatprep.mubr.f32.mxu0 0.0
      %2804 = vmatmul.mubr.f32.gmra.mrb[0].mxu0 %v2601
      %v2805 = vpop.f32.mrb[0].mxu0
      %v2806 = vadd.f32 0.0, %v2805
      %v2807 = vpop.f32.mrb[0].mxu0
      %2808 = vmatprep.mubr.f32.mxu0 0.0
      %2809 = vmatmul.mubr.f32.gmra.mrb[0].mxu0 %v2604
      %v2810 = vpop.f32.mrb[0].mxu0
      %v2811 = vadd.f32 0.0, %v2810
      %v2812 = vpop.f32.mrb[0].mxu0
      %2813 = vmatprep.mubr.f32.mxu0 0.0
      %2814 = vmatmul.mubr.f32.gmra.mrb[0].mxu0 %v2607
      %v2815 = vpop.f32.mrb[0].mxu0
      %v2816 = vadd.f32 0.0, %v2815
      %v2817 = vpop.f32.mrb[0].mxu0
      %2818 = vmatprep.mubr.f32.mxu0 0.0
      %2819 = vmatmul.mubr.f32.gmra.mrb[0].mxu0 %v2610
      %v2820 = vpop.f32.mrb[0].mxu0
      %v2821 = vadd.f32 0.0, %v2820
      %v2822 = vpop.f32.mrb[0].mxu0
      %2823 = vmatprep.mubr.f32.mxu0 0.0
      %2824 = vmatmul.mubr.f32.gmra.mrb[0].mxu0 %v2613
      %v2825 = vpop.f32.mrb[0].mxu0
      %v2826 = vadd.f32 0.0, %v2825
      %v2827 = vpop.f32.mrb[0].mxu0
      %2828 = vmatprep.mubr.f32.mxu0 0.0
      %2829 = vmatmul.mubr.f32.gmra.mrb[0].mxu0 %v2616
      %v2830 = vpop.f32.mrb[0].mxu0
      %v2831 = vadd.f32 0.0, %v2830
      %v2832 = vpop.f32.mrb[0].mxu0
      %2833 = vmatprep.mubr.f32.mxu0 0.0
      %2834 = vmatmul.mubr.f32.gmra.mrb[0].mxu0 %v2619
      %v2835 = vpop.f32.mrb[0].mxu0
      %v2836 = vadd.f32 0.0, %v2835
      %v2837 = vpop.f32.mrb[0].mxu0
      %2838 = vmatprep.mubr.f32.mxu0 0.0
      %2839 = vmatmul.mubr.f32.gmra.mrb[0].mxu0 %v2622
      %v2840 = vpop.f32.mrb[0].mxu0
      %v2841 = vadd.f32 0.0, %v2840
      %v2842 = vpop.f32.mrb[0].mxu0
      %2843 = vmatprep.mubr.f32.mxu0 0.0
      %2844 = vmatmul.mubr.f32.gmra.mrb[0].mxu0 %v2625
      %v2845 = vpop.f32.mrb[0].mxu0
      %v2846 = vadd.f32 0.0, %v2845
      %v2847 = vpop.f32.mrb[0].mxu0
      %2848 = vmatprep.mubr.f32.mxu0 0.0
      %2849 = vmatmul.mubr.f32.gmra.mrb[0].mxu0 %v2628
      %v2850 = vpop.f32.mrb[0].mxu0
      %v2851 = vadd.f32 0.0, %v2850
      %v2852 = vpop.f32.mrb[0].mxu0
      %2853 = vmatprep.mubr.f32.mxu0 0.0
      %2854 = vmatmul.mubr.f32.gmra.mrb[0].mxu0 %v2631
      %v2855 = vpop.f32.mrb[0].mxu0
      %v2856 = vadd.f32 0.0, %v2855
      %v2857 = vpop.f32.mrb[0].mxu0
      %2858 = vmatprep.mubr.f32.mxu0 0.0
      %2859 = vmatmul.mubr.f32.gmra.mrb[0].mxu0 %v2634
      %v2860 = vpop.f32.mrb[0].mxu0
      %v2861 = vadd.f32 0.0, %v2860
      %v2862 = vpop.f32.mrb[0].mxu0
      %2863 = vmatprep.mubr.f32.mxu0 0.0
      %2864 = vmatmul.mubr.f32.gmra.mrb[0].mxu0 %v2637
      %v2865 = vpop.f32.mrb[0].mxu0
      %v2866 = vadd.f32 0.0, %v2865
      %v2867 = vpop.f32.mrb[0].mxu0
      %2868 = vmatprep.mubr.f32.mxu0 0.0
      %2869 = vmatmul.mubr.f32.gmra.mrb[0].mxu0 %v2640
      %v2870 = vpop.f32.mrb[0].mxu0
      %v2871 = vadd.f32 0.0, %v2870
      %v2872 = vpop.f32.mrb[0].mxu0
      %2873 = vmatprep.mubr.f32.mxu0 0.0
      %2874 = vmatmul.mubr.f32.gmra.mrb[0].mxu0 %v2643
      %v2875 = vpop.f32.mrb[0].mxu0
      %v2876 = vadd.f32 0.0, %v2875
      %v2877 = vpop.f32.mrb[0].mxu0
      %2878 = vmatprep.mubr.f32.mxu0 0.0
      %2879 = vmatmul.mubr.f32.gmra.mrb[0].mxu0 %v2646
      %v2880 = vpop.f32.mrb[0].mxu0
      %v2881 = vadd.f32 0.0, %v2880
      %v2882 = vpop.f32.mrb[0].mxu0
      %2883 = vmatprep.mubr.f32.mxu0 0.0
      %2884 = vmatmul.mubr.f32.gmra.mrb[0].mxu0 %v2649
      %v2885 = vpop.f32.mrb[0].mxu0
      %v2886 = vadd.f32 0.0, %v2885
      %v2887 = vpop.f32.mrb[0].mxu0
      %2888 = vmatprep.mubr.f32.mxu0 0.0
      %2889 = vmatmul.mubr.f32.gmra.mrb[0].mxu0 %v2652
      %v2890 = vpop.f32.mrb[0].mxu0
      %v2891 = vadd.f32 0.0, %v2890
      %v2892 = vpop.f32.mrb[0].mxu0
      %2893 = vmatprep.mubr.f32.mxu0 0.0
      %2894 = vmatmul.mubr.f32.gmra.mrb[0].mxu0 %v2655
      %v2895 = vpop.f32.mrb[0].mxu0
      %v2896 = vadd.f32 0.0, %v2895
      %v2897 = vpop.f32.mrb[0].mxu0
      %2898 = vmatprep.mubr.f32.mxu0 0.0
      %2899 = vmatmul.mubr.f32.gmra.mrb[0].mxu0 %v2658
      %v2900 = vpop.f32.mrb[0].mxu0
      %v2901 = vadd.f32 0.0, %v2900
      %v2902 = vpop.f32.mrb[0].mxu0
      %2903 = vmatprep.mubr.f32.mxu0 0.0
      %2904 = vmatmul.mubr.f32.gmra.mrb[0].mxu0 %v2661
      %v2905 = vpop.f32.mrb[0].mxu0
      %v2906 = vadd.f32 0.0, %v2905
      %v2907 = vpop.f32.mrb[0].mxu0
      %2908 = vmatprep.mubr.f32.mxu0 0.0
      %2909 = vmatmul.mubr.f32.gmra.mrb[0].mxu0 %v2664
      %v2910 = vpop.f32.mrb[0].mxu0
      %v2911 = vadd.f32 0.0, %v2910
      %v2912 = vpop.f32.mrb[0].mxu0
      %2913 = vdwg.mxu0
      %v2914 = vadd.f32 %v2448, %v2736
      %v2915 = vadd.f32 %v2449, %v2741
      %v2916 = vadd.f32 %v2450, %v2746
      %v2917 = vadd.f32 %v2451, %v2751
      %v2918 = vadd.f32 %v2452, %v2756
      %v2919 = vadd.f32 %v2453, %v2761
      %v2920 = vadd.f32 %v2454, %v2766
      %v2921 = vadd.f32 %v2455, %v2771
      %v2922 = vadd.f32 %v2456, %v2776
      %v2923 = vadd.f32 %v2457, %v2781
      %v2924 = vadd.f32 %v2458, %v2786
      %v2925 = vadd.f32 %v2459, %v2791
      %v2926 = vadd.f32 %v2460, %v2796
      %v2927 = vadd.f32 %v2461, %v2801
      %v2928 = vadd.f32 %v2462, %v2806
      %v2929 = vadd.f32 %v2463, %v2811
      %v2930 = vadd.f32 %v2464, %v2816
      %v2931 = vadd.f32 %v2465, %v2821
      %v2932 = vadd.f32 %v2466, %v2826
      %v2933 = vadd.f32 %v2467, %v2831
      %v2934 = vadd.f32 %v2468, %v2836
      %v2935 = vadd.f32 %v2469, %v2841
      %v2936 = vadd.f32 %v2470, %v2846
      %v2937 = vadd.f32 %v2471, %v2851
      %v2938 = vadd.f32 %v2472, %v2856
      %v2939 = vadd.f32 %v2473, %v2861
      %v2940 = vadd.f32 %v2474, %v2866
      %v2941 = vadd.f32 %v2475, %v2871
      %v2942 = vadd.f32 %v2476, %v2876
      %v2943 = vadd.f32 %v2477, %v2881
      %v2944 = vadd.f32 %v2478, %v2886
      %v2945 = vadd.f32 %v2479, %v2891
      %v2946 = vadd.f32 %v2480, %v2896
      %v2947 = vadd.f32 %v2481, %v2901
      %v2948 = vadd.f32 %v2482, %v2906
      %v2949 = vadd.f32 %v2483, %v2911
      %v2950 = vld [vmem:[%s219 + $0x24] sm:$0xff]
      %v2951 = vld [vmem:[%s219 + $0x2c] sm:$0xff]
      %v2952 = vld [vmem:[%s219 + $0x34] sm:$0xff]
      %v2953 = vld [vmem:[%s219 + $0x3c] sm:$0xff]
      %v2954 = vld [vmem:[%s219 + $0x44] sm:$0xff]
      %v2955 = vld [vmem:[%s219 + $0x4c] sm:$0xff]
      %v2956 = vld [vmem:[%s219 + $0x54] sm:$0xff]
      %v2957 = vld [vmem:[%s219 + $0x5c] sm:$0xff]
      %v2958 = vld [vmem:[%s219 + $0x64] sm:$0xff]
      %v2959 = vld [vmem:[%s219 + $0x6c] sm:$0xff]
      %v2960 = vld [vmem:[%s219 + $0x74] sm:$0xff]
      %v2961 = vld [vmem:[%s219 + $0x7c] sm:$0xff]
      %v2962 = vld [vmem:[%s219 + $0x84] sm:$0xff]
      %v2963 = vld [vmem:[%s219 + $0x8c] sm:$0xff]
      %v2964 = vld [vmem:[%s219 + $0x94] sm:$0xff]
      %v2965 = vld [vmem:[%s219 + $0x9c] sm:$0xff]
      %v2966 = vld [vmem:[%s219 + $0xa4] sm:$0xff]
      %v2967 = vld [vmem:[%s219 + $0xac] sm:$0xff]
      %v2968 = vld [vmem:[%s219 + $0xb4] sm:$0xff]
      %v2969 = vld [vmem:[%s219 + $0xbc] sm:$0xff]
      %v2970 = vld [vmem:[%s219 + $0xc4] sm:$0xff]
      %v2971 = vld [vmem:[%s219 + $0xcc] sm:$0xff]
      %v2972 = vld [vmem:[%s219 + $0xd4] sm:$0xff]
      %v2973 = vld [vmem:[%s219 + $0xdc] sm:$0xff]
      %v2974 = vld [vmem:[%s219 + $0xe4] sm:$0xff]
      %v2975 = vld [vmem:[%s219 + $0xec] sm:$0xff]
      %v2976 = vld [vmem:[%s219 + $0xf4] sm:$0xff]
      %v2977 = vld [vmem:[%s219 + $0xfc] sm:$0xff]
      %v2978 = vld [vmem:[%s219 + $0x104] sm:$0xff]
      %v2979 = vld [vmem:[%s219 + $0x10c] sm:$0xff]
      %v2980 = vld [vmem:[%s219 + $0x114] sm:$0xff]
      %v2981 = vld [vmem:[%s219 + $0x11c] sm:$0xff]
      %v2982 = vld [vmem:[%s219 + $0x124] sm:$0xff]
      %v2983 = vld [vmem:[%s219 + $0x12c] sm:$0xff]
      %v2984 = vld [vmem:[%s219 + $0x134] sm:$0xff]
      %v2985 = vld [vmem:[%s219 + $0x13c] sm:$0xff]
      %v2986 = vmax.f32 %v2950, 0.0
      %v2987 = vmax.f32 %v2951, 0.0
      %v2988 = vmax.f32 %v2952, 0.0
      %v2989 = vmax.f32 %v2953, 0.0
      %v2990 = vmax.f32 %v2954, 0.0
      %v2991 = vmax.f32 %v2955, 0.0
      %v2992 = vmax.f32 %v2956, 0.0
      %v2993 = vmax.f32 %v2957, 0.0
      %v2994 = vmax.f32 %v2958, 0.0
      %v2995 = vmax.f32 %v2959, 0.0
      %v2996 = vmax.f32 %v2960, 0.0
      %v2997 = vmax.f32 %v2961, 0.0
      %v2998 = vmax.f32 %v2962, 0.0
      %v2999 = vmax.f32 %v2963, 0.0
      %v3000 = vmax.f32 %v2964, 0.0
      %v3001 = vmax.f32 %v2965, 0.0
      %v3002 = vmax.f32 %v2966, 0.0
      %v3003 = vmax.f32 %v2967, 0.0
      %v3004 = vmax.f32 %v2968, 0.0
      %v3005 = vmax.f32 %v2969, 0.0
      %v3006 = vmax.f32 %v2970, 0.0
      %v3007 = vmax.f32 %v2971, 0.0
      %v3008 = vmax.f32 %v2972, 0.0
      %v3009 = vmax.f32 %v2973, 0.0
      %v3010 = vmax.f32 %v2974, 0.0
      %v3011 = vmax.f32 %v2975, 0.0
      %v3012 = vmax.f32 %v2976, 0.0
      %v3013 = vmax.f32 %v2977, 0.0
      %v3014 = vmax.f32 %v2978, 0.0
      %v3015 = vmax.f32 %v2979, 0.0
      %v3016 = vmax.f32 %v2980, 0.0
      %v3017 = vmax.f32 %v2981, 0.0
      %v3018 = vmax.f32 %v2982, 0.0
      %v3019 = vmax.f32 %v2983, 0.0
      %v3020 = vmax.f32 %v2984, 0.0
      %v3021 = vmax.f32 %v2985, 0.0
      %s3022 = scalar_lea.vmem %s1, 24
      %v3023 = vld [vmem:[%s3022] sm:$0xf]
      %v3025 = vsel %vm372, %v2986, 0
      %v3028 = vsel %vm372, %v2987, 0
      %v3031 = vsel %vm372, %v2988, 0
      %v3034 = vsel %vm372, %v2989, 0
      %v3037 = vsel %vm372, %v2990, 0
      %v3040 = vsel %vm372, %v2991, 0
      %v3043 = vsel %vm372, %v2992, 0
      %v3046 = vsel %vm372, %v2993, 0
      %v3049 = vsel %vm372, %v2994, 0
      %v3052 = vsel %vm372, %v2995, 0
      %v3055 = vsel %vm372, %v2996, 0
      %v3058 = vsel %vm372, %v2997, 0
      %v3061 = vsel %vm372, %v2998, 0
      %v3064 = vsel %vm372, %v2999, 0
      %v3067 = vsel %vm372, %v3000, 0
      %v3070 = vsel %vm372, %v3001, 0
      %v3073 = vsel %vm372, %v3002, 0
      %v3076 = vsel %vm372, %v3003, 0
      %v3079 = vsel %vm372, %v3004, 0
      %v3082 = vsel %vm372, %v3005, 0
      %v3085 = vsel %vm372, %v3006, 0
      %v3088 = vsel %vm372, %v3007, 0
      %v3091 = vsel %vm372, %v3008, 0
      %v3094 = vsel %vm372, %v3009, 0
      %v3097 = vsel %vm372, %v3010, 0
      %v3100 = vsel %vm372, %v3011, 0
      %v3103 = vsel %vm372, %v3012, 0
      %v3106 = vsel %vm372, %v3013, 0
      %v3109 = vsel %vm372, %v3014, 0
      %v3112 = vsel %vm372, %v3015, 0
      %v3115 = vsel %vm372, %v3016, 0
      %v3118 = vsel %vm372, %v3017, 0
      %v3121 = vsel %vm372, %v3018, 0
      %v3124 = vsel %vm372, %v3019, 0
      %v3127 = vsel %vm372, %v3020, 0
      %v3130 = vsel %vm372, %v3021, 0
      %v3133 = vsel %vm481, %v3023, 0
      %3135 = vmatprep.subr.mxu0 0.0
      %3136 = vmatpush1.msra.mxu0 %v3133
      %3137 = vmatprep.subr.mxu0 0.0
      %3138 = vmatpush1.msra.mxu0 0.0
      %3139 = vmatprep.subr.mxu0 0.0
      %3140 = vmatpush1.msra.mxu0 0.0
      %3141 = vmatprep.subr.mxu0 0.0
      %3142 = vmatpush1.msra.mxu0 0.0
      %3143 = vmatprep.subr.mxu0 0.0
      %3144 = vmatpush1.msra.mxu0 0.0
      %3145 = vmatprep.subr.mxu0 0.0
      %3146 = vmatpush1.msra.mxu0 0.0
      %3147 = vmatprep.subr.mxu0 0.0
      %3148 = vmatpush1.msra.mxu0 0.0
      %3149 = vmatprep.subr.mxu0 0.0
      %3150 = vmatpush1.msra.mxu0 0.0
      %3151 = vmatprep.subr.mxu0 0.0
      %3152 = vmatpush1.msra.mxu0 0.0
      %3153 = vmatprep.subr.mxu0 0.0
      %3154 = vmatpush1.msra.mxu0 0.0
      %3155 = vmatprep.subr.mxu0 0.0
      %3156 = vmatpush1.msra.mxu0 0.0
      %3157 = vmatprep.subr.mxu0 0.0
      %3158 = vmatpush1.msra.mxu0 0.0
      %3159 = vmatprep.subr.mxu0 0.0
      %3160 = vmatpush1.msra.mxu0 0.0
      %3161 = vmatprep.subr.mxu0 0.0
      %3162 = vmatpush1.msra.mxu0 0.0
      %3163 = vmatprep.subr.mxu0 0.0
      %3164 = vmatpush1.msra.mxu0 0.0
      %3165 = vmatprep.subr.mxu0 0.0
      %3166 = vmatpush1.msra.mxu0 0.0
      %3167 = vmatprep.subr.mxu0 0.0
      %3168 = vmatpush1.msra.mxu0 0.0
      %3169 = vmatprep.subr.mxu0 0.0
      %3170 = vmatpush1.msra.mxu0 0.0
      %3171 = vmatprep.subr.mxu0 0.0
      %3172 = vmatpush1.msra.mxu0 0.0
      %3173 = vmatprep.subr.mxu0 0.0
      %3174 = vmatpush1.msra.mxu0 0.0
      %3175 = vmatprep.subr.mxu0 0.0
      %3176 = vmatpush1.msra.mxu0 0.0
      %3177 = vmatprep.subr.mxu0 0.0
      %3178 = vmatpush1.msra.mxu0 0.0
      %3179 = vmatprep.subr.mxu0 0.0
      %3180 = vmatpush1.msra.mxu0 0.0
      %3181 = vmatprep.subr.mxu0 0.0
      %3182 = vmatpush1.msra.mxu0 0.0
      %3183 = vmatprep.subr.mxu0 0.0
      %3184 = vmatpush1.msra.mxu0 0.0
      %3185 = vmatprep.subr.mxu0 0.0
      %3186 = vmatpush1.msra.mxu0 0.0
      %3187 = vmatprep.subr.mxu0 0.0
      %3188 = vmatpush1.msra.mxu0 0.0
      %3189 = vmatprep.subr.mxu0 0.0
      %3190 = vmatpush1.msra.mxu0 0.0
      %3191 = vmatprep.subr.mxu0 0.0
      %3192 = vmatpush1.msra.mxu0 0.0
      %3193 = vmatprep.subr.mxu0 0.0
      %3194 = vmatpush1.msra.mxu0 0.0
      %3195 = vmatprep.subr.mxu0 0.0
      %3196 = vmatpush1.msra.mxu0 0.0
      %3197 = vmatprep.subr.mxu0 0.0
      %3198 = vmatpush1.msra.mxu0 0.0
      %3199 = vmatprep.mubr.f32.mxu0 0.0
      %3200 = vmatmul.mubr.f32.gmra.mrb[0].mxu0 %v3025
      %v3201 = vpop.f32.mrb[0].mxu0
      %v3202 = vadd.f32 0.0, %v3201
      %v3203 = vpop.f32.mrb[0].mxu0
      %3204 = vmatprep.mubr.f32.mxu0 0.0
      %3205 = vmatmul.mubr.f32.gmra.mrb[0].mxu0 %v3028
      %v3206 = vpop.f32.mrb[0].mxu0
      %v3207 = vadd.f32 0.0, %v3206
      %v3208 = vpop.f32.mrb[0].mxu0
      %3209 = vmatprep.mubr.f32.mxu0 0.0
      %3210 = vmatmul.mubr.f32.gmra.mrb[0].mxu0 %v3031
      %v3211 = vpop.f32.mrb[0].mxu0
      %v3212 = vadd.f32 0.0, %v3211
      %v3213 = vpop.f32.mrb[0].mxu0
      %3214 = vmatprep.mubr.f32.mxu0 0.0
      %3215 = vmatmul.mubr.f32.gmra.mrb[0].mxu0 %v3034
      %v3216 = vpop.f32.mrb[0].mxu0
      %v3217 = vadd.f32 0.0, %v3216
      %v3218 = vpop.f32.mrb[0].mxu0
      %3219 = vmatprep.mubr.f32.mxu0 0.0
      %3220 = vmatmul.mubr.f32.gmra.mrb[0].mxu0 %v3037
      %v3221 = vpop.f32.mrb[0].mxu0
      %v3222 = vadd.f32 0.0, %v3221
      %v3223 = vpop.f32.mrb[0].mxu0
      %3224 = vmatprep.mubr.f32.mxu0 0.0
      %3225 = vmatmul.mubr.f32.gmra.mrb[0].mxu0 %v3040
      %v3226 = vpop.f32.mrb[0].mxu0
      %v3227 = vadd.f32 0.0, %v3226
      %v3228 = vpop.f32.mrb[0].mxu0
      %3229 = vmatprep.mubr.f32.mxu0 0.0
      %3230 = vmatmul.mubr.f32.gmra.mrb[0].mxu0 %v3043
      %v3231 = vpop.f32.mrb[0].mxu0
      %v3232 = vadd.f32 0.0, %v3231
      %v3233 = vpop.f32.mrb[0].mxu0
      %3234 = vmatprep.mubr.f32.mxu0 0.0
      %3235 = vmatmul.mubr.f32.gmra.mrb[0].mxu0 %v3046
      %v3236 = vpop.f32.mrb[0].mxu0
      %v3237 = vadd.f32 0.0, %v3236
      %v3238 = vpop.f32.mrb[0].mxu0
      %3239 = vmatprep.mubr.f32.mxu0 0.0
      %3240 = vmatmul.mubr.f32.gmra.mrb[0].mxu0 %v3049
      %v3241 = vpop.f32.mrb[0].mxu0
      %v3242 = vadd.f32 0.0, %v3241
      %v3243 = vpop.f32.mrb[0].mxu0
      %3244 = vmatprep.mubr.f32.mxu0 0.0
      %3245 = vmatmul.mubr.f32.gmra.mrb[0].mxu0 %v3052
      %v3246 = vpop.f32.mrb[0].mxu0
      %v3247 = vadd.f32 0.0, %v3246
      %v3248 = vpop.f32.mrb[0].mxu0
      %3249 = vmatprep.mubr.f32.mxu0 0.0
      %3250 = vmatmul.mubr.f32.gmra.mrb[0].mxu0 %v3055
      %v3251 = vpop.f32.mrb[0].mxu0
      %v3252 = vadd.f32 0.0, %v3251
      %v3253 = vpop.f32.mrb[0].mxu0
      %3254 = vmatprep.mubr.f32.mxu0 0.0
      %3255 = vmatmul.mubr.f32.gmra.mrb[0].mxu0 %v3058
      %v3256 = vpop.f32.mrb[0].mxu0
      %v3257 = vadd.f32 0.0, %v3256
      %v3258 = vpop.f32.mrb[0].mxu0
      %3259 = vmatprep.mubr.f32.mxu0 0.0
      %3260 = vmatmul.mubr.f32.gmra.mrb[0].mxu0 %v3061
      %v3261 = vpop.f32.mrb[0].mxu0
      %v3262 = vadd.f32 0.0, %v3261
      %v3263 = vpop.f32.mrb[0].mxu0
      %3264 = vmatprep.mubr.f32.mxu0 0.0
      %3265 = vmatmul.mubr.f32.gmra.mrb[0].mxu0 %v3064
      %v3266 = vpop.f32.mrb[0].mxu0
      %v3267 = vadd.f32 0.0, %v3266
      %v3268 = vpop.f32.mrb[0].mxu0
      %3269 = vmatprep.mubr.f32.mxu0 0.0
      %3270 = vmatmul.mubr.f32.gmra.mrb[0].mxu0 %v3067
      %v3271 = vpop.f32.mrb[0].mxu0
      %v3272 = vadd.f32 0.0, %v3271
      %v3273 = vpop.f32.mrb[0].mxu0
      %3274 = vmatprep.mubr.f32.mxu0 0.0
      %3275 = vmatmul.mubr.f32.gmra.mrb[0].mxu0 %v3070
      %v3276 = vpop.f32.mrb[0].mxu0
      %v3277 = vadd.f32 0.0, %v3276
      %v3278 = vpop.f32.mrb[0].mxu0
      %3279 = vmatprep.mubr.f32.mxu0 0.0
      %3280 = vmatmul.mubr.f32.gmra.mrb[0].mxu0 %v3073
      %v3281 = vpop.f32.mrb[0].mxu0
      %v3282 = vadd.f32 0.0, %v3281
      %v3283 = vpop.f32.mrb[0].mxu0
      %3284 = vmatprep.mubr.f32.mxu0 0.0
      %3285 = vmatmul.mubr.f32.gmra.mrb[0].mxu0 %v3076
      %v3286 = vpop.f32.mrb[0].mxu0
      %v3287 = vadd.f32 0.0, %v3286
      %v3288 = vpop.f32.mrb[0].mxu0
      %3289 = vmatprep.mubr.f32.mxu0 0.0
      %3290 = vmatmul.mubr.f32.gmra.mrb[0].mxu0 %v3079
      %v3291 = vpop.f32.mrb[0].mxu0
      %v3292 = vadd.f32 0.0, %v3291
      %v3293 = vpop.f32.mrb[0].mxu0
      %3294 = vmatprep.mubr.f32.mxu0 0.0
      %3295 = vmatmul.mubr.f32.gmra.mrb[0].mxu0 %v3082
      %v3296 = vpop.f32.mrb[0].mxu0
      %v3297 = vadd.f32 0.0, %v3296
      %v3298 = vpop.f32.mrb[0].mxu0
      %3299 = vmatprep.mubr.f32.mxu0 0.0
      %3300 = vmatmul.mubr.f32.gmra.mrb[0].mxu0 %v3085
      %v3301 = vpop.f32.mrb[0].mxu0
      %v3302 = vadd.f32 0.0, %v3301
      %v3303 = vpop.f32.mrb[0].mxu0
      %3304 = vmatprep.mubr.f32.mxu0 0.0
      %3305 = vmatmul.mubr.f32.gmra.mrb[0].mxu0 %v3088
      %v3306 = vpop.f32.mrb[0].mxu0
      %v3307 = vadd.f32 0.0, %v3306
      %v3308 = vpop.f32.mrb[0].mxu0
      %3309 = vmatprep.mubr.f32.mxu0 0.0
      %3310 = vmatmul.mubr.f32.gmra.mrb[0].mxu0 %v3091
      %v3311 = vpop.f32.mrb[0].mxu0
      %v3312 = vadd.f32 0.0, %v3311
      %v3313 = vpop.f32.mrb[0].mxu0
      %3314 = vmatprep.mubr.f32.mxu0 0.0
      %3315 = vmatmul.mubr.f32.gmra.mrb[0].mxu0 %v3094
      %v3316 = vpop.f32.mrb[0].mxu0
      %v3317 = vadd.f32 0.0, %v3316
      %v3318 = vpop.f32.mrb[0].mxu0
      %3319 = vmatprep.mubr.f32.mxu0 0.0
      %3320 = vmatmul.mubr.f32.gmra.mrb[0].mxu0 %v3097
      %v3321 = vpop.f32.mrb[0].mxu0
      %v3322 = vadd.f32 0.0, %v3321
      %v3323 = vpop.f32.mrb[0].mxu0
      %3324 = vmatprep.mubr.f32.mxu0 0.0
      %3325 = vmatmul.mubr.f32.gmra.mrb[0].mxu0 %v3100
      %v3326 = vpop.f32.mrb[0].mxu0
      %v3327 = vadd.f32 0.0, %v3326
      %v3328 = vpop.f32.mrb[0].mxu0
      %3329 = vmatprep.mubr.f32.mxu0 0.0
      %3330 = vmatmul.mubr.f32.gmra.mrb[0].mxu0 %v3103
      %v3331 = vpop.f32.mrb[0].mxu0
      %v3332 = vadd.f32 0.0, %v3331
      %v3333 = vpop.f32.mrb[0].mxu0
      %3334 = vmatprep.mubr.f32.mxu0 0.0
      %3335 = vmatmul.mubr.f32.gmra.mrb[0].mxu0 %v3106
      %v3336 = vpop.f32.mrb[0].mxu0
      %v3337 = vadd.f32 0.0, %v3336
      %v3338 = vpop.f32.mrb[0].mxu0
      %3339 = vmatprep.mubr.f32.mxu0 0.0
      %3340 = vmatmul.mubr.f32.gmra.mrb[0].mxu0 %v3109
      %v3341 = vpop.f32.mrb[0].mxu0
      %v3342 = vadd.f32 0.0, %v3341
      %v3343 = vpop.f32.mrb[0].mxu0
      %3344 = vmatprep.mubr.f32.mxu0 0.0
      %3345 = vmatmul.mubr.f32.gmra.mrb[0].mxu0 %v3112
      %v3346 = vpop.f32.mrb[0].mxu0
      %v3347 = vadd.f32 0.0, %v3346
      %v3348 = vpop.f32.mrb[0].mxu0
      %3349 = vmatprep.mubr.f32.mxu0 0.0
      %3350 = vmatmul.mubr.f32.gmra.mrb[0].mxu0 %v3115
      %v3351 = vpop.f32.mrb[0].mxu0
      %v3352 = vadd.f32 0.0, %v3351
      %v3353 = vpop.f32.mrb[0].mxu0
      %3354 = vmatprep.mubr.f32.mxu0 0.0
      %3355 = vmatmul.mubr.f32.gmra.mrb[0].mxu0 %v3118
      %v3356 = vpop.f32.mrb[0].mxu0
      %v3357 = vadd.f32 0.0, %v3356
      %v3358 = vpop.f32.mrb[0].mxu0
      %3359 = vmatprep.mubr.f32.mxu0 0.0
      %3360 = vmatmul.mubr.f32.gmra.mrb[0].mxu0 %v3121
      %v3361 = vpop.f32.mrb[0].mxu0
      %v3362 = vadd.f32 0.0, %v3361
      %v3363 = vpop.f32.mrb[0].mxu0
      %3364 = vmatprep.mubr.f32.mxu0 0.0
      %3365 = vmatmul.mubr.f32.gmra.mrb[0].mxu0 %v3124
      %v3366 = vpop.f32.mrb[0].mxu0
      %v3367 = vadd.f32 0.0, %v3366
      %v3368 = vpop.f32.mrb[0].mxu0
      %3369 = vmatprep.mubr.f32.mxu0 0.0
      %3370 = vmatmul.mubr.f32.gmra.mrb[0].mxu0 %v3127
      %v3371 = vpop.f32.mrb[0].mxu0
      %v3372 = vadd.f32 0.0, %v3371
      %v3373 = vpop.f32.mrb[0].mxu0
      %3374 = vmatprep.mubr.f32.mxu0 0.0
      %3375 = vmatmul.mubr.f32.gmra.mrb[0].mxu0 %v3130
      %v3376 = vpop.f32.mrb[0].mxu0
      %v3377 = vadd.f32 0.0, %v3376
      %v3378 = vpop.f32.mrb[0].mxu0
      %3379 = vdwg.mxu0
      %v3380 = vadd.f32 %v2914, %v3202
      %v3381 = vadd.f32 %v2915, %v3207
      %v3382 = vadd.f32 %v2916, %v3212
      %v3383 = vadd.f32 %v2917, %v3217
      %v3384 = vadd.f32 %v2918, %v3222
      %v3385 = vadd.f32 %v2919, %v3227
      %v3386 = vadd.f32 %v2920, %v3232
      %v3387 = vadd.f32 %v2921, %v3237
      %v3388 = vadd.f32 %v2922, %v3242
      %v3389 = vadd.f32 %v2923, %v3247
      %v3390 = vadd.f32 %v2924, %v3252
      %v3391 = vadd.f32 %v2925, %v3257
      %v3392 = vadd.f32 %v2926, %v3262
      %v3393 = vadd.f32 %v2927, %v3267
      %v3394 = vadd.f32 %v2928, %v3272
      %v3395 = vadd.f32 %v2929, %v3277
      %v3396 = vadd.f32 %v2930, %v3282
      %v3397 = vadd.f32 %v2931, %v3287
      %v3398 = vadd.f32 %v2932, %v3292
      %v3399 = vadd.f32 %v2933, %v3297
      %v3400 = vadd.f32 %v2934, %v3302
      %v3401 = vadd.f32 %v2935, %v3307
      %v3402 = vadd.f32 %v2936, %v3312
      %v3403 = vadd.f32 %v2937, %v3317
      %v3404 = vadd.f32 %v2938, %v3322
      %v3405 = vadd.f32 %v2939, %v3327
      %v3406 = vadd.f32 %v2940, %v3332
      %v3407 = vadd.f32 %v2941, %v3337
      %v3408 = vadd.f32 %v2942, %v3342
      %v3409 = vadd.f32 %v2943, %v3347
      %v3410 = vadd.f32 %v2944, %v3352
      %v3411 = vadd.f32 %v2945, %v3357
      %v3412 = vadd.f32 %v2946, %v3362
      %v3413 = vadd.f32 %v2947, %v3367
      %v3414 = vadd.f32 %v2948, %v3372
      %v3415 = vadd.f32 %v2949, %v3377
      %v3416 = vld [vmem:[%s219 + $0x25] sm:$0xff]
      %v3417 = vld [vmem:[%s219 + $0x2d] sm:$0xff]
      %v3418 = vld [vmem:[%s219 + $0x35] sm:$0xff]
      %v3419 = vld [vmem:[%s219 + $0x3d] sm:$0xff]
      %v3420 = vld [vmem:[%s219 + $0x45] sm:$0xff]
      %v3421 = vld [vmem:[%s219 + $0x4d] sm:$0xff]
      %v3422 = vld [vmem:[%s219 + $0x55] sm:$0xff]
      %v3423 = vld [vmem:[%s219 + $0x5d] sm:$0xff]
      %v3424 = vld [vmem:[%s219 + $0x65] sm:$0xff]
      %v3425 = vld [vmem:[%s219 + $0x6d] sm:$0xff]
      %v3426 = vld [vmem:[%s219 + $0x75] sm:$0xff]
      %v3427 = vld [vmem:[%s219 + $0x7d] sm:$0xff]
      %v3428 = vld [vmem:[%s219 + $0x85] sm:$0xff]
      %v3429 = vld [vmem:[%s219 + $0x8d] sm:$0xff]
      %v3430 = vld [vmem:[%s219 + $0x95] sm:$0xff]
      %v3431 = vld [vmem:[%s219 + $0x9d] sm:$0xff]
      %v3432 = vld [vmem:[%s219 + $0xa5] sm:$0xff]
      %v3433 = vld [vmem:[%s219 + $0xad] sm:$0xff]
      %v3434 = vld [vmem:[%s219 + $0xb5] sm:$0xff]
      %v3435 = vld [vmem:[%s219 + $0xbd] sm:$0xff]
      %v3436 = vld [vmem:[%s219 + $0xc5] sm:$0xff]
      %v3437 = vld [vmem:[%s219 + $0xcd] sm:$0xff]
      %v3438 = vld [vmem:[%s219 + $0xd5] sm:$0xff]
      %v3439 = vld [vmem:[%s219 + $0xdd] sm:$0xff]
      %v3440 = vld [vmem:[%s219 + $0xe5] sm:$0xff]
      %v3441 = vld [vmem:[%s219 + $0xed] sm:$0xff]
      %v3442 = vld [vmem:[%s219 + $0xf5] sm:$0xff]
      %v3443 = vld [vmem:[%s219 + $0xfd] sm:$0xff]
      %v3444 = vld [vmem:[%s219 + $0x105] sm:$0xff]
      %v3445 = vld [vmem:[%s219 + $0x10d] sm:$0xff]
      %v3446 = vld [vmem:[%s219 + $0x115] sm:$0xff]
      %v3447 = vld [vmem:[%s219 + $0x11d] sm:$0xff]
      %v3448 = vld [vmem:[%s219 + $0x125] sm:$0xff]
      %v3449 = vld [vmem:[%s219 + $0x12d] sm:$0xff]
      %v3450 = vld [vmem:[%s219 + $0x135] sm:$0xff]
      %v3451 = vld [vmem:[%s219 + $0x13d] sm:$0xff]
      %v3452 = vmax.f32 %v3416, 0.0
      %v3453 = vmax.f32 %v3417, 0.0
      %v3454 = vmax.f32 %v3418, 0.0
      %v3455 = vmax.f32 %v3419, 0.0
      %v3456 = vmax.f32 %v3420, 0.0
      %v3457 = vmax.f32 %v3421, 0.0
      %v3458 = vmax.f32 %v3422, 0.0
      %v3459 = vmax.f32 %v3423, 0.0
      %v3460 = vmax.f32 %v3424, 0.0
      %v3461 = vmax.f32 %v3425, 0.0
      %v3462 = vmax.f32 %v3426, 0.0
      %v3463 = vmax.f32 %v3427, 0.0
      %v3464 = vmax.f32 %v3428, 0.0
      %v3465 = vmax.f32 %v3429, 0.0
      %v3466 = vmax.f32 %v3430, 0.0
      %v3467 = vmax.f32 %v3431, 0.0
      %v3468 = vmax.f32 %v3432, 0.0
      %v3469 = vmax.f32 %v3433, 0.0
      %v3470 = vmax.f32 %v3434, 0.0
      %v3471 = vmax.f32 %v3435, 0.0
      %v3472 = vmax.f32 %v3436, 0.0
      %v3473 = vmax.f32 %v3437, 0.0
      %v3474 = vmax.f32 %v3438, 0.0
      %v3475 = vmax.f32 %v3439, 0.0
      %v3476 = vmax.f32 %v3440, 0.0
      %v3477 = vmax.f32 %v3441, 0.0
      %v3478 = vmax.f32 %v3442, 0.0
      %v3479 = vmax.f32 %v3443, 0.0
      %v3480 = vmax.f32 %v3444, 0.0
      %v3481 = vmax.f32 %v3445, 0.0
      %v3482 = vmax.f32 %v3446, 0.0
      %v3483 = vmax.f32 %v3447, 0.0
      %v3484 = vmax.f32 %v3448, 0.0
      %v3485 = vmax.f32 %v3449, 0.0
      %v3486 = vmax.f32 %v3450, 0.0
      %v3487 = vmax.f32 %v3451, 0.0
      %s3488 = scalar_lea.vmem %s1, 28
      %v3489 = vld [vmem:[%s3488] sm:$0xf]
      %v3491 = vsel %vm372, %v3452, 0
      %v3494 = vsel %vm372, %v3453, 0
      %v3497 = vsel %vm372, %v3454, 0
      %v3500 = vsel %vm372, %v3455, 0
      %v3503 = vsel %vm372, %v3456, 0
      %v3506 = vsel %vm372, %v3457, 0
      %v3509 = vsel %vm372, %v3458, 0
      %v3512 = vsel %vm372, %v3459, 0
      %v3515 = vsel %vm372, %v3460, 0
      %v3518 = vsel %vm372, %v3461, 0
      %v3521 = vsel %vm372, %v3462, 0
      %v3524 = vsel %vm372, %v3463, 0
      %v3527 = vsel %vm372, %v3464, 0
      %v3530 = vsel %vm372, %v3465, 0
      %v3533 = vsel %vm372, %v3466, 0
      %v3536 = vsel %vm372, %v3467, 0
      %v3539 = vsel %vm372, %v3468, 0
      %v3542 = vsel %vm372, %v3469, 0
      %v3545 = vsel %vm372, %v3470, 0
      %v3548 = vsel %vm372, %v3471, 0
      %v3551 = vsel %vm372, %v3472, 0
      %v3554 = vsel %vm372, %v3473, 0
      %v3557 = vsel %vm372, %v3474, 0
      %v3560 = vsel %vm372, %v3475, 0
      %v3563 = vsel %vm372, %v3476, 0
      %v3566 = vsel %vm372, %v3477, 0
      %v3569 = vsel %vm372, %v3478, 0
      %v3572 = vsel %vm372, %v3479, 0
      %v3575 = vsel %vm372, %v3480, 0
      %v3578 = vsel %vm372, %v3481, 0
      %v3581 = vsel %vm372, %v3482, 0
      %v3584 = vsel %vm372, %v3483, 0
      %v3587 = vsel %vm372, %v3484, 0
      %v3590 = vsel %vm372, %v3485, 0
      %v3593 = vsel %vm372, %v3486, 0
      %v3596 = vsel %vm372, %v3487, 0
      %v3599 = vsel %vm481, %v3489, 0
      %3601 = vmatprep.subr.mxu0 0.0
      %3602 = vmatpush1.msra.mxu0 %v3599
      %3603 = vmatprep.subr.mxu0 0.0
      %3604 = vmatpush1.msra.mxu0 0.0
      %3605 = vmatprep.subr.mxu0 0.0
      %3606 = vmatpush1.msra.mxu0 0.0
      %3607 = vmatprep.subr.mxu0 0.0
      %3608 = vmatpush1.msra.mxu0 0.0
      %3609 = vmatprep.subr.mxu0 0.0
      %3610 = vmatpush1.msra.mxu0 0.0
      %3611 = vmatprep.subr.mxu0 0.0
      %3612 = vmatpush1.msra.mxu0 0.0
      %3613 = vmatprep.subr.mxu0 0.0
      %3614 = vmatpush1.msra.mxu0 0.0
      %3615 = vmatprep.subr.mxu0 0.0
      %3616 = vmatpush1.msra.mxu0 0.0
      %3617 = vmatprep.subr.mxu0 0.0
      %3618 = vmatpush1.msra.mxu0 0.0
      %3619 = vmatprep.subr.mxu0 0.0
      %3620 = vmatpush1.msra.mxu0 0.0
      %3621 = vmatprep.subr.mxu0 0.0
      %3622 = vmatpush1.msra.mxu0 0.0
      %3623 = vmatprep.subr.mxu0 0.0
      %3624 = vmatpush1.msra.mxu0 0.0
      %3625 = vmatprep.subr.mxu0 0.0
      %3626 = vmatpush1.msra.mxu0 0.0
      %3627 = vmatprep.subr.mxu0 0.0
      %3628 = vmatpush1.msra.mxu0 0.0
      %3629 = vmatprep.subr.mxu0 0.0
      %3630 = vmatpush1.msra.mxu0 0.0
      %3631 = vmatprep.subr.mxu0 0.0
      %3632 = vmatpush1.msra.mxu0 0.0
      %3633 = vmatprep.subr.mxu0 0.0
      %3634 = vmatpush1.msra.mxu0 0.0
      %3635 = vmatprep.subr.mxu0 0.0
      %3636 = vmatpush1.msra.mxu0 0.0
      %3637 = vmatprep.subr.mxu0 0.0
      %3638 = vmatpush1.msra.mxu0 0.0
      %3639 = vmatprep.subr.mxu0 0.0
      %3640 = vmatpush1.msra.mxu0 0.0
      %3641 = vmatprep.subr.mxu0 0.0
      %3642 = vmatpush1.msra.mxu0 0.0
      %3643 = vmatprep.subr.mxu0 0.0
      %3644 = vmatpush1.msra.mxu0 0.0
      %3645 = vmatprep.subr.mxu0 0.0
      %3646 = vmatpush1.msra.mxu0 0.0
      %3647 = vmatprep.subr.mxu0 0.0
      %3648 = vmatpush1.msra.mxu0 0.0
      %3649 = vmatprep.subr.mxu0 0.0
      %3650 = vmatpush1.msra.mxu0 0.0
      %3651 = vmatprep.subr.mxu0 0.0
      %3652 = vmatpush1.msra.mxu0 0.0
      %3653 = vmatprep.subr.mxu0 0.0
      %3654 = vmatpush1.msra.mxu0 0.0
      %3655 = vmatprep.subr.mxu0 0.0
      %3656 = vmatpush1.msra.mxu0 0.0
      %3657 = vmatprep.subr.mxu0 0.0
      %3658 = vmatpush1.msra.mxu0 0.0
      %3659 = vmatprep.subr.mxu0 0.0
      %3660 = vmatpush1.msra.mxu0 0.0
      %3661 = vmatprep.subr.mxu0 0.0
      %3662 = vmatpush1.msra.mxu0 0.0
      %3663 = vmatprep.subr.mxu0 0.0
      %3664 = vmatpush1.msra.mxu0 0.0
      %3665 = vmatprep.mubr.f32.mxu0 0.0
      %3666 = vmatmul.mubr.f32.gmra.mrb[0].mxu0 %v3491
      %v3667 = vpop.f32.mrb[0].mxu0
      %v3668 = vadd.f32 0.0, %v3667
      %v3669 = vpop.f32.mrb[0].mxu0
      %3670 = vmatprep.mubr.f32.mxu0 0.0
      %3671 = vmatmul.mubr.f32.gmra.mrb[0].mxu0 %v3494
      %v3672 = vpop.f32.mrb[0].mxu0
      %v3673 = vadd.f32 0.0, %v3672
      %v3674 = vpop.f32.mrb[0].mxu0
      %3675 = vmatprep.mubr.f32.mxu0 0.0
      %3676 = vmatmul.mubr.f32.gmra.mrb[0].mxu0 %v3497
      %v3677 = vpop.f32.mrb[0].mxu0
      %v3678 = vadd.f32 0.0, %v3677
      %v3679 = vpop.f32.mrb[0].mxu0
      %3680 = vmatprep.mubr.f32.mxu0 0.0
      %3681 = vmatmul.mubr.f32.gmra.mrb[0].mxu0 %v3500
      %v3682 = vpop.f32.mrb[0].mxu0
      %v3683 = vadd.f32 0.0, %v3682
      %v3684 = vpop.f32.mrb[0].mxu0
      %3685 = vmatprep.mubr.f32.mxu0 0.0
      %3686 = vmatmul.mubr.f32.gmra.mrb[0].mxu0 %v3503
      %v3687 = vpop.f32.mrb[0].mxu0
      %v3688 = vadd.f32 0.0, %v3687
      %v3689 = vpop.f32.mrb[0].mxu0
      %3690 = vmatprep.mubr.f32.mxu0 0.0
      %3691 = vmatmul.mubr.f32.gmra.mrb[0].mxu0 %v3506
      %v3692 = vpop.f32.mrb[0].mxu0
      %v3693 = vadd.f32 0.0, %v3692
      %v3694 = vpop.f32.mrb[0].mxu0
      %3695 = vmatprep.mubr.f32.mxu0 0.0
      %3696 = vmatmul.mubr.f32.gmra.mrb[0].mxu0 %v3509
      %v3697 = vpop.f32.mrb[0].mxu0
      %v3698 = vadd.f32 0.0, %v3697
      %v3699 = vpop.f32.mrb[0].mxu0
      %3700 = vmatprep.mubr.f32.mxu0 0.0
      %3701 = vmatmul.mubr.f32.gmra.mrb[0].mxu0 %v3512
      %v3702 = vpop.f32.mrb[0].mxu0
      %v3703 = vadd.f32 0.0, %v3702
      %v3704 = vpop.f32.mrb[0].mxu0
      %3705 = vmatprep.mubr.f32.mxu0 0.0
      %3706 = vmatmul.mubr.f32.gmra.mrb[0].mxu0 %v3515
      %v3707 = vpop.f32.mrb[0].mxu0
      %v3708 = vadd.f32 0.0, %v3707
      %v3709 = vpop.f32.mrb[0].mxu0
      %3710 = vmatprep.mubr.f32.mxu0 0.0
      %3711 = vmatmul.mubr.f32.gmra.mrb[0].mxu0 %v3518
      %v3712 = vpop.f32.mrb[0].mxu0
      %v3713 = vadd.f32 0.0, %v3712
      %v3714 = vpop.f32.mrb[0].mxu0
      %3715 = vmatprep.mubr.f32.mxu0 0.0
      %3716 = vmatmul.mubr.f32.gmra.mrb[0].mxu0 %v3521
      %v3717 = vpop.f32.mrb[0].mxu0
      %v3718 = vadd.f32 0.0, %v3717
      %v3719 = vpop.f32.mrb[0].mxu0
      %3720 = vmatprep.mubr.f32.mxu0 0.0
      %3721 = vmatmul.mubr.f32.gmra.mrb[0].mxu0 %v3524
      %v3722 = vpop.f32.mrb[0].mxu0
      %v3723 = vadd.f32 0.0, %v3722
      %v3724 = vpop.f32.mrb[0].mxu0
      %3725 = vmatprep.mubr.f32.mxu0 0.0
      %3726 = vmatmul.mubr.f32.gmra.mrb[0].mxu0 %v3527
      %v3727 = vpop.f32.mrb[0].mxu0
      %v3728 = vadd.f32 0.0, %v3727
      %v3729 = vpop.f32.mrb[0].mxu0
      %3730 = vmatprep.mubr.f32.mxu0 0.0
      %3731 = vmatmul.mubr.f32.gmra.mrb[0].mxu0 %v3530
      %v3732 = vpop.f32.mrb[0].mxu0
      %v3733 = vadd.f32 0.0, %v3732
      %v3734 = vpop.f32.mrb[0].mxu0
      %3735 = vmatprep.mubr.f32.mxu0 0.0
      %3736 = vmatmul.mubr.f32.gmra.mrb[0].mxu0 %v3533
      %v3737 = vpop.f32.mrb[0].mxu0
      %v3738 = vadd.f32 0.0, %v3737
      %v3739 = vpop.f32.mrb[0].mxu0
      %3740 = vmatprep.mubr.f32.mxu0 0.0
      %3741 = vmatmul.mubr.f32.gmra.mrb[0].mxu0 %v3536
      %v3742 = vpop.f32.mrb[0].mxu0
      %v3743 = vadd.f32 0.0, %v3742
      %v3744 = vpop.f32.mrb[0].mxu0
      %3745 = vmatprep.mubr.f32.mxu0 0.0
      %3746 = vmatmul.mubr.f32.gmra.mrb[0].mxu0 %v3539
      %v3747 = vpop.f32.mrb[0].mxu0
      %v3748 = vadd.f32 0.0, %v3747
      %v3749 = vpop.f32.mrb[0].mxu0
      %3750 = vmatprep.mubr.f32.mxu0 0.0
      %3751 = vmatmul.mubr.f32.gmra.mrb[0].mxu0 %v3542
      %v3752 = vpop.f32.mrb[0].mxu0
      %v3753 = vadd.f32 0.0, %v3752
      %v3754 = vpop.f32.mrb[0].mxu0
      %3755 = vmatprep.mubr.f32.mxu0 0.0
      %3756 = vmatmul.mubr.f32.gmra.mrb[0].mxu0 %v3545
      %v3757 = vpop.f32.mrb[0].mxu0
      %v3758 = vadd.f32 0.0, %v3757
      %v3759 = vpop.f32.mrb[0].mxu0
      %3760 = vmatprep.mubr.f32.mxu0 0.0
      %3761 = vmatmul.mubr.f32.gmra.mrb[0].mxu0 %v3548
      %v3762 = vpop.f32.mrb[0].mxu0
      %v3763 = vadd.f32 0.0, %v3762
      %v3764 = vpop.f32.mrb[0].mxu0
      %3765 = vmatprep.mubr.f32.mxu0 0.0
      %3766 = vmatmul.mubr.f32.gmra.mrb[0].mxu0 %v3551
      %v3767 = vpop.f32.mrb[0].mxu0
      %v3768 = vadd.f32 0.0, %v3767
      %v3769 = vpop.f32.mrb[0].mxu0
      %3770 = vmatprep.mubr.f32.mxu0 0.0
      %3771 = vmatmul.mubr.f32.gmra.mrb[0].mxu0 %v3554
      %v3772 = vpop.f32.mrb[0].mxu0
      %v3773 = vadd.f32 0.0, %v3772
      %v3774 = vpop.f32.mrb[0].mxu0
      %3775 = vmatprep.mubr.f32.mxu0 0.0
      %3776 = vmatmul.mubr.f32.gmra.mrb[0].mxu0 %v3557
      %v3777 = vpop.f32.mrb[0].mxu0
      %v3778 = vadd.f32 0.0, %v3777
      %v3779 = vpop.f32.mrb[0].mxu0
      %3780 = vmatprep.mubr.f32.mxu0 0.0
      %3781 = vmatmul.mubr.f32.gmra.mrb[0].mxu0 %v3560
      %v3782 = vpop.f32.mrb[0].mxu0
      %v3783 = vadd.f32 0.0, %v3782
      %v3784 = vpop.f32.mrb[0].mxu0
      %3785 = vmatprep.mubr.f32.mxu0 0.0
      %3786 = vmatmul.mubr.f32.gmra.mrb[0].mxu0 %v3563
      %v3787 = vpop.f32.mrb[0].mxu0
      %v3788 = vadd.f32 0.0, %v3787
      %v3789 = vpop.f32.mrb[0].mxu0
      %3790 = vmatprep.mubr.f32.mxu0 0.0
      %3791 = vmatmul.mubr.f32.gmra.mrb[0].mxu0 %v3566
      %v3792 = vpop.f32.mrb[0].mxu0
      %v3793 = vadd.f32 0.0, %v3792
      %v3794 = vpop.f32.mrb[0].mxu0
      %3795 = vmatprep.mubr.f32.mxu0 0.0
      %3796 = vmatmul.mubr.f32.gmra.mrb[0].mxu0 %v3569
      %v3797 = vpop.f32.mrb[0].mxu0
      %v3798 = vadd.f32 0.0, %v3797
      %v3799 = vpop.f32.mrb[0].mxu0
      %3800 = vmatprep.mubr.f32.mxu0 0.0
      %3801 = vmatmul.mubr.f32.gmra.mrb[0].mxu0 %v3572
      %v3802 = vpop.f32.mrb[0].mxu0
      %v3803 = vadd.f32 0.0, %v3802
      %v3804 = vpop.f32.mrb[0].mxu0
      %3805 = vmatprep.mubr.f32.mxu0 0.0
      %3806 = vmatmul.mubr.f32.gmra.mrb[0].mxu0 %v3575
      %v3807 = vpop.f32.mrb[0].mxu0
      %v3808 = vadd.f32 0.0, %v3807
      %v3809 = vpop.f32.mrb[0].mxu0
      %3810 = vmatprep.mubr.f32.mxu0 0.0
      %3811 = vmatmul.mubr.f32.gmra.mrb[0].mxu0 %v3578
      %v3812 = vpop.f32.mrb[0].mxu0
      %v3813 = vadd.f32 0.0, %v3812
      %v3814 = vpop.f32.mrb[0].mxu0
      %3815 = vmatprep.mubr.f32.mxu0 0.0
      %3816 = vmatmul.mubr.f32.gmra.mrb[0].mxu0 %v3581
      %v3817 = vpop.f32.mrb[0].mxu0
      %v3818 = vadd.f32 0.0, %v3817
      %v3819 = vpop.f32.mrb[0].mxu0
      %3820 = vmatprep.mubr.f32.mxu0 0.0
      %3821 = vmatmul.mubr.f32.gmra.mrb[0].mxu0 %v3584
      %v3822 = vpop.f32.mrb[0].mxu0
      %v3823 = vadd.f32 0.0, %v3822
      %v3824 = vpop.f32.mrb[0].mxu0
      %3825 = vmatprep.mubr.f32.mxu0 0.0
      %3826 = vmatmul.mubr.f32.gmra.mrb[0].mxu0 %v3587
      %v3827 = vpop.f32.mrb[0].mxu0
      %v3828 = vadd.f32 0.0, %v3827
      %v3829 = vpop.f32.mrb[0].mxu0
      %3830 = vmatprep.mubr.f32.mxu0 0.0
      %3831 = vmatmul.mubr.f32.gmra.mrb[0].mxu0 %v3590
      %v3832 = vpop.f32.mrb[0].mxu0
      %v3833 = vadd.f32 0.0, %v3832
      %v3834 = vpop.f32.mrb[0].mxu0
      %3835 = vmatprep.mubr.f32.mxu0 0.0
      %3836 = vmatmul.mubr.f32.gmra.mrb[0].mxu0 %v3593
      %v3837 = vpop.f32.mrb[0].mxu0
      %v3838 = vadd.f32 0.0, %v3837
      %v3839 = vpop.f32.mrb[0].mxu0
      %3840 = vmatprep.mubr.f32.mxu0 0.0
      %3841 = vmatmul.mubr.f32.gmra.mrb[0].mxu0 %v3596
      %v3842 = vpop.f32.mrb[0].mxu0
      %v3843 = vadd.f32 0.0, %v3842
      %v3844 = vpop.f32.mrb[0].mxu0
      %3845 = vdwg.mxu0
      %v3846 = vadd.f32 %v3380, %v3668
      %v3847 = vadd.f32 %v3381, %v3673
      %v3848 = vadd.f32 %v3382, %v3678
      %v3849 = vadd.f32 %v3383, %v3683
      %v3850 = vadd.f32 %v3384, %v3688
      %v3851 = vadd.f32 %v3385, %v3693
      %v3852 = vadd.f32 %v3386, %v3698
      %v3853 = vadd.f32 %v3387, %v3703
      %v3854 = vadd.f32 %v3388, %v3708
      %v3855 = vadd.f32 %v3389, %v3713
      %v3856 = vadd.f32 %v3390, %v3718
      %v3857 = vadd.f32 %v3391, %v3723
      %v3858 = vadd.f32 %v3392, %v3728
      %v3859 = vadd.f32 %v3393, %v3733
      %v3860 = vadd.f32 %v3394, %v3738
      %v3861 = vadd.f32 %v3395, %v3743
      %v3862 = vadd.f32 %v3396, %v3748
      %v3863 = vadd.f32 %v3397, %v3753
      %v3864 = vadd.f32 %v3398, %v3758
      %v3865 = vadd.f32 %v3399, %v3763
      %v3866 = vadd.f32 %v3400, %v3768
      %v3867 = vadd.f32 %v3401, %v3773
      %v3868 = vadd.f32 %v3402, %v3778
      %v3869 = vadd.f32 %v3403, %v3783
      %v3870 = vadd.f32 %v3404, %v3788
      %v3871 = vadd.f32 %v3405, %v3793
      %v3872 = vadd.f32 %v3406, %v3798
      %v3873 = vadd.f32 %v3407, %v3803
      %v3874 = vadd.f32 %v3408, %v3808
      %v3875 = vadd.f32 %v3409, %v3813
      %v3876 = vadd.f32 %v3410, %v3818
      %v3877 = vadd.f32 %v3411, %v3823
      %v3878 = vadd.f32 %v3412, %v3828
      %v3879 = vadd.f32 %v3413, %v3833
      %v3880 = vadd.f32 %v3414, %v3838
      %v3881 = vadd.f32 %v3415, %v3843
      %v3882 = vld [vmem:[%s219 + $0x26] sm:$0xff]
      %v3883 = vld [vmem:[%s219 + $0x2e] sm:$0xff]
      %v3884 = vld [vmem:[%s219 + $0x36] sm:$0xff]
      %v3885 = vld [vmem:[%s219 + $0x3e] sm:$0xff]
      %v3886 = vld [vmem:[%s219 + $0x46] sm:$0xff]
      %v3887 = vld [vmem:[%s219 + $0x4e] sm:$0xff]
      %v3888 = vld [vmem:[%s219 + $0x56] sm:$0xff]
      %v3889 = vld [vmem:[%s219 + $0x5e] sm:$0xff]
      %v3890 = vld [vmem:[%s219 + $0x66] sm:$0xff]
      %v3891 = vld [vmem:[%s219 + $0x6e] sm:$0xff]
      %v3892 = vld [vmem:[%s219 + $0x76] sm:$0xff]
      %v3893 = vld [vmem:[%s219 + $0x7e] sm:$0xff]
      %v3894 = vld [vmem:[%s219 + $0x86] sm:$0xff]
      %v3895 = vld [vmem:[%s219 + $0x8e] sm:$0xff]
      %v3896 = vld [vmem:[%s219 + $0x96] sm:$0xff]
      %v3897 = vld [vmem:[%s219 + $0x9e] sm:$0xff]
      %v3898 = vld [vmem:[%s219 + $0xa6] sm:$0xff]
      %v3899 = vld [vmem:[%s219 + $0xae] sm:$0xff]
      %v3900 = vld [vmem:[%s219 + $0xb6] sm:$0xff]
      %v3901 = vld [vmem:[%s219 + $0xbe] sm:$0xff]
      %v3902 = vld [vmem:[%s219 + $0xc6] sm:$0xff]
      %v3903 = vld [vmem:[%s219 + $0xce] sm:$0xff]
      %v3904 = vld [vmem:[%s219 + $0xd6] sm:$0xff]
      %v3905 = vld [vmem:[%s219 + $0xde] sm:$0xff]
      %v3906 = vld [vmem:[%s219 + $0xe6] sm:$0xff]
      %v3907 = vld [vmem:[%s219 + $0xee] sm:$0xff]
      %v3908 = vld [vmem:[%s219 + $0xf6] sm:$0xff]
      %v3909 = vld [vmem:[%s219 + $0xfe] sm:$0xff]
      %v3910 = vld [vmem:[%s219 + $0x106] sm:$0xff]
      %v3911 = vld [vmem:[%s219 + $0x10e] sm:$0xff]
      %v3912 = vld [vmem:[%s219 + $0x116] sm:$0xff]
      %v3913 = vld [vmem:[%s219 + $0x11e] sm:$0xff]
      %v3914 = vld [vmem:[%s219 + $0x126] sm:$0xff]
      %v3915 = vld [vmem:[%s219 + $0x12e] sm:$0xff]
      %v3916 = vld [vmem:[%s219 + $0x136] sm:$0xff]
      %v3917 = vld [vmem:[%s219 + $0x13e] sm:$0xff]
      %v3918 = vmax.f32 %v3882, 0.0
      %v3919 = vmax.f32 %v3883, 0.0
      %v3920 = vmax.f32 %v3884, 0.0
      %v3921 = vmax.f32 %v3885, 0.0
      %v3922 = vmax.f32 %v3886, 0.0
      %v3923 = vmax.f32 %v3887, 0.0
      %v3924 = vmax.f32 %v3888, 0.0
      %v3925 = vmax.f32 %v3889, 0.0
      %v3926 = vmax.f32 %v3890, 0.0
      %v3927 = vmax.f32 %v3891, 0.0
      %v3928 = vmax.f32 %v3892, 0.0
      %v3929 = vmax.f32 %v3893, 0.0
      %v3930 = vmax.f32 %v3894, 0.0
      %v3931 = vmax.f32 %v3895, 0.0
      %v3932 = vmax.f32 %v3896, 0.0
      %v3933 = vmax.f32 %v3897, 0.0
      %v3934 = vmax.f32 %v3898, 0.0
      %v3935 = vmax.f32 %v3899, 0.0
      %v3936 = vmax.f32 %v3900, 0.0
      %v3937 = vmax.f32 %v3901, 0.0
      %v3938 = vmax.f32 %v3902, 0.0
      %v3939 = vmax.f32 %v3903, 0.0
      %v3940 = vmax.f32 %v3904, 0.0
      %v3941 = vmax.f32 %v3905, 0.0
      %v3942 = vmax.f32 %v3906, 0.0
      %v3943 = vmax.f32 %v3907, 0.0
      %v3944 = vmax.f32 %v3908, 0.0
      %v3945 = vmax.f32 %v3909, 0.0
      %v3946 = vmax.f32 %v3910, 0.0
      %v3947 = vmax.f32 %v3911, 0.0
      %v3948 = vmax.f32 %v3912, 0.0
      %v3949 = vmax.f32 %v3913, 0.0
      %v3950 = vmax.f32 %v3914, 0.0
      %v3951 = vmax.f32 %v3915, 0.0
      %v3952 = vmax.f32 %v3916, 0.0
      %v3953 = vmax.f32 %v3917, 0.0
      %s3954 = scalar_lea.vmem %s1, 32
      %v3955 = vld [vmem:[%s3954] sm:$0xf]
      %v3957 = vsel %vm372, %v3918, 0
      %v3960 = vsel %vm372, %v3919, 0
      %v3963 = vsel %vm372, %v3920, 0
      %v3966 = vsel %vm372, %v3921, 0
      %v3969 = vsel %vm372, %v3922, 0
      %v3972 = vsel %vm372, %v3923, 0
      %v3975 = vsel %vm372, %v3924, 0
      %v3978 = vsel %vm372, %v3925, 0
      %v3981 = vsel %vm372, %v3926, 0
      %v3984 = vsel %vm372, %v3927, 0
      %v3987 = vsel %vm372, %v3928, 0
      %v3990 = vsel %vm372, %v3929, 0
      %v3993 = vsel %vm372, %v3930, 0
      %v3996 = vsel %vm372, %v3931, 0
      %v3999 = vsel %vm372, %v3932, 0
      %v4002 = vsel %vm372, %v3933, 0
      %v4005 = vsel %vm372, %v3934, 0
      %v4008 = vsel %vm372, %v3935, 0
      %v4011 = vsel %vm372, %v3936, 0
      %v4014 = vsel %vm372, %v3937, 0
      %v4017 = vsel %vm372, %v3938, 0
      %v4020 = vsel %vm372, %v3939, 0
      %v4023 = vsel %vm372, %v3940, 0
      %v4026 = vsel %vm372, %v3941, 0
      %v4029 = vsel %vm372, %v3942, 0
      %v4032 = vsel %vm372, %v3943, 0
      %v4035 = vsel %vm372, %v3944, 0
      %v4038 = vsel %vm372, %v3945, 0
      %v4041 = vsel %vm372, %v3946, 0
      %v4044 = vsel %vm372, %v3947, 0
      %v4047 = vsel %vm372, %v3948, 0
      %v4050 = vsel %vm372, %v3949, 0
      %v4053 = vsel %vm372, %v3950, 0
      %v4056 = vsel %vm372, %v3951, 0
      %v4059 = vsel %vm372, %v3952, 0
      %v4062 = vsel %vm372, %v3953, 0
      %v4065 = vsel %vm481, %v3955, 0
      %4067 = vmatprep.subr.mxu0 0.0
      %4068 = vmatpush1.msra.mxu0 %v4065
      %4069 = vmatprep.subr.mxu0 0.0
      %4070 = vmatpush1.msra.mxu0 0.0
      %4071 = vmatprep.subr.mxu0 0.0
      %4072 = vmatpush1.msra.mxu0 0.0
      %4073 = vmatprep.subr.mxu0 0.0
      %4074 = vmatpush1.msra.mxu0 0.0
      %4075 = vmatprep.subr.mxu0 0.0
      %4076 = vmatpush1.msra.mxu0 0.0
      %4077 = vmatprep.subr.mxu0 0.0
      %4078 = vmatpush1.msra.mxu0 0.0
      %4079 = vmatprep.subr.mxu0 0.0
      %4080 = vmatpush1.msra.mxu0 0.0
      %4081 = vmatprep.subr.mxu0 0.0
      %4082 = vmatpush1.msra.mxu0 0.0
      %4083 = vmatprep.subr.mxu0 0.0
      %4084 = vmatpush1.msra.mxu0 0.0
      %4085 = vmatprep.subr.mxu0 0.0
      %4086 = vmatpush1.msra.mxu0 0.0
      %4087 = vmatprep.subr.mxu0 0.0
      %4088 = vmatpush1.msra.mxu0 0.0
      %4089 = vmatprep.subr.mxu0 0.0
      %4090 = vmatpush1.msra.mxu0 0.0
      %4091 = vmatprep.subr.mxu0 0.0
      %4092 = vmatpush1.msra.mxu0 0.0
      %4093 = vmatprep.subr.mxu0 0.0
      %4094 = vmatpush1.msra.mxu0 0.0
      %4095 = vmatprep.subr.mxu0 0.0
      %4096 = vmatpush1.msra.mxu0 0.0
      %4097 = vmatprep.subr.mxu0 0.0
      %4098 = vmatpush1.msra.mxu0 0.0
      %4099 = vmatprep.subr.mxu0 0.0
      %4100 = vmatpush1.msra.mxu0 0.0
      %4101 = vmatprep.subr.mxu0 0.0
      %4102 = vmatpush1.msra.mxu0 0.0
      %4103 = vmatprep.subr.mxu0 0.0
      %4104 = vmatpush1.msra.mxu0 0.0
      %4105 = vmatprep.subr.mxu0 0.0
      %4106 = vmatpush1.msra.mxu0 0.0
      %4107 = vmatprep.subr.mxu0 0.0
      %4108 = vmatpush1.msra.mxu0 0.0
      %4109 = vmatprep.subr.mxu0 0.0
      %4110 = vmatpush1.msra.mxu0 0.0
      %4111 = vmatprep.subr.mxu0 0.0
      %4112 = vmatpush1.msra.mxu0 0.0
      %4113 = vmatprep.subr.mxu0 0.0
      %4114 = vmatpush1.msra.mxu0 0.0
      %4115 = vmatprep.subr.mxu0 0.0
      %4116 = vmatpush1.msra.mxu0 0.0
      %4117 = vmatprep.subr.mxu0 0.0
      %4118 = vmatpush1.msra.mxu0 0.0
      %4119 = vmatprep.subr.mxu0 0.0
      %4120 = vmatpush1.msra.mxu0 0.0
      %4121 = vmatprep.subr.mxu0 0.0
      %4122 = vmatpush1.msra.mxu0 0.0
      %4123 = vmatprep.subr.mxu0 0.0
      %4124 = vmatpush1.msra.mxu0 0.0
      %4125 = vmatprep.subr.mxu0 0.0
      %4126 = vmatpush1.msra.mxu0 0.0
      %4127 = vmatprep.subr.mxu0 0.0
      %4128 = vmatpush1.msra.mxu0 0.0
      %4129 = vmatprep.subr.mxu0 0.0
      %4130 = vmatpush1.msra.mxu0 0.0
      %4131 = vmatprep.mubr.f32.mxu0 0.0
      %4132 = vmatmul.mubr.f32.gmra.mrb[0].mxu0 %v3957
      %v4133 = vpop.f32.mrb[0].mxu0
      %v4134 = vadd.f32 0.0, %v4133
      %v4135 = vpop.f32.mrb[0].mxu0
      %4136 = vmatprep.mubr.f32.mxu0 0.0
      %4137 = vmatmul.mubr.f32.gmra.mrb[0].mxu0 %v3960
      %v4138 = vpop.f32.mrb[0].mxu0
      %v4139 = vadd.f32 0.0, %v4138
      %v4140 = vpop.f32.mrb[0].mxu0
      %4141 = vmatprep.mubr.f32.mxu0 0.0
      %4142 = vmatmul.mubr.f32.gmra.mrb[0].mxu0 %v3963
      %v4143 = vpop.f32.mrb[0].mxu0
      %v4144 = vadd.f32 0.0, %v4143
      %v4145 = vpop.f32.mrb[0].mxu0
      %4146 = vmatprep.mubr.f32.mxu0 0.0
      %4147 = vmatmul.mubr.f32.gmra.mrb[0].mxu0 %v3966
      %v4148 = vpop.f32.mrb[0].mxu0
      %v4149 = vadd.f32 0.0, %v4148
      %v4150 = vpop.f32.mrb[0].mxu0
      %4151 = vmatprep.mubr.f32.mxu0 0.0
      %4152 = vmatmul.mubr.f32.gmra.mrb[0].mxu0 %v3969
      %v4153 = vpop.f32.mrb[0].mxu0
      %v4154 = vadd.f32 0.0, %v4153
      %v4155 = vpop.f32.mrb[0].mxu0
      %4156 = vmatprep.mubr.f32.mxu0 0.0
      %4157 = vmatmul.mubr.f32.gmra.mrb[0].mxu0 %v3972
      %v4158 = vpop.f32.mrb[0].mxu0
      %v4159 = vadd.f32 0.0, %v4158
      %v4160 = vpop.f32.mrb[0].mxu0
      %4161 = vmatprep.mubr.f32.mxu0 0.0
      %4162 = vmatmul.mubr.f32.gmra.mrb[0].mxu0 %v3975
      %v4163 = vpop.f32.mrb[0].mxu0
      %v4164 = vadd.f32 0.0, %v4163
      %v4165 = vpop.f32.mrb[0].mxu0
      %4166 = vmatprep.mubr.f32.mxu0 0.0
      %4167 = vmatmul.mubr.f32.gmra.mrb[0].mxu0 %v3978
      %v4168 = vpop.f32.mrb[0].mxu0
      %v4169 = vadd.f32 0.0, %v4168
      %v4170 = vpop.f32.mrb[0].mxu0
      %4171 = vmatprep.mubr.f32.mxu0 0.0
      %4172 = vmatmul.mubr.f32.gmra.mrb[0].mxu0 %v3981
      %v4173 = vpop.f32.mrb[0].mxu0
      %v4174 = vadd.f32 0.0, %v4173
      %v4175 = vpop.f32.mrb[0].mxu0
      %4176 = vmatprep.mubr.f32.mxu0 0.0
      %4177 = vmatmul.mubr.f32.gmra.mrb[0].mxu0 %v3984
      %v4178 = vpop.f32.mrb[0].mxu0
      %v4179 = vadd.f32 0.0, %v4178
      %v4180 = vpop.f32.mrb[0].mxu0
      %4181 = vmatprep.mubr.f32.mxu0 0.0
      %4182 = vmatmul.mubr.f32.gmra.mrb[0].mxu0 %v3987
      %v4183 = vpop.f32.mrb[0].mxu0
      %v4184 = vadd.f32 0.0, %v4183
      %v4185 = vpop.f32.mrb[0].mxu0
      %4186 = vmatprep.mubr.f32.mxu0 0.0
      %4187 = vmatmul.mubr.f32.gmra.mrb[0].mxu0 %v3990
      %v4188 = vpop.f32.mrb[0].mxu0
      %v4189 = vadd.f32 0.0, %v4188
      %v4190 = vpop.f32.mrb[0].mxu0
      %4191 = vmatprep.mubr.f32.mxu0 0.0
      %4192 = vmatmul.mubr.f32.gmra.mrb[0].mxu0 %v3993
      %v4193 = vpop.f32.mrb[0].mxu0
      %v4194 = vadd.f32 0.0, %v4193
      %v4195 = vpop.f32.mrb[0].mxu0
      %4196 = vmatprep.mubr.f32.mxu0 0.0
      %4197 = vmatmul.mubr.f32.gmra.mrb[0].mxu0 %v3996
      %v4198 = vpop.f32.mrb[0].mxu0
      %v4199 = vadd.f32 0.0, %v4198
      %v4200 = vpop.f32.mrb[0].mxu0
      %4201 = vmatprep.mubr.f32.mxu0 0.0
      %4202 = vmatmul.mubr.f32.gmra.mrb[0].mxu0 %v3999
      %v4203 = vpop.f32.mrb[0].mxu0
      %v4204 = vadd.f32 0.0, %v4203
      %v4205 = vpop.f32.mrb[0].mxu0
      %4206 = vmatprep.mubr.f32.mxu0 0.0
      %4207 = vmatmul.mubr.f32.gmra.mrb[0].mxu0 %v4002
      %v4208 = vpop.f32.mrb[0].mxu0
      %v4209 = vadd.f32 0.0, %v4208
      %v4210 = vpop.f32.mrb[0].mxu0
      %4211 = vmatprep.mubr.f32.mxu0 0.0
      %4212 = vmatmul.mubr.f32.gmra.mrb[0].mxu0 %v4005
      %v4213 = vpop.f32.mrb[0].mxu0
      %v4214 = vadd.f32 0.0, %v4213
      %v4215 = vpop.f32.mrb[0].mxu0
      %4216 = vmatprep.mubr.f32.mxu0 0.0
      %4217 = vmatmul.mubr.f32.gmra.mrb[0].mxu0 %v4008
      %v4218 = vpop.f32.mrb[0].mxu0
      %v4219 = vadd.f32 0.0, %v4218
      %v4220 = vpop.f32.mrb[0].mxu0
      %4221 = vmatprep.mubr.f32.mxu0 0.0
      %4222 = vmatmul.mubr.f32.gmra.mrb[0].mxu0 %v4011
      %v4223 = vpop.f32.mrb[0].mxu0
      %v4224 = vadd.f32 0.0, %v4223
      %v4225 = vpop.f32.mrb[0].mxu0
      %4226 = vmatprep.mubr.f32.mxu0 0.0
      %4227 = vmatmul.mubr.f32.gmra.mrb[0].mxu0 %v4014
      %v4228 = vpop.f32.mrb[0].mxu0
      %v4229 = vadd.f32 0.0, %v4228
      %v4230 = vpop.f32.mrb[0].mxu0
      %4231 = vmatprep.mubr.f32.mxu0 0.0
      %4232 = vmatmul.mubr.f32.gmra.mrb[0].mxu0 %v4017
      %v4233 = vpop.f32.mrb[0].mxu0
      %v4234 = vadd.f32 0.0, %v4233
      %v4235 = vpop.f32.mrb[0].mxu0
      %4236 = vmatprep.mubr.f32.mxu0 0.0
      %4237 = vmatmul.mubr.f32.gmra.mrb[0].mxu0 %v4020
      %v4238 = vpop.f32.mrb[0].mxu0
      %v4239 = vadd.f32 0.0, %v4238
      %v4240 = vpop.f32.mrb[0].mxu0
      %4241 = vmatprep.mubr.f32.mxu0 0.0
      %4242 = vmatmul.mubr.f32.gmra.mrb[0].mxu0 %v4023
      %v4243 = vpop.f32.mrb[0].mxu0
      %v4244 = vadd.f32 0.0, %v4243
      %v4245 = vpop.f32.mrb[0].mxu0
      %4246 = vmatprep.mubr.f32.mxu0 0.0
      %4247 = vmatmul.mubr.f32.gmra.mrb[0].mxu0 %v4026
      %v4248 = vpop.f32.mrb[0].mxu0
      %v4249 = vadd.f32 0.0, %v4248
      %v4250 = vpop.f32.mrb[0].mxu0
      %4251 = vmatprep.mubr.f32.mxu0 0.0
      %4252 = vmatmul.mubr.f32.gmra.mrb[0].mxu0 %v4029
      %v4253 = vpop.f32.mrb[0].mxu0
      %v4254 = vadd.f32 0.0, %v4253
      %v4255 = vpop.f32.mrb[0].mxu0
      %4256 = vmatprep.mubr.f32.mxu0 0.0
      %4257 = vmatmul.mubr.f32.gmra.mrb[0].mxu0 %v4032
      %v4258 = vpop.f32.mrb[0].mxu0
      %v4259 = vadd.f32 0.0, %v4258
      %v4260 = vpop.f32.mrb[0].mxu0
      %4261 = vmatprep.mubr.f32.mxu0 0.0
      %4262 = vmatmul.mubr.f32.gmra.mrb[0].mxu0 %v4035
      %v4263 = vpop.f32.mrb[0].mxu0
      %v4264 = vadd.f32 0.0, %v4263
      %v4265 = vpop.f32.mrb[0].mxu0
      %4266 = vmatprep.mubr.f32.mxu0 0.0
      %4267 = vmatmul.mubr.f32.gmra.mrb[0].mxu0 %v4038
      %v4268 = vpop.f32.mrb[0].mxu0
      %v4269 = vadd.f32 0.0, %v4268
      %v4270 = vpop.f32.mrb[0].mxu0
      %4271 = vmatprep.mubr.f32.mxu0 0.0
      %4272 = vmatmul.mubr.f32.gmra.mrb[0].mxu0 %v4041
      %v4273 = vpop.f32.mrb[0].mxu0
      %v4274 = vadd.f32 0.0, %v4273
      %v4275 = vpop.f32.mrb[0].mxu0
      %4276 = vmatprep.mubr.f32.mxu0 0.0
      %4277 = vmatmul.mubr.f32.gmra.mrb[0].mxu0 %v4044
      %v4278 = vpop.f32.mrb[0].mxu0
      %v4279 = vadd.f32 0.0, %v4278
      %v4280 = vpop.f32.mrb[0].mxu0
      %4281 = vmatprep.mubr.f32.mxu0 0.0
      %4282 = vmatmul.mubr.f32.gmra.mrb[0].mxu0 %v4047
      %v4283 = vpop.f32.mrb[0].mxu0
      %v4284 = vadd.f32 0.0, %v4283
      %v4285 = vpop.f32.mrb[0].mxu0
      %4286 = vmatprep.mubr.f32.mxu0 0.0
      %4287 = vmatmul.mubr.f32.gmra.mrb[0].mxu0 %v4050
      %v4288 = vpop.f32.mrb[0].mxu0
      %v4289 = vadd.f32 0.0, %v4288
      %v4290 = vpop.f32.mrb[0].mxu0
      %4291 = vmatprep.mubr.f32.mxu0 0.0
      %4292 = vmatmul.mubr.f32.gmra.mrb[0].mxu0 %v4053
      %v4293 = vpop.f32.mrb[0].mxu0
      %v4294 = vadd.f32 0.0, %v4293
      %v4295 = vpop.f32.mrb[0].mxu0
      %4296 = vmatprep.mubr.f32.mxu0 0.0
      %4297 = vmatmul.mubr.f32.gmra.mrb[0].mxu0 %v4056
      %v4298 = vpop.f32.mrb[0].mxu0
      %v4299 = vadd.f32 0.0, %v4298
      %v4300 = vpop.f32.mrb[0].mxu0
      %4301 = vmatprep.mubr.f32.mxu0 0.0
      %4302 = vmatmul.mubr.f32.gmra.mrb[0].mxu0 %v4059
      %v4303 = vpop.f32.mrb[0].mxu0
      %v4304 = vadd.f32 0.0, %v4303
      %v4305 = vpop.f32.mrb[0].mxu0
      %4306 = vmatprep.mubr.f32.mxu0 0.0
      %4307 = vmatmul.mubr.f32.gmra.mrb[0].mxu0 %v4062
      %v4308 = vpop.f32.mrb[0].mxu0
      %v4309 = vadd.f32 0.0, %v4308
      %v4310 = vpop.f32.mrb[0].mxu0
      %4311 = vdwg.mxu0
      %v4312 = vadd.f32 %v3846, %v4134
      %v4313 = vadd.f32 %v3847, %v4139
      %v4314 = vadd.f32 %v3848, %v4144
      %v4315 = vadd.f32 %v3849, %v4149
      %v4316 = vadd.f32 %v3850, %v4154
      %v4317 = vadd.f32 %v3851, %v4159
      %v4318 = vadd.f32 %v3852, %v4164
      %v4319 = vadd.f32 %v3853, %v4169
      %v4320 = vadd.f32 %v3854, %v4174
      %v4321 = vadd.f32 %v3855, %v4179
      %v4322 = vadd.f32 %v3856, %v4184
      %v4323 = vadd.f32 %v3857, %v4189
      %v4324 = vadd.f32 %v3858, %v4194
      %v4325 = vadd.f32 %v3859, %v4199
      %v4326 = vadd.f32 %v3860, %v4204
      %v4327 = vadd.f32 %v3861, %v4209
      %v4328 = vadd.f32 %v3862, %v4214
      %v4329 = vadd.f32 %v3863, %v4219
      %v4330 = vadd.f32 %v3864, %v4224
      %v4331 = vadd.f32 %v3865, %v4229
      %v4332 = vadd.f32 %v3866, %v4234
      %v4333 = vadd.f32 %v3867, %v4239
      %v4334 = vadd.f32 %v3868, %v4244
      %v4335 = vadd.f32 %v3869, %v4249
      %v4336 = vadd.f32 %v3870, %v4254
      %v4337 = vadd.f32 %v3871, %v4259
      %v4338 = vadd.f32 %v3872, %v4264
      %v4339 = vadd.f32 %v3873, %v4269
      %v4340 = vadd.f32 %v3874, %v4274
      %v4341 = vadd.f32 %v3875, %v4279
      %v4342 = vadd.f32 %v3876, %v4284
      %v4343 = vadd.f32 %v3877, %v4289
      %v4344 = vadd.f32 %v3878, %v4294
      %v4345 = vadd.f32 %v3879, %v4299
      %v4346 = vadd.f32 %v3880, %v4304
      %v4347 = vadd.f32 %v3881, %v4309
      %v4348 = vld [vmem:[%s2] sm:$0x1]
      %v4350 = vlaneseq
      %v4351 = vshrl.u32 %v4350, 7
      %v4352 = vsub.s32 0, %v4351
      %v4353 = vrot.slane %v4348, %v4352
      %v4355 = vadd.f32 %v4312, %v4353
      %v4356 = vadd.f32 %v4313, %v4353
      %v4357 = vadd.f32 %v4314, %v4353
      %v4358 = vadd.f32 %v4315, %v4353
      %v4359 = vadd.f32 %v4316, %v4353
      %v4360 = vadd.f32 %v4317, %v4353
      %v4361 = vadd.f32 %v4318, %v4353
      %v4362 = vadd.f32 %v4319, %v4353
      %v4363 = vadd.f32 %v4320, %v4353
      %v4364 = vadd.f32 %v4321, %v4353
      %v4365 = vadd.f32 %v4322, %v4353
      %v4366 = vadd.f32 %v4323, %v4353
      %v4367 = vadd.f32 %v4324, %v4353
      %v4368 = vadd.f32 %v4325, %v4353
      %v4369 = vadd.f32 %v4326, %v4353
      %v4370 = vadd.f32 %v4327, %v4353
      %v4371 = vadd.f32 %v4328, %v4353
      %v4372 = vadd.f32 %v4329, %v4353
      %v4373 = vadd.f32 %v4330, %v4353
      %v4374 = vadd.f32 %v4331, %v4353
      %v4375 = vadd.f32 %v4332, %v4353
      %v4376 = vadd.f32 %v4333, %v4353
      %v4377 = vadd.f32 %v4334, %v4353
      %v4378 = vadd.f32 %v4335, %v4353
      %v4379 = vadd.f32 %v4336, %v4353
      %v4380 = vadd.f32 %v4337, %v4353
      %v4381 = vadd.f32 %v4338, %v4353
      %v4382 = vadd.f32 %v4339, %v4353
      %v4383 = vadd.f32 %v4340, %v4353
      %v4384 = vadd.f32 %v4341, %v4353
      %v4385 = vadd.f32 %v4342, %v4353
      %v4386 = vadd.f32 %v4343, %v4353
      %v4387 = vadd.f32 %v4344, %v4353
      %v4388 = vadd.f32 %v4345, %v4353
      %v4389 = vadd.f32 %v4346, %v4353
      %v4390 = vadd.f32 %v4347, %v4353
      %v4391 = vmax.f32 %v4355, 0.0
      %v4392 = vmax.f32 %v4356, 0.0
      %v4393 = vmax.f32 %v4357, 0.0
      %v4394 = vmax.f32 %v4358, 0.0
      %v4395 = vmax.f32 %v4359, 0.0
      %v4396 = vmax.f32 %v4360, 0.0
      %v4397 = vmax.f32 %v4361, 0.0
      %v4398 = vmax.f32 %v4362, 0.0
      %v4399 = vmax.f32 %v4363, 0.0
      %v4400 = vmax.f32 %v4364, 0.0
      %v4401 = vmax.f32 %v4365, 0.0
      %v4402 = vmax.f32 %v4366, 0.0
      %v4403 = vmax.f32 %v4367, 0.0
      %v4404 = vmax.f32 %v4368, 0.0
      %v4405 = vmax.f32 %v4369, 0.0
      %v4406 = vmax.f32 %v4370, 0.0
      %v4407 = vmax.f32 %v4371, 0.0
      %v4408 = vmax.f32 %v4372, 0.0
      %v4409 = vmax.f32 %v4373, 0.0
      %v4410 = vmax.f32 %v4374, 0.0
      %v4411 = vmax.f32 %v4375, 0.0
      %v4412 = vmax.f32 %v4376, 0.0
      %v4413 = vmax.f32 %v4377, 0.0
      %v4414 = vmax.f32 %v4378, 0.0
      %v4415 = vmax.f32 %v4379, 0.0
      %v4416 = vmax.f32 %v4380, 0.0
      %v4417 = vmax.f32 %v4381, 0.0
      %v4418 = vmax.f32 %v4382, 0.0
      %v4419 = vmax.f32 %v4383, 0.0
      %v4420 = vmax.f32 %v4384, 0.0
      %v4421 = vmax.f32 %v4385, 0.0
      %v4422 = vmax.f32 %v4386, 0.0
      %v4423 = vmax.f32 %v4387, 0.0
      %v4424 = vmax.f32 %v4388, 0.0
      %v4425 = vmax.f32 %v4389, 0.0
      %v4426 = vmax.f32 %v4390, 0.0
      %v4427 = vld [vmem:[%s3] sm:$0xff]
      %v4428 = vld [vmem:[%s3 + $0x8] sm:$0xff]
      %v4429 = vld [vmem:[%s3 + $0x10] sm:$0xff]
      %v4430 = vld [vmem:[%s3 + $0x18] sm:$0xff]
      %v4431 = vld [vmem:[%s3 + $0x20] sm:$0xff]
      %v4432 = vld [vmem:[%s3 + $0x28] sm:$0xff]
      %v4433 = vld [vmem:[%s3 + $0x30] sm:$0xff]
      %v4434 = vld [vmem:[%s3 + $0x38] sm:$0xff]
      %v4435 = vld [vmem:[%s3 + $0x40] sm:$0xff]
      %v4436 = vld [vmem:[%s3 + $0x48] sm:$0xff]
      %v4437 = vld [vmem:[%s3 + $0x50] sm:$0xff]
      %v4438 = vld [vmem:[%s3 + $0x58] sm:$0xff]
      %v4439 = vld [vmem:[%s3 + $0x60] sm:$0xff]
      %v4440 = vld [vmem:[%s3 + $0x68] sm:$0xff]
      %v4441 = vld [vmem:[%s3 + $0x70] sm:$0xff]
      %v4442 = vld [vmem:[%s3 + $0x78] sm:$0xff]
      %v4443 = vld [vmem:[%s4] sm:$0x1]
      %v4445 = vlaneseq
      %v4446 = vshrl.u32 %v4445, 7
      %v4447 = vsub.s32 0, %v4446
      %v4448 = vrot.slane %v4443, %v4447
      %4450 = vmatprep.subr.mxu0 0.0
      %4451 = vmatpush1.msra.mxu0 %v4427
      %4452 = vmatprep.subr.mxu0 0.0
      %4453 = vmatpush1.msra.mxu0 %v4428
      %4454 = vmatprep.subr.mxu0 0.0
      %4455 = vmatpush1.msra.mxu0 %v4429
      %4456 = vmatprep.subr.mxu0 0.0
      %4457 = vmatpush1.msra.mxu0 %v4430
      %4458 = vmatprep.subr.mxu0 0.0
      %4459 = vmatpush1.msra.mxu0 %v4431
      %4460 = vmatprep.subr.mxu0 0.0
      %4461 = vmatpush1.msra.mxu0 %v4432
      %4462 = vmatprep.subr.mxu0 0.0
      %4463 = vmatpush1.msra.mxu0 %v4433
      %4464 = vmatprep.subr.mxu0 0.0
      %4465 = vmatpush1.msra.mxu0 %v4434
      %4466 = vmatprep.subr.mxu0 0.0
      %4467 = vmatpush1.msra.mxu0 %v4435
      %4468 = vmatprep.subr.mxu0 0.0
      %4469 = vmatpush1.msra.mxu0 %v4436
      %4470 = vmatprep.subr.mxu0 0.0
      %4471 = vmatpush1.msra.mxu0 %v4437
      %4472 = vmatprep.subr.mxu0 0.0
      %4473 = vmatpush1.msra.mxu0 %v4438
      %4474 = vmatprep.subr.mxu0 0.0
      %4475 = vmatpush1.msra.mxu0 %v4439
      %4476 = vmatprep.subr.mxu0 0.0
      %4477 = vmatpush1.msra.mxu0 %v4440
      %4478 = vmatprep.subr.mxu0 0.0
      %4479 = vmatpush1.msra.mxu0 %v4441
      %4480 = vmatprep.subr.mxu0 0.0
      %4481 = vmatpush1.msra.mxu0 %v4442
      %4482 = vmatprep.subr.mxu0 0.0
      %4483 = vmatpush1.msra.mxu0 0.0
      %4484 = vmatprep.subr.mxu0 0.0
      %4485 = vmatpush1.msra.mxu0 0.0
      %4486 = vmatprep.subr.mxu0 0.0
      %4487 = vmatpush1.msra.mxu0 0.0
      %4488 = vmatprep.subr.mxu0 0.0
      %4489 = vmatpush1.msra.mxu0 0.0
      %4490 = vmatprep.subr.mxu0 0.0
      %4491 = vmatpush1.msra.mxu0 0.0
      %4492 = vmatprep.subr.mxu0 0.0
      %4493 = vmatpush1.msra.mxu0 0.0
      %4494 = vmatprep.subr.mxu0 0.0
      %4495 = vmatpush1.msra.mxu0 0.0
      %4496 = vmatprep.subr.mxu0 0.0
      %4497 = vmatpush1.msra.mxu0 0.0
      %4498 = vmatprep.subr.mxu0 0.0
      %4499 = vmatpush1.msra.mxu0 0.0
      %4500 = vmatprep.subr.mxu0 0.0
      %4501 = vmatpush1.msra.mxu0 0.0
      %4502 = vmatprep.subr.mxu0 0.0
      %4503 = vmatpush1.msra.mxu0 0.0
      %4504 = vmatprep.subr.mxu0 0.0
      %4505 = vmatpush1.msra.mxu0 0.0
      %4506 = vmatprep.subr.mxu0 0.0
      %4507 = vmatpush1.msra.mxu0 0.0
      %4508 = vmatprep.subr.mxu0 0.0
      %4509 = vmatpush1.msra.mxu0 0.0
      %4510 = vmatprep.subr.mxu0 0.0
      %4511 = vmatpush1.msra.mxu0 0.0
      %4512 = vmatprep.subr.mxu0 0.0
      %4513 = vmatpush1.msra.mxu0 0.0
      %4514 = vmatprep.mubr.f32.mxu0 0.0
      %4515 = vmatmul.mubr.f32.gmra.mrb[0].mxu0 %v4391
      %v4516 = vpop.f32.mrb[0].mxu0
      %v4517 = vadd.f32 %v4448, %v4516
      %v4518 = vpop.f32.mrb[0].mxu0
      %4519 = vmatprep.mubr.f32.mxu0 0.0
      %4520 = vmatmul.mubr.f32.gmra.mrb[0].mxu0 %v4392
      %v4521 = vpop.f32.mrb[0].mxu0
      %v4522 = vadd.f32 %v4448, %v4521
      %v4523 = vpop.f32.mrb[0].mxu0
      %4524 = vmatprep.mubr.f32.mxu0 0.0
      %4525 = vmatmul.mubr.f32.gmra.mrb[0].mxu0 %v4393
      %v4526 = vpop.f32.mrb[0].mxu0
      %v4527 = vadd.f32 %v4448, %v4526
      %v4528 = vpop.f32.mrb[0].mxu0
      %4529 = vmatprep.mubr.f32.mxu0 0.0
      %4530 = vmatmul.mubr.f32.gmra.mrb[0].mxu0 %v4394
      %v4531 = vpop.f32.mrb[0].mxu0
      %v4532 = vadd.f32 %v4448, %v4531
      %v4533 = vpop.f32.mrb[0].mxu0
      %4534 = vmatprep.mubr.f32.mxu0 0.0
      %4535 = vmatmul.mubr.f32.gmra.mrb[0].mxu0 %v4395
      %v4536 = vpop.f32.mrb[0].mxu0
      %v4537 = vadd.f32 %v4448, %v4536
      %v4538 = vpop.f32.mrb[0].mxu0
      %4539 = vmatprep.mubr.f32.mxu0 0.0
      %4540 = vmatmul.mubr.f32.gmra.mrb[0].mxu0 %v4396
      %v4541 = vpop.f32.mrb[0].mxu0
      %v4542 = vadd.f32 %v4448, %v4541
      %v4543 = vpop.f32.mrb[0].mxu0
      %4544 = vmatprep.mubr.f32.mxu0 0.0
      %4545 = vmatmul.mubr.f32.gmra.mrb[0].mxu0 %v4397
      %v4546 = vpop.f32.mrb[0].mxu0
      %v4547 = vadd.f32 %v4448, %v4546
      %v4548 = vpop.f32.mrb[0].mxu0
      %4549 = vmatprep.mubr.f32.mxu0 0.0
      %4550 = vmatmul.mubr.f32.gmra.mrb[0].mxu0 %v4398
      %v4551 = vpop.f32.mrb[0].mxu0
      %v4552 = vadd.f32 %v4448, %v4551
      %v4553 = vpop.f32.mrb[0].mxu0
      %4554 = vmatprep.mubr.f32.mxu0 0.0
      %4555 = vmatmul.mubr.f32.gmra.mrb[0].mxu0 %v4399
      %v4556 = vpop.f32.mrb[0].mxu0
      %v4557 = vadd.f32 %v4448, %v4556
      %v4558 = vpop.f32.mrb[0].mxu0
      %4559 = vmatprep.mubr.f32.mxu0 0.0
      %4560 = vmatmul.mubr.f32.gmra.mrb[0].mxu0 %v4400
      %v4561 = vpop.f32.mrb[0].mxu0
      %v4562 = vadd.f32 %v4448, %v4561
      %v4563 = vpop.f32.mrb[0].mxu0
      %4564 = vmatprep.mubr.f32.mxu0 0.0
      %4565 = vmatmul.mubr.f32.gmra.mrb[0].mxu0 %v4401
      %v4566 = vpop.f32.mrb[0].mxu0
      %v4567 = vadd.f32 %v4448, %v4566
      %v4568 = vpop.f32.mrb[0].mxu0
      %4569 = vmatprep.mubr.f32.mxu0 0.0
      %4570 = vmatmul.mubr.f32.gmra.mrb[0].mxu0 %v4402
      %v4571 = vpop.f32.mrb[0].mxu0
      %v4572 = vadd.f32 %v4448, %v4571
      %v4573 = vpop.f32.mrb[0].mxu0
      %4574 = vmatprep.mubr.f32.mxu0 0.0
      %4575 = vmatmul.mubr.f32.gmra.mrb[0].mxu0 %v4403
      %v4576 = vpop.f32.mrb[0].mxu0
      %v4577 = vadd.f32 %v4448, %v4576
      %v4578 = vpop.f32.mrb[0].mxu0
      %4579 = vmatprep.mubr.f32.mxu0 0.0
      %4580 = vmatmul.mubr.f32.gmra.mrb[0].mxu0 %v4404
      %v4581 = vpop.f32.mrb[0].mxu0
      %v4582 = vadd.f32 %v4448, %v4581
      %v4583 = vpop.f32.mrb[0].mxu0
      %4584 = vmatprep.mubr.f32.mxu0 0.0
      %4585 = vmatmul.mubr.f32.gmra.mrb[0].mxu0 %v4405
      %v4586 = vpop.f32.mrb[0].mxu0
      %v4587 = vadd.f32 %v4448, %v4586
      %v4588 = vpop.f32.mrb[0].mxu0
      %4589 = vmatprep.mubr.f32.mxu0 0.0
      %4590 = vmatmul.mubr.f32.gmra.mrb[0].mxu0 %v4406
      %v4591 = vpop.f32.mrb[0].mxu0
      %v4592 = vadd.f32 %v4448, %v4591
      %v4593 = vpop.f32.mrb[0].mxu0
      %4594 = vmatprep.mubr.f32.mxu0 0.0
      %4595 = vmatmul.mubr.f32.gmra.mrb[0].mxu0 %v4407
      %v4596 = vpop.f32.mrb[0].mxu0
      %v4597 = vadd.f32 %v4448, %v4596
      %v4598 = vpop.f32.mrb[0].mxu0
      %4599 = vmatprep.mubr.f32.mxu0 0.0
      %4600 = vmatmul.mubr.f32.gmra.mrb[0].mxu0 %v4408
      %v4601 = vpop.f32.mrb[0].mxu0
      %v4602 = vadd.f32 %v4448, %v4601
      %v4603 = vpop.f32.mrb[0].mxu0
      %4604 = vmatprep.mubr.f32.mxu0 0.0
      %4605 = vmatmul.mubr.f32.gmra.mrb[0].mxu0 %v4409
      %v4606 = vpop.f32.mrb[0].mxu0
      %v4607 = vadd.f32 %v4448, %v4606
      %v4608 = vpop.f32.mrb[0].mxu0
      %4609 = vmatprep.mubr.f32.mxu0 0.0
      %4610 = vmatmul.mubr.f32.gmra.mrb[0].mxu0 %v4410
      %v4611 = vpop.f32.mrb[0].mxu0
      %v4612 = vadd.f32 %v4448, %v4611
      %v4613 = vpop.f32.mrb[0].mxu0
      %4614 = vmatprep.mubr.f32.mxu0 0.0
      %4615 = vmatmul.mubr.f32.gmra.mrb[0].mxu0 %v4411
      %v4616 = vpop.f32.mrb[0].mxu0
      %v4617 = vadd.f32 %v4448, %v4616
      %v4618 = vpop.f32.mrb[0].mxu0
      %4619 = vmatprep.mubr.f32.mxu0 0.0
      %4620 = vmatmul.mubr.f32.gmra.mrb[0].mxu0 %v4412
      %v4621 = vpop.f32.mrb[0].mxu0
      %v4622 = vadd.f32 %v4448, %v4621
      %v4623 = vpop.f32.mrb[0].mxu0
      %4624 = vmatprep.mubr.f32.mxu0 0.0
      %4625 = vmatmul.mubr.f32.gmra.mrb[0].mxu0 %v4413
      %v4626 = vpop.f32.mrb[0].mxu0
      %v4627 = vadd.f32 %v4448, %v4626
      %v4628 = vpop.f32.mrb[0].mxu0
      %4629 = vmatprep.mubr.f32.mxu0 0.0
      %4630 = vmatmul.mubr.f32.gmra.mrb[0].mxu0 %v4414
      %v4631 = vpop.f32.mrb[0].mxu0
      %v4632 = vadd.f32 %v4448, %v4631
      %v4633 = vpop.f32.mrb[0].mxu0
      %4634 = vmatprep.mubr.f32.mxu0 0.0
      %4635 = vmatmul.mubr.f32.gmra.mrb[0].mxu0 %v4415
      %v4636 = vpop.f32.mrb[0].mxu0
      %v4637 = vadd.f32 %v4448, %v4636
      %v4638 = vpop.f32.mrb[0].mxu0
      %4639 = vmatprep.mubr.f32.mxu0 0.0
      %4640 = vmatmul.mubr.f32.gmra.mrb[0].mxu0 %v4416
      %v4641 = vpop.f32.mrb[0].mxu0
      %v4642 = vadd.f32 %v4448, %v4641
      %v4643 = vpop.f32.mrb[0].mxu0
      %4644 = vmatprep.mubr.f32.mxu0 0.0
      %4645 = vmatmul.mubr.f32.gmra.mrb[0].mxu0 %v4417
      %v4646 = vpop.f32.mrb[0].mxu0
      %v4647 = vadd.f32 %v4448, %v4646
      %v4648 = vpop.f32.mrb[0].mxu0
      %4649 = vmatprep.mubr.f32.mxu0 0.0
      %4650 = vmatmul.mubr.f32.gmra.mrb[0].mxu0 %v4418
      %v4651 = vpop.f32.mrb[0].mxu0
      %v4652 = vadd.f32 %v4448, %v4651
      %v4653 = vpop.f32.mrb[0].mxu0
      %4654 = vmatprep.mubr.f32.mxu0 0.0
      %4655 = vmatmul.mubr.f32.gmra.mrb[0].mxu0 %v4419
      %v4656 = vpop.f32.mrb[0].mxu0
      %v4657 = vadd.f32 %v4448, %v4656
      %v4658 = vpop.f32.mrb[0].mxu0
      %4659 = vmatprep.mubr.f32.mxu0 0.0
      %4660 = vmatmul.mubr.f32.gmra.mrb[0].mxu0 %v4420
      %v4661 = vpop.f32.mrb[0].mxu0
      %v4662 = vadd.f32 %v4448, %v4661
      %v4663 = vpop.f32.mrb[0].mxu0
      %4664 = vmatprep.mubr.f32.mxu0 0.0
      %4665 = vmatmul.mubr.f32.gmra.mrb[0].mxu0 %v4421
      %v4666 = vpop.f32.mrb[0].mxu0
      %v4667 = vadd.f32 %v4448, %v4666
      %v4668 = vpop.f32.mrb[0].mxu0
      %4669 = vmatprep.mubr.f32.mxu0 0.0
      %4670 = vmatmul.mubr.f32.gmra.mrb[0].mxu0 %v4422
      %v4671 = vpop.f32.mrb[0].mxu0
      %v4672 = vadd.f32 %v4448, %v4671
      %v4673 = vpop.f32.mrb[0].mxu0
      %4674 = vmatprep.mubr.f32.mxu0 0.0
      %4675 = vmatmul.mubr.f32.gmra.mrb[0].mxu0 %v4423
      %v4676 = vpop.f32.mrb[0].mxu0
      %v4677 = vadd.f32 %v4448, %v4676
      %v4678 = vpop.f32.mrb[0].mxu0
      %4679 = vmatprep.mubr.f32.mxu0 0.0
      %4680 = vmatmul.mubr.f32.gmra.mrb[0].mxu0 %v4424
      %v4681 = vpop.f32.mrb[0].mxu0
      %v4682 = vadd.f32 %v4448, %v4681
      %v4683 = vpop.f32.mrb[0].mxu0
      %4684 = vmatprep.mubr.f32.mxu0 0.0
      %4685 = vmatmul.mubr.f32.gmra.mrb[0].mxu0 %v4425
      %v4686 = vpop.f32.mrb[0].mxu0
      %v4687 = vadd.f32 %v4448, %v4686
      %v4688 = vpop.f32.mrb[0].mxu0
      %4689 = vmatprep.mubr.f32.mxu0 0.0
      %4690 = vmatmul.mubr.f32.gmra.mrb[0].mxu0 %v4426
      %v4691 = vpop.f32.mrb[0].mxu0
      %v4692 = vadd.f32 %v4448, %v4691
      %v4693 = vpop.f32.mrb[0].mxu0
      %4694 = vdwg.mxu0
      %v4695 = vadd.f32 %v4517, %v2018
      %v4696 = vadd.f32 %v4522, %v2019
      %v4697 = vadd.f32 %v4527, %v2020
      %v4698 = vadd.f32 %v4532, %v2021
      %v4699 = vadd.f32 %v4537, %v2022
      %v4700 = vadd.f32 %v4542, %v2023
      %v4701 = vadd.f32 %v4547, %v2024
      %v4702 = vadd.f32 %v4552, %v2025
      %v4703 = vadd.f32 %v4557, %v2026
      %v4704 = vadd.f32 %v4562, %v2027
      %v4705 = vadd.f32 %v4567, %v2028
      %v4706 = vadd.f32 %v4572, %v2029
      %v4707 = vadd.f32 %v4577, %v2030
      %v4708 = vadd.f32 %v4582, %v2031
      %v4709 = vadd.f32 %v4587, %v2032
      %v4710 = vadd.f32 %v4592, %v2033
      %v4711 = vadd.f32 %v4597, %v2034
      %v4712 = vadd.f32 %v4602, %v2035
      %v4713 = vadd.f32 %v4607, %v2036
      %v4714 = vadd.f32 %v4612, %v2037
      %v4715 = vadd.f32 %v4617, %v2038
      %v4716 = vadd.f32 %v4622, %v2039
      %v4717 = vadd.f32 %v4627, %v2040
      %v4718 = vadd.f32 %v4632, %v2041
      %v4719 = vadd.f32 %v4637, %v2042
      %v4720 = vadd.f32 %v4642, %v2043
      %v4721 = vadd.f32 %v4647, %v2044
      %v4722 = vadd.f32 %v4652, %v2045
      %v4723 = vadd.f32 %v4657, %v2046
      %v4724 = vadd.f32 %v4662, %v2047
      %v4725 = vadd.f32 %v4667, %v2048
      %v4726 = vadd.f32 %v4672, %v2049
      %v4727 = vadd.f32 %v4677, %v2050
      %v4728 = vadd.f32 %v4682, %v2051
      %v4729 = vadd.f32 %v4687, %v2052
      %v4730 = vadd.f32 %v4692, %v2053
      %4731 = vst.msk [vmem:[%s224] sm:$0xff] %vm372, %v4695
      %4732 = vst.msk [vmem:[%s224 + $0x8] sm:$0xff] %vm372, %v4696
      %4733 = vst.msk [vmem:[%s224 + $0x10] sm:$0xff] %vm372, %v4697
      %4734 = vst.msk [vmem:[%s224 + $0x18] sm:$0xff] %vm372, %v4698
      %4735 = vst.msk [vmem:[%s224 + $0x20] sm:$0xff] %vm372, %v4699
      %4736 = vst.msk [vmem:[%s224 + $0x28] sm:$0xff] %vm372, %v4700
      %4737 = vst.msk [vmem:[%s224 + $0x30] sm:$0xff] %vm372, %v4701
      %4738 = vst.msk [vmem:[%s224 + $0x38] sm:$0xff] %vm372, %v4702
      %4739 = vst.msk [vmem:[%s224 + $0x40] sm:$0xff] %vm372, %v4703
      %4740 = vst.msk [vmem:[%s224 + $0x48] sm:$0xff] %vm372, %v4704
      %4741 = vst.msk [vmem:[%s224 + $0x50] sm:$0xff] %vm372, %v4705
      %4742 = vst.msk [vmem:[%s224 + $0x58] sm:$0xff] %vm372, %v4706
      %4743 = vst.msk [vmem:[%s224 + $0x60] sm:$0xff] %vm372, %v4707
      %4744 = vst.msk [vmem:[%s224 + $0x68] sm:$0xff] %vm372, %v4708
      %4745 = vst.msk [vmem:[%s224 + $0x70] sm:$0xff] %vm372, %v4709
      %4746 = vst.msk [vmem:[%s224 + $0x78] sm:$0xff] %vm372, %v4710
      %4747 = vst.msk [vmem:[%s224 + $0x80] sm:$0xff] %vm372, %v4711
      %4748 = vst.msk [vmem:[%s224 + $0x88] sm:$0xff] %vm372, %v4712
      %4749 = vst.msk [vmem:[%s224 + $0x90] sm:$0xff] %vm372, %v4713
      %4750 = vst.msk [vmem:[%s224 + $0x98] sm:$0xff] %vm372, %v4714
      %4751 = vst.msk [vmem:[%s224 + $0xa0] sm:$0xff] %vm372, %v4715
      %4752 = vst.msk [vmem:[%s224 + $0xa8] sm:$0xff] %vm372, %v4716
      %4753 = vst.msk [vmem:[%s224 + $0xb0] sm:$0xff] %vm372, %v4717
      %4754 = vst.msk [vmem:[%s224 + $0xb8] sm:$0xff] %vm372, %v4718
      %4755 = vst.msk [vmem:[%s224 + $0xc0] sm:$0xff] %vm372, %v4719
      %4756 = vst.msk [vmem:[%s224 + $0xc8] sm:$0xff] %vm372, %v4720
      %4757 = vst.msk [vmem:[%s224 + $0xd0] sm:$0xff] %vm372, %v4721
      %4758 = vst.msk [vmem:[%s224 + $0xd8] sm:$0xff] %vm372, %v4722
      %4759 = vst.msk [vmem:[%s224 + $0xe0] sm:$0xff] %vm372, %v4723
      %4760 = vst.msk [vmem:[%s224 + $0xe8] sm:$0xff] %vm372, %v4724
      %4761 = vst.msk [vmem:[%s224 + $0xf0] sm:$0xff] %vm372, %v4725
      %4762 = vst.msk [vmem:[%s224 + $0xf8] sm:$0xff] %vm372, %v4726
      %4763 = vst.msk [vmem:[%s224 + $0x100] sm:$0xff] %vm372, %v4727
      %4764 = vst.msk [vmem:[%s224 + $0x108] sm:$0xff] %vm372, %v4728
      %4765 = vst.msk [vmem:[%s224 + $0x110] sm:$0xff] %vm372, %v4729
      %4766 = vst.msk [vmem:[%s224 + $0x118] sm:$0xff] %vm372, %v4730
      %p4767 = scmp.lt.s32.totalorder %s16, 1
      %s4768 = scalar_select %p4767, %s16, 1
      %s4769 = smul.addr %s4768, 36
      %s4770 = smul.addr %s4769, 8
      %s4771 = scalar_lea.vmem %s5, %s4770
      // Predicated region
      $region41: #{tpu_custom_call.1} parent=39 // pred_check
        %p4772 = pneg %p144
      $region42: #{tpu_custom_call.1} parent=39 // pred_check_branch
        %4774 = sbr.rel (%p4772) target = $region44
      $region43: #{tpu_custom_call.1} parent=39 // pred_region
        _
      $region44: #{tpu_custom_call.1} parent=39 // pred_fallthru
        _
    $region40: #{tpu_custom_call.1} parent=5 // pred_fallthru
      _
    %p4775 = scmp.le.s32.totalorder 2, %s11
    // Predicated region
    $region45: #{tpu_custom_call.1} parent=5 // pred_check
      %p4776 = pneg %p4775
    $region46: #{tpu_custom_call.1} parent=5 // pred_check_branch
      %4778 = sbr.rel (%p4776) target = $region48
    $region47: #{tpu_custom_call.1} parent=5 // pred_region
      %s4779 = ssub.s32 %s11, 2
      // Predicated region
      $region49: #{tpu_custom_call.1} parent=47 // pred_check
        %p4780 = pneg %p150
      $region50: #{tpu_custom_call.1} parent=47 // pred_check_branch
        %4782 = sbr.rel (%p4780) target = $region52
      $region51: #{tpu_custom_call.1} parent=47 // pred_region
        %p4783 = scmp.lt.s32.totalorder %s17, 1
        %s4784 = scalar_select %p4783, %s17, 1
        %s4785 = smul.addr %s4784, 36
        %s4786 = smul.addr %s4785, 8
        %s4787 = scalar_lea.vmem %s5, %s4786
      $region52: #{tpu_custom_call.1} parent=47 // pred_fallthru
        _
    $region48: #{tpu_custom_call.1} parent=5 // pred_fallthru
      _
  $region6: #{tpu_custom_call.1} parent=0 // loop_footer
    %s15 = sadd.s32 1, %s11
  $region7: #{tpu_custom_call.1} parent=0 // loop_footer_branch
    %10 = sbr.rel target = $region3
  $region8: #{tpu_custom_call.1} parent=0 // loop_exit
    _

</llo_original>
